<compile_context>
chip_gen: v6e
topology: v6e:2x2x1
jax: 0.10.0
libtpu: 0.0.40
codegen_flags: <defaults>
</compile_context>

<pallas_src>
import jax
import jax.numpy as jnp
from jax.experimental import pallas as pl
from jax.experimental.pallas import tpu as pltpu

HIDDEN = 128   # self.hidden_size
LAYERS = 2     # self.num_layers (two stacked cells, hard-coded below)
FC1 = 64
FC2 = 32


def _rnn_reg_kernel(x_ref, wih0_ref, b0_ref, whh0_ref,
                    w1cat_ref, b1_ref,
                    fc1w_hbm_ref, bfc1_ref, w2_ref, bfc2_ref, w3_ref, b3_ref,
                    out_ref,
                    xproj_scr, feats_scr, fc1w_vmem, dma_sem):
    TB, _ = x_ref.shape
    H = whh0_ref.shape[0]
    B = out_ref.shape[0]
    T = TB // B

    # Kick off the fc1 weight DMA (HBM -> VMEM) now; it is only consumed after
    # the serial recurrence, so its latency is fully hidden under the loop.
    fc1_cp = pltpu.make_async_copy(fc1w_hbm_ref, fc1w_vmem, dma_sem)
    fc1_cp.start()

    # Hoisted layer-0 input projection, biases folded in:
    # one well-filled (T*B, D) @ (D, H) matmul instead of T small ones.
    xproj_scr[...] = (
        jnp.dot(x_ref[...], wih0_ref[...], preferred_element_type=jnp.float32)
        + b0_ref[...])

    # Hoist the layer-1 bias broadcast out of the loop (broadcast_in_dim is not
    # CSE'd, so an in-loop (1,H)->(B,H) broadcast would be re-emitted T times).
    b1_b = jnp.broadcast_to(b1_ref[...], (B, H))

    # h_0 registered buffer in the module is all-zeros.
    h0 = jnp.zeros((B, H), jnp.float32)
    h1 = jnp.zeros((B, H), jnp.float32)

    # T is small and static -> fully unrolled loop, static slices everywhere.
    for t in range(T):
        # layer 0: h0_t = tanh(xproj_t + h0_{t-1} @ W_hh0^T)
        h0 = jnp.tanh(
            xproj_scr[t * B:(t + 1) * B, :]
            + jnp.dot(h0, whh0_ref[...], preferred_element_type=jnp.float32))
        # layer 1: single fused K=2H matmul on [h0_t | h1_{t-1}]
        cat = jnp.concatenate([h0, h1], axis=1)                  # (B, 2H)
        h1 = jnp.tanh(
            jnp.dot(cat, w1cat_ref[...], preferred_element_type=jnp.float32)
            + b1_b)
        # Materialize the (B, T*H) flatten of the RNN outputs column-block by
        # column-block (static, 128-aligned lane slices).
        feats_scr[:, t * H:(t + 1) * H] = h1

    # fc1 + tanh (single K = T*H matmul against the DMA'd weight).
    fc1_cp.wait()
    y = jnp.tanh(
        jnp.dot(feats_scr[...], fc1w_vmem[...],
                preferred_element_type=jnp.float32)
        + bfc1_ref[...])
    # TODO(synk): nn.Dropout(p=0.2) is the identity in eval mode; training-mode
    # random masking is not implemented here.
    # fc2 + tanh
    y = jnp.tanh(
        jnp.dot(y, w2_ref[...], preferred_element_type=jnp.float32)
        + bfc2_ref[...])
    # hidden_to_output
    out_ref[...] = (
        jnp.dot(y, w3_ref[...], preferred_element_type=jnp.float32)
        + b3_ref[...]).astype(out_ref.dtype)


def recurrent_regression_forward(x, params):
    """x: (B, T, D) float32, batch_first like the PyTorch module."""
    B, T, D = x.shape
    H = HIDDEN

    # Time-major flatten of x: row t*B + b == x[b, t].
    x_flat = jnp.transpose(x, (1, 0, 2)).reshape(T * B, D)

    # Pre-stack layer-1's input/recurrent weights for the fused K=2H matmul.
    w1cat = jnp.concatenate(
        [params["w_ih_l1"].T, params["w_hh_l1"].T], axis=0)       # (2H, H)

    args = (
        x_flat,                                                   # (T*B, D)
        params["w_ih_l0"].T,                                      # (D, H)
        (params["b_ih_l0"] + params["b_hh_l0"]).reshape(1, H),
        params["w_hh_l0"].T,                                      # (H, H)
        w1cat,                                                    # (2H, H)
        (params["b_ih_l1"] + params["b_hh_l1"]).reshape(1, H),
        params["fc1_w"].T,                                        # (T*H, 64) -> HBM
        params["fc1_b"].reshape(1, FC1),
        params["fc2_w"].T,                                        # (64, 32)
        params["fc2_b"].reshape(1, FC2),
        params["out_w"].T,                                        # (32, D)
        params["out_b"].reshape(1, D),
    )

    vmem_spec = pl.BlockSpec(memory_space=pltpu.MemorySpace.VMEM)
    in_specs = [vmem_spec] * len(args)
    in_specs[6] = pl.BlockSpec(memory_space=pl.ANY)   # fc1_w: manual DMA

    return pl.pallas_call(
        _rnn_reg_kernel,
        out_shape=jax.ShapeDtypeStruct((B, D), jnp.float32),
        in_specs=in_specs,
        out_specs=vmem_spec,
        scratch_shapes=[
            pltpu.VMEM((T * B, H), jnp.float32),     # hoisted x @ W_ih0 + b0
            pltpu.VMEM((B, T * H), jnp.float32),     # (B, T*H) RNN-output flatten
            pltpu.VMEM((T * H, FC1), jnp.float32),   # fc1 weight landing buffer
            pltpu.SemaphoreType.DMA(()),             # fc1 weight DMA semaphore
        ],
    )(*args)


def init_params(key, input_dim, seq_len):
    """Deterministic parameter init matching the PyTorch module's shapes."""
    H = HIDDEN
    ks = jax.random.split(key, 16)
    rnn_bound = 1.0 / jnp.sqrt(H)

    def uni(k, shape, bound):
        return jax.random.uniform(k, shape, jnp.float32, -bound, bound)

    def xavier(k, shape):  # nn.init.xavier_normal_ on Linear weights
        fan_out, fan_in = shape
        std = jnp.sqrt(2.0 / (fan_in + fan_out))
        return std * jax.random.normal(k, shape, jnp.float32)

    return {
        # nn.RNN(input_dim, hidden_size=128, num_layers=2, batch_first=True)
        "w_ih_l0": uni(ks[0], (H, input_dim), rnn_bound),
        "w_hh_l0": uni(ks[1], (H, H), rnn_bound),
        "b_ih_l0": uni(ks[2], (H,), rnn_bound),
        "b_hh_l0": uni(ks[3], (H,), rnn_bound),
        "w_ih_l1": uni(ks[4], (H, H), rnn_bound),
        "w_hh_l1": uni(ks[5], (H, H), rnn_bound),
        "b_ih_l1": uni(ks[6], (H,), rnn_bound),
        "b_hh_l1": uni(ks[7], (H,), rnn_bound),
        # fc1: Linear(128*seq_len, 64)
        "fc1_w": xavier(ks[8], (FC1, H * seq_len)),
        "fc1_b": uni(ks[9], (FC1,), 1.0 / jnp.sqrt(H * seq_len)),
        # fc2: Linear(64, 32)
        "fc2_w": xavier(ks[10], (FC2, FC1)),
        "fc2_b": uni(ks[11], (FC2,), 1.0 / jnp.sqrt(FC1)),
        # hidden_to_output: Linear(32, input_dim)
        "out_w": xavier(ks[12], (input_dim, FC2)),
        "out_b": uni(ks[13], (input_dim,), 1.0 / jnp.sqrt(FC2)),
    }


def reference_forward(x, params):
    """Pure-JAX reference mirroring the PyTorch forward (eval mode)."""
    B, T, D = x.shape
    H = HIDDEN
    h0 = jnp.zeros((B, H), jnp.float32)
    h1 = jnp.zeros((B, H), jnp.float32)
    outs = []
    for t in range(T):
        h0 = jnp.tanh(x[:, t] @ params["w_ih_l0"].T + params["b_ih_l0"]
                      + h0 @ params["w_hh_l0"].T + params["b_hh_l0"])
        h1 = jnp.tanh(h0 @ params["w_ih_l1"].T + params["b_ih_l1"]
                      + h1 @ params["w_hh_l1"].T + params["b_hh_l1"])
        outs.append(h1)
    feats = jnp.stack(outs, axis=1).reshape(B, T * H)
    y = jnp.tanh(feats @ params["fc1_w"].T + params["fc1_b"])
    y = jnp.tanh(y @ params["fc2_w"].T + params["fc2_b"])
    return y @ params["out_w"].T + params["out_b"]


if __name__ == "__main__":
    # Batch is 64 because the module's registered h_0 buffer is
    # zeros([num_layers, 64, hidden_size]) -> the RNN only accepts batch=64.
    B, T, D = 64, 8, 16
    key = jax.random.PRNGKey(0)
    k_x, k_p = jax.random.split(key)
    x = jax.random.normal(k_x, (B, T, D), jnp.float32)
    params = init_params(k_p, input_dim=D, seq_len=T)

    out = recurrent_regression_forward(x, params)
    out = jax.block_until_ready(out)

    ref = reference_forward(x, params)
    assert out.shape == (B, D)
    assert jnp.allclose(out, ref, rtol=1e-4, atol=1e-4), \
        f"max abs err {jnp.max(jnp.abs(out - ref))}"
    print("KERNEL_OK")
</pallas_src>

<mosaic_0001>
module attributes {stable_mosaic.version = 11 : i64} {
  func.func @_rnn_reg_kernel(%arg0: memref<512x16xf32, #tpu.memory_space<vmem>>, %arg1: memref<16x128xf32, #tpu.memory_space<vmem>>, %arg2: memref<1x128xf32, #tpu.memory_space<vmem>>, %arg3: memref<128x128xf32, #tpu.memory_space<vmem>>, %arg4: memref<256x128xf32, #tpu.memory_space<vmem>>, %arg5: memref<1x128xf32, #tpu.memory_space<vmem>>, %arg6: memref<1024x64xf32, #tpu.memory_space<any>>, %arg7: memref<1x64xf32, #tpu.memory_space<vmem>>, %arg8: memref<64x32xf32, #tpu.memory_space<vmem>>, %arg9: memref<1x32xf32, #tpu.memory_space<vmem>>, %arg10: memref<32x16xf32, #tpu.memory_space<vmem>>, %arg11: memref<1x16xf32, #tpu.memory_space<vmem>>, %arg12: memref<64x16xf32, #tpu.memory_space<vmem>>, %arg13: memref<512x128xf32, #tpu.memory_space<vmem>>, %arg14: memref<64x1024xf32, #tpu.memory_space<vmem>>, %arg15: memref<1024x64xf32, #tpu.memory_space<vmem>>, %arg16: memref<!tpu.dma_semaphore, #tpu.memory_space<semaphore_mem>>) attributes {dimension_semantics = [], scalar_prefetch = 0 : i64, scratch_operands = 4 : i64, tpu.core_type = #tpu.core_type<tc>} {
    tpu.enqueue_dma source(%arg6 : memref<1024x64xf32, #tpu.memory_space<any>>) target(%arg15 : memref<1024x64xf32, #tpu.memory_space<vmem>>) target_semaphore(%arg16 : memref<!tpu.dma_semaphore, #tpu.memory_space<semaphore_mem>>)
    %c0 = arith.constant 0 : index
    %c0_0 = arith.constant 0 : index
    %0 = vector.load %arg0[%c0, %c0_0] : memref<512x16xf32, #tpu.memory_space<vmem>>, vector<512x16xf32>
    %c0_1 = arith.constant 0 : index
    %c0_2 = arith.constant 0 : index
    %1 = vector.load %arg1[%c0_1, %c0_2] : memref<16x128xf32, #tpu.memory_space<vmem>>, vector<16x128xf32>
    %cst = arith.constant dense<0.000000e+00> : vector<512x128xf32>
    %2 = tpu.matmul %0, %1, %cst {dimension_numbers = #tpu.dot_dimension_numbers<[1], [0], [0], [1], [0, 0, 1, 1], [], []>} : vector<512x16xf32>, vector<16x128xf32>, vector<512x128xf32> -> vector<512x128xf32>
    %c0_3 = arith.constant 0 : index
    %c0_4 = arith.constant 0 : index
    %3 = vector.load %arg2[%c0_3, %c0_4] : memref<1x128xf32, #tpu.memory_space<vmem>>, vector<1x128xf32>
    %4 = vector.broadcast %3 : vector<1x128xf32> to vector<512x128xf32>
    %5 = arith.addf %2, %4 : vector<512x128xf32>
    %c0_5 = arith.constant 0 : index
    %c0_6 = arith.constant 0 : index
    %6 = vector.load %arg13[%c0_5, %c0_6] : memref<512x128xf32, #tpu.memory_space<vmem>>, vector<512x128xf32>
    tpu.vector_store %arg13[%c0_5, %c0_6], %5 {strides = array<i32>} : memref<512x128xf32, #tpu.memory_space<vmem>>, vector<512x128xf32>,
    %c0_7 = arith.constant 0 : index
    %c0_8 = arith.constant 0 : index
    %7 = vector.load %arg5[%c0_7, %c0_8] : memref<1x128xf32, #tpu.memory_space<vmem>>, vector<1x128xf32>
    %8 = vector.shape_cast %7 : vector<1x128xf32> to vector<1x128xf32>
    %9 = vector.broadcast %8 : vector<1x128xf32> to vector<64x128xf32>
    %cst_9 = arith.constant 0.000000e+00 : f32
    %10 = vector.broadcast %cst_9 : f32 to vector<64x128xf32>
    %cst_10 = arith.constant 0.000000e+00 : f32
    %11 = vector.broadcast %cst_10 : f32 to vector<64x128xf32>
    %c0_11 = arith.constant 0 : index
    %c0_12 = arith.constant 0 : index
    %12 = vector.load %arg13[%c0_11, %c0_12] : memref<512x128xf32, #tpu.memory_space<vmem>>, vector<64x128xf32>
    %c0_13 = arith.constant 0 : index
    %c0_14 = arith.constant 0 : index
    %13 = vector.load %arg3[%c0_13, %c0_14] : memref<128x128xf32, #tpu.memory_space<vmem>>, vector<128x128xf32>
    %cst_15 = arith.constant dense<0.000000e+00> : vector<64x128xf32>
    %14 = tpu.matmul %10, %13, %cst_15 {dimension_numbers = #tpu.dot_dimension_numbers<[1], [0], [0], [1], [0, 0, 1, 1], [], []>} : vector<64x128xf32>, vector<128x128xf32>, vector<64x128xf32> -> vector<64x128xf32>
    %15 = arith.addf %12, %14 : vector<64x128xf32>
    %16 = math.tanh %15 : vector<64x128xf32>
    %17 = tpu.concatenate %16, %11 in 1 : vector<64x128xf32>, vector<64x128xf32> -> vector<64x256xf32>
    %c0_16 = arith.constant 0 : index
    %c0_17 = arith.constant 0 : index
    %18 = vector.load %arg4[%c0_16, %c0_17] : memref<256x128xf32, #tpu.memory_space<vmem>>, vector<256x128xf32>
    %cst_18 = arith.constant dense<0.000000e+00> : vector<64x128xf32>
    %19 = tpu.matmul %17, %18, %cst_18 {dimension_numbers = #tpu.dot_dimension_numbers<[1], [0], [0], [1], [0, 0, 1, 1], [], []>} : vector<64x256xf32>, vector<256x128xf32>, vector<64x128xf32> -> vector<64x128xf32>
    %20 = arith.addf %19, %9 : vector<64x128xf32>
    %21 = math.tanh %20 : vector<64x128xf32>
    %c0_19 = arith.constant 0 : index
    %c0_20 = arith.constant 0 : index
    %22 = vector.load %arg14[%c0_19, %c0_20] : memref<64x1024xf32, #tpu.memory_space<vmem>>, vector<64x128xf32>
    tpu.vector_store %arg14[%c0_19, %c0_20], %21 {strides = array<i32>} : memref<64x1024xf32, #tpu.memory_space<vmem>>, vector<64x128xf32>,
    %c64 = arith.constant 64 : index
    %c0_21 = arith.constant 0 : index
    %23 = vector.load %arg13[%c64, %c0_21] : memref<512x128xf32, #tpu.memory_space<vmem>>, vector<64x128xf32>
    %c0_22 = arith.constant 0 : index
    %c0_23 = arith.constant 0 : index
    %24 = vector.load %arg3[%c0_22, %c0_23] : memref<128x128xf32, #tpu.memory_space<vmem>>, vector<128x128xf32>
    %cst_24 = arith.constant dense<0.000000e+00> : vector<64x128xf32>
    %25 = tpu.matmul %16, %24, %cst_24 {dimension_numbers = #tpu.dot_dimension_numbers<[1], [0], [0], [1], [0, 0, 1, 1], [], []>} : vector<64x128xf32>, vector<128x128xf32>, vector<64x128xf32> -> vector<64x128xf32>
    %26 = arith.addf %23, %25 : vector<64x128xf32>
    %27 = math.tanh %26 : vector<64x128xf32>
    %28 = tpu.concatenate %27, %21 in 1 : vector<64x128xf32>, vector<64x128xf32> -> vector<64x256xf32>
    %c0_25 = arith.constant 0 : index
    %c0_26 = arith.constant 0 : index
    %29 = vector.load %arg4[%c0_25, %c0_26] : memref<256x128xf32, #tpu.memory_space<vmem>>, vector<256x128xf32>
    %cst_27 = arith.constant dense<0.000000e+00> : vector<64x128xf32>
    %30 = tpu.matmul %28, %29, %cst_27 {dimension_numbers = #tpu.dot_dimension_numbers<[1], [0], [0], [1], [0, 0, 1, 1], [], []>} : vector<64x256xf32>, vector<256x128xf32>, vector<64x128xf32> -> vector<64x128xf32>
    %31 = arith.addf %30, %9 : vector<64x128xf32>
    %32 = math.tanh %31 : vector<64x128xf32>
    %c0_28 = arith.constant 0 : index
    %c128 = arith.constant 128 : index
    %33 = vector.load %arg14[%c0_28, %c128] : memref<64x1024xf32, #tpu.memory_space<vmem>>, vector<64x128xf32>
    tpu.vector_store %arg14[%c0_28, %c128], %32 {strides = array<i32>} : memref<64x1024xf32, #tpu.memory_space<vmem>>, vector<64x128xf32>,
    %c128_29 = arith.constant 128 : index
    %c0_30 = arith.constant 0 : index
    %34 = vector.load %arg13[%c128_29, %c0_30] : memref<512x128xf32, #tpu.memory_space<vmem>>, vector<64x128xf32>
    %c0_31 = arith.constant 0 : index
    %c0_32 = arith.constant 0 : index
    %35 = vector.load %arg3[%c0_31, %c0_32] : memref<128x128xf32, #tpu.memory_space<vmem>>, vector<128x128xf32>
    %cst_33 = arith.constant dense<0.000000e+00> : vector<64x128xf32>
    %36 = tpu.matmul %27, %35, %cst_33 {dimension_numbers = #tpu.dot_dimension_numbers<[1], [0], [0], [1], [0, 0, 1, 1], [], []>} : vector<64x128xf32>, vector<128x128xf32>, vector<64x128xf32> -> vector<64x128xf32>
    %37 = arith.addf %34, %36 : vector<64x128xf32>
    %38 = math.tanh %37 : vector<64x128xf32>
    %39 = tpu.concatenate %38, %32 in 1 : vector<64x128xf32>, vector<64x128xf32> -> vector<64x256xf32>
    %c0_34 = arith.constant 0 : index
    %c0_35 = arith.constant 0 : index
    %40 = vector.load %arg4[%c0_34, %c0_35] : memref<256x128xf32, #tpu.memory_space<vmem>>, vector<256x128xf32>
    %cst_36 = arith.constant dense<0.000000e+00> : vector<64x128xf32>
    %41 = tpu.matmul %39, %40, %cst_36 {dimension_numbers = #tpu.dot_dimension_numbers<[1], [0], [0], [1], [0, 0, 1, 1], [], []>} : vector<64x256xf32>, vector<256x128xf32>, vector<64x128xf32> -> vector<64x128xf32>
    %42 = arith.addf %41, %9 : vector<64x128xf32>
    %43 = math.tanh %42 : vector<64x128xf32>
    %c0_37 = arith.constant 0 : index
    %c256 = arith.constant 256 : index
    %44 = vector.load %arg14[%c0_37, %c256] : memref<64x1024xf32, #tpu.memory_space<vmem>>, vector<64x128xf32>
    tpu.vector_store %arg14[%c0_37, %c256], %43 {strides = array<i32>} : memref<64x1024xf32, #tpu.memory_space<vmem>>, vector<64x128xf32>,
    %c192 = arith.constant 192 : index
    %c0_38 = arith.constant 0 : index
    %45 = vector.load %arg13[%c192, %c0_38] : memref<512x128xf32, #tpu.memory_space<vmem>>, vector<64x128xf32>
    %c0_39 = arith.constant 0 : index
    %c0_40 = arith.constant 0 : index
    %46 = vector.load %arg3[%c0_39, %c0_40] : memref<128x128xf32, #tpu.memory_space<vmem>>, vector<128x128xf32>
    %cst_41 = arith.constant dense<0.000000e+00> : vector<64x128xf32>
    %47 = tpu.matmul %38, %46, %cst_41 {dimension_numbers = #tpu.dot_dimension_numbers<[1], [0], [0], [1], [0, 0, 1, 1], [], []>} : vector<64x128xf32>, vector<128x128xf32>, vector<64x128xf32> -> vector<64x128xf32>
    %48 = arith.addf %45, %47 : vector<64x128xf32>
    %49 = math.tanh %48 : vector<64x128xf32>
    %50 = tpu.concatenate %49, %43 in 1 : vector<64x128xf32>, vector<64x128xf32> -> vector<64x256xf32>
    %c0_42 = arith.constant 0 : index
    %c0_43 = arith.constant 0 : index
    %51 = vector.load %arg4[%c0_42, %c0_43] : memref<256x128xf32, #tpu.memory_space<vmem>>, vector<256x128xf32>
    %cst_44 = arith.constant dense<0.000000e+00> : vector<64x128xf32>
    %52 = tpu.matmul %50, %51, %cst_44 {dimension_numbers = #tpu.dot_dimension_numbers<[1], [0], [0], [1], [0, 0, 1, 1], [], []>} : vector<64x256xf32>, vector<256x128xf32>, vector<64x128xf32> -> vector<64x128xf32>
    %53 = arith.addf %52, %9 : vector<64x128xf32>
    %54 = math.tanh %53 : vector<64x128xf32>
    %c0_45 = arith.constant 0 : index
    %c384 = arith.constant 384 : index
    %55 = vector.load %arg14[%c0_45, %c384] : memref<64x1024xf32, #tpu.memory_space<vmem>>, vector<64x128xf32>
    tpu.vector_store %arg14[%c0_45, %c384], %54 {strides = array<i32>} : memref<64x1024xf32, #tpu.memory_space<vmem>>, vector<64x128xf32>,
    %c256_46 = arith.constant 256 : index
    %c0_47 = arith.constant 0 : index
    %56 = vector.load %arg13[%c256_46, %c0_47] : memref<512x128xf32, #tpu.memory_space<vmem>>, vector<64x128xf32>
    %c0_48 = arith.constant 0 : index
    %c0_49 = arith.constant 0 : index
    %57 = vector.load %arg3[%c0_48, %c0_49] : memref<128x128xf32, #tpu.memory_space<vmem>>, vector<128x128xf32>
    %cst_50 = arith.constant dense<0.000000e+00> : vector<64x128xf32>
    %58 = tpu.matmul %49, %57, %cst_50 {dimension_numbers = #tpu.dot_dimension_numbers<[1], [0], [0], [1], [0, 0, 1, 1], [], []>} : vector<64x128xf32>, vector<128x128xf32>, vector<64x128xf32> -> vector<64x128xf32>
    %59 = arith.addf %56, %58 : vector<64x128xf32>
    %60 = math.tanh %59 : vector<64x128xf32>
    %61 = tpu.concatenate %60, %54 in 1 : vector<64x128xf32>, vector<64x128xf32> -> vector<64x256xf32>
    %c0_51 = arith.constant 0 : index
    %c0_52 = arith.constant 0 : index
    %62 = vector.load %arg4[%c0_51, %c0_52] : memref<256x128xf32, #tpu.memory_space<vmem>>, vector<256x128xf32>
    %cst_53 = arith.constant dense<0.000000e+00> : vector<64x128xf32>
    %63 = tpu.matmul %61, %62, %cst_53 {dimension_numbers = #tpu.dot_dimension_numbers<[1], [0], [0], [1], [0, 0, 1, 1], [], []>} : vector<64x256xf32>, vector<256x128xf32>, vector<64x128xf32> -> vector<64x128xf32>
    %64 = arith.addf %63, %9 : vector<64x128xf32>
    %65 = math.tanh %64 : vector<64x128xf32>
    %c0_54 = arith.constant 0 : index
    %c512 = arith.constant 512 : index
    %66 = vector.load %arg14[%c0_54, %c512] : memref<64x1024xf32, #tpu.memory_space<vmem>>, vector<64x128xf32>
    tpu.vector_store %arg14[%c0_54, %c512], %65 {strides = array<i32>} : memref<64x1024xf32, #tpu.memory_space<vmem>>, vector<64x128xf32>,
    %c320 = arith.constant 320 : index
    %c0_55 = arith.constant 0 : index
    %67 = vector.load %arg13[%c320, %c0_55] : memref<512x128xf32, #tpu.memory_space<vmem>>, vector<64x128xf32>
    %c0_56 = arith.constant 0 : index
    %c0_57 = arith.constant 0 : index
    %68 = vector.load %arg3[%c0_56, %c0_57] : memref<128x128xf32, #tpu.memory_space<vmem>>, vector<128x128xf32>
    %cst_58 = arith.constant dense<0.000000e+00> : vector<64x128xf32>
    %69 = tpu.matmul %60, %68, %cst_58 {dimension_numbers = #tpu.dot_dimension_numbers<[1], [0], [0], [1], [0, 0, 1, 1], [], []>} : vector<64x128xf32>, vector<128x128xf32>, vector<64x128xf32> -> vector<64x128xf32>
    %70 = arith.addf %67, %69 : vector<64x128xf32>
    %71 = math.tanh %70 : vector<64x128xf32>
    %72 = tpu.concatenate %71, %65 in 1 : vector<64x128xf32>, vector<64x128xf32> -> vector<64x256xf32>
    %c0_59 = arith.constant 0 : index
    %c0_60 = arith.constant 0 : index
    %73 = vector.load %arg4[%c0_59, %c0_60] : memref<256x128xf32, #tpu.memory_space<vmem>>, vector<256x128xf32>
    %cst_61 = arith.constant dense<0.000000e+00> : vector<64x128xf32>
    %74 = tpu.matmul %72, %73, %cst_61 {dimension_numbers = #tpu.dot_dimension_numbers<[1], [0], [0], [1], [0, 0, 1, 1], [], []>} : vector<64x256xf32>, vector<256x128xf32>, vector<64x128xf32> -> vector<64x128xf32>
    %75 = arith.addf %74, %9 : vector<64x128xf32>
    %76 = math.tanh %75 : vector<64x128xf32>
    %c0_62 = arith.constant 0 : index
    %c640 = arith.constant 640 : index
    %77 = vector.load %arg14[%c0_62, %c640] : memref<64x1024xf32, #tpu.memory_space<vmem>>, vector<64x128xf32>
    tpu.vector_store %arg14[%c0_62, %c640], %76 {strides = array<i32>} : memref<64x1024xf32, #tpu.memory_space<vmem>>, vector<64x128xf32>,
    %c384_63 = arith.constant 384 : index
    %c0_64 = arith.constant 0 : index
    %78 = vector.load %arg13[%c384_63, %c0_64] : memref<512x128xf32, #tpu.memory_space<vmem>>, vector<64x128xf32>
    %c0_65 = arith.constant 0 : index
    %c0_66 = arith.constant 0 : index
    %79 = vector.load %arg3[%c0_65, %c0_66] : memref<128x128xf32, #tpu.memory_space<vmem>>, vector<128x128xf32>
    %cst_67 = arith.constant dense<0.000000e+00> : vector<64x128xf32>
    %80 = tpu.matmul %71, %79, %cst_67 {dimension_numbers = #tpu.dot_dimension_numbers<[1], [0], [0], [1], [0, 0, 1, 1], [], []>} : vector<64x128xf32>, vector<128x128xf32>, vector<64x128xf32> -> vector<64x128xf32>
    %81 = arith.addf %78, %80 : vector<64x128xf32>
    %82 = math.tanh %81 : vector<64x128xf32>
    %83 = tpu.concatenate %82, %76 in 1 : vector<64x128xf32>, vector<64x128xf32> -> vector<64x256xf32>
    %c0_68 = arith.constant 0 : index
    %c0_69 = arith.constant 0 : index
    %84 = vector.load %arg4[%c0_68, %c0_69] : memref<256x128xf32, #tpu.memory_space<vmem>>, vector<256x128xf32>
    %cst_70 = arith.constant dense<0.000000e+00> : vector<64x128xf32>
    %85 = tpu.matmul %83, %84, %cst_70 {dimension_numbers = #tpu.dot_dimension_numbers<[1], [0], [0], [1], [0, 0, 1, 1], [], []>} : vector<64x256xf32>, vector<256x128xf32>, vector<64x128xf32> -> vector<64x128xf32>
    %86 = arith.addf %85, %9 : vector<64x128xf32>
    %87 = math.tanh %86 : vector<64x128xf32>
    %c0_71 = arith.constant 0 : index
    %c768 = arith.constant 768 : index
    %88 = vector.load %arg14[%c0_71, %c768] : memref<64x1024xf32, #tpu.memory_space<vmem>>, vector<64x128xf32>
    tpu.vector_store %arg14[%c0_71, %c768], %87 {strides = array<i32>} : memref<64x1024xf32, #tpu.memory_space<vmem>>, vector<64x128xf32>,
    %c448 = arith.constant 448 : index
    %c0_72 = arith.constant 0 : index
    %89 = vector.load %arg13[%c448, %c0_72] : memref<512x128xf32, #tpu.memory_space<vmem>>, vector<64x128xf32>
    %c0_73 = arith.constant 0 : index
    %c0_74 = arith.constant 0 : index
    %90 = vector.load %arg3[%c0_73, %c0_74] : memref<128x128xf32, #tpu.memory_space<vmem>>, vector<128x128xf32>
    %cst_75 = arith.constant dense<0.000000e+00> : vector<64x128xf32>
    %91 = tpu.matmul %82, %90, %cst_75 {dimension_numbers = #tpu.dot_dimension_numbers<[1], [0], [0], [1], [0, 0, 1, 1], [], []>} : vector<64x128xf32>, vector<128x128xf32>, vector<64x128xf32> -> vector<64x128xf32>
    %92 = arith.addf %89, %91 : vector<64x128xf32>
    %93 = math.tanh %92 : vector<64x128xf32>
    %94 = tpu.concatenate %93, %87 in 1 : vector<64x128xf32>, vector<64x128xf32> -> vector<64x256xf32>
    %c0_76 = arith.constant 0 : index
    %c0_77 = arith.constant 0 : index
    %95 = vector.load %arg4[%c0_76, %c0_77] : memref<256x128xf32, #tpu.memory_space<vmem>>, vector<256x128xf32>
    %cst_78 = arith.constant dense<0.000000e+00> : vector<64x128xf32>
    %96 = tpu.matmul %94, %95, %cst_78 {dimension_numbers = #tpu.dot_dimension_numbers<[1], [0], [0], [1], [0, 0, 1, 1], [], []>} : vector<64x256xf32>, vector<256x128xf32>, vector<64x128xf32> -> vector<64x128xf32>
    %97 = arith.addf %96, %9 : vector<64x128xf32>
    %98 = math.tanh %97 : vector<64x128xf32>
    %c0_79 = arith.constant 0 : index
    %c896 = arith.constant 896 : index
    %99 = vector.load %arg14[%c0_79, %c896] : memref<64x1024xf32, #tpu.memory_space<vmem>>, vector<64x128xf32>
    tpu.vector_store %arg14[%c0_79, %c896], %98 {strides = array<i32>} : memref<64x1024xf32, #tpu.memory_space<vmem>>, vector<64x128xf32>,
    tpu.wait_dma2 semaphore(%arg16 : memref<!tpu.dma_semaphore, #tpu.memory_space<semaphore_mem>>) src(%arg6 : memref<1024x64xf32, #tpu.memory_space<any>>) dst(%arg15 : memref<1024x64xf32, #tpu.memory_space<vmem>>)
    %c0_80 = arith.constant 0 : index
    %c0_81 = arith.constant 0 : index
    %100 = vector.load %arg14[%c0_80, %c0_81] : memref<64x1024xf32, #tpu.memory_space<vmem>>, vector<64x1024xf32>
    %c0_82 = arith.constant 0 : index
    %c0_83 = arith.constant 0 : index
    %101 = vector.load %arg15[%c0_82, %c0_83] : memref<1024x64xf32, #tpu.memory_space<vmem>>, vector<1024x64xf32>
    %cst_84 = arith.constant dense<0.000000e+00> : vector<64x64xf32>
    %102 = tpu.matmul %100, %101, %cst_84 {dimension_numbers = #tpu.dot_dimension_numbers<[1], [0], [0], [1], [0, 0, 1, 1], [], []>} : vector<64x1024xf32>, vector<1024x64xf32>, vector<64x64xf32> -> vector<64x64xf32>
    %c0_85 = arith.constant 0 : index
    %c0_86 = arith.constant 0 : index
    %103 = vector.load %arg7[%c0_85, %c0_86] : memref<1x64xf32, #tpu.memory_space<vmem>>, vector<1x64xf32>
    %104 = vector.broadcast %103 : vector<1x64xf32> to vector<64x64xf32>
    %105 = arith.addf %102, %104 : vector<64x64xf32>
    %106 = math.tanh %105 : vector<64x64xf32>
    %c0_87 = arith.constant 0 : index
    %c0_88 = arith.constant 0 : index
    %107 = vector.load %arg8[%c0_87, %c0_88] : memref<64x32xf32, #tpu.memory_space<vmem>>, vector<64x32xf32>
    %cst_89 = arith.constant dense<0.000000e+00> : vector<64x32xf32>
    %108 = tpu.matmul %106, %107, %cst_89 {dimension_numbers = #tpu.dot_dimension_numbers<[1], [0], [0], [1], [0, 0, 1, 1], [], []>} : vector<64x64xf32>, vector<64x32xf32>, vector<64x32xf32> -> vector<64x32xf32>
    %c0_90 = arith.constant 0 : index
    %c0_91 = arith.constant 0 : index
    %109 = vector.load %arg9[%c0_90, %c0_91] : memref<1x32xf32, #tpu.memory_space<vmem>>, vector<1x32xf32>
    %110 = vector.broadcast %109 : vector<1x32xf32> to vector<64x32xf32>
    %111 = arith.addf %108, %110 : vector<64x32xf32>
    %112 = math.tanh %111 : vector<64x32xf32>
    %c0_92 = arith.constant 0 : index
    %c0_93 = arith.constant 0 : index
    %113 = vector.load %arg10[%c0_92, %c0_93] : memref<32x16xf32, #tpu.memory_space<vmem>>, vector<32x16xf32>
    %cst_94 = arith.constant dense<0.000000e+00> : vector<64x16xf32>
    %114 = tpu.matmul %112, %113, %cst_94 {dimension_numbers = #tpu.dot_dimension_numbers<[1], [0], [0], [1], [0, 0, 1, 1], [], []>} : vector<64x32xf32>, vector<32x16xf32>, vector<64x16xf32> -> vector<64x16xf32>
    %c0_95 = arith.constant 0 : index
    %c0_96 = arith.constant 0 : index
    %115 = vector.load %arg11[%c0_95, %c0_96] : memref<1x16xf32, #tpu.memory_space<vmem>>, vector<1x16xf32>
    %116 = vector.broadcast %115 : vector<1x16xf32> to vector<64x16xf32>
    %117 = arith.addf %114, %116 : vector<64x16xf32>
    %c0_97 = arith.constant 0 : index
    %c0_98 = arith.constant 0 : index
    %118 = vector.load %arg12[%c0_97, %c0_98] : memref<64x16xf32, #tpu.memory_space<vmem>>, vector<64x16xf32>
    tpu.vector_store %arg12[%c0_97, %c0_98], %117 {strides = array<i32>} : memref<64x16xf32, #tpu.memory_space<vmem>>, vector<64x16xf32>,
    return
  }
}

</mosaic_0001>

<llo_original>
// kernel: tpu_custom_call.1
$region0: #{tpu_custom_call.1}
  #allocation0 [shape = 'u32[]', space=smem, size = 0x4, offset = 0x4, fixed_abs, tag = 'smem constant byte address 0x4 - core index']
  #allocation1 [shape = 'u32[144,128]{1,0:T(1,128)}', space=vmem, size = 0x12000, scoped, tag = 'internal scratch']
  #allocation2 [shape = 'f32[512,128]{1,0:T(8,128)}', space=vmem, size = 0x40000, scoped, tag = 'scratch operand']
  #allocation3 [shape = 'f32[64,1024]{1,0:T(8,128)}', space=vmem, size = 0x40000, scoped, tag = 'scratch operand']
  #allocation4 [shape = 'f32[1024,64]{1,0:T(8,128)}', space=vmem, size = 0x80000, scoped, tag = 'scratch operand']
  #allocation5 [shape = 's32[1]{0}', space=sflag, size = 0x4, scoped, tag = 'scratch operand']
  #allocation6 [shape = 's32[]', space=sflag, size = 0x4, offset = 0, fixed_abs, tag = 'sflag constant byte address 0x0 - dummy sync flag']
  %s0 = inlined_call_operand.vmem [shape: f32[512,16], index: 0, kind: input, shape index: {}]
  %s1 = inlined_call_operand.vmem [shape: f32[16,128], index: 1, kind: input, shape index: {}]
  %s2 = inlined_call_operand.vmem [shape: f32[1,128], index: 2, kind: input, shape index: {}]
  %s3 = inlined_call_operand.vmem [shape: f32[128,128], index: 3, kind: input, shape index: {}]
  %s4 = inlined_call_operand.vmem [shape: f32[256,128], index: 4, kind: input, shape index: {}]
  %s5 = inlined_call_operand.vmem [shape: f32[1,128], index: 5, kind: input, shape index: {}]
  %s6 = inlined_call_operand.vmem [shape: f32[1024,64], index: 6, kind: input, shape index: {}]
  %s7 = inlined_call_operand.vmem [shape: f32[1,64], index: 7, kind: input, shape index: {}]
  %s8 = inlined_call_operand.vmem [shape: f32[64,32], index: 8, kind: input, shape index: {}]
  %s9 = inlined_call_operand.vmem [shape: f32[1,32], index: 9, kind: input, shape index: {}]
  %s10 = inlined_call_operand.vmem [shape: f32[32,16], index: 10, kind: input, shape index: {}]
  %s11 = inlined_call_operand.vmem [shape: f32[1,16], index: 11, kind: input, shape index: {}]
  %s12 = inlined_call_operand.vmem [shape: f32[64,16], index: 12, kind: output, shape index: {}]
  %s13 = sld [smem:[#allocation0]]
  $region88: #{tpu_custom_call.1} parent=0
    _
  %s15 = ssub.s32 1, %s13
  %s16 = scalar_select 0, %s15, %s13
  // Predicated region
  $region2: #{tpu_custom_call.1} parent=0 // pred_check
    _
  $region3: #{tpu_custom_call.1} parent=0 // pred_check_branch
    %18 = sbr.rel (0) target = $region5
  $region4: #{tpu_custom_call.1} parent=0 // pred_region
    _
  $region5: #{tpu_custom_call.1} parent=0 // pred_fallthru
    _
  // Predicated region
  $region6: #{tpu_custom_call.1} parent=0 // pred_check
    _
  $region7: #{tpu_custom_call.1} parent=0 // pred_check_branch
    %20 = sbr.rel (0) target = $region9
  $region8: #{tpu_custom_call.1} parent=0 // pred_region
    _
  $region9: #{tpu_custom_call.1} parent=0 // pred_fallthru
    _
  // Predicated region
  $region10: #{tpu_custom_call.1} parent=0 // pred_check
    _
  $region11: #{tpu_custom_call.1} parent=0 // pred_check_branch
    %22 = sbr.rel (0) target = $region13
  $region12: #{tpu_custom_call.1} parent=0 // pred_region
    _
  $region13: #{tpu_custom_call.1} parent=0 // pred_fallthru
    _
  // Predicated region
  $region14: #{tpu_custom_call.1} parent=0 // pred_check
    _
  $region15: #{tpu_custom_call.1} parent=0 // pred_check_branch
    %24 = sbr.rel (0) target = $region17
  $region16: #{tpu_custom_call.1} parent=0 // pred_region
    _
  $region17: #{tpu_custom_call.1} parent=0 // pred_fallthru
    _
  // Predicated region
  $region18: #{tpu_custom_call.1} parent=0 // pred_check
    _
  $region19: #{tpu_custom_call.1} parent=0 // pred_check_branch
    %26 = sbr.rel (0) target = $region21
  $region20: #{tpu_custom_call.1} parent=0 // pred_region
    _
  $region21: #{tpu_custom_call.1} parent=0 // pred_fallthru
    _
  // Predicated region
  $region22: #{tpu_custom_call.1} parent=0 // pred_check
    _
  $region23: #{tpu_custom_call.1} parent=0 // pred_check_branch
    %28 = sbr.rel (0) target = $region25
  $region24: #{tpu_custom_call.1} parent=0 // pred_region
    _
  $region25: #{tpu_custom_call.1} parent=0 // pred_fallthru
    _
  // Predicated region
  $region26: #{tpu_custom_call.1} parent=0 // pred_check
    _
  $region27: #{tpu_custom_call.1} parent=0 // pred_check_branch
    %30 = sbr.rel (0) target = $region29
  $region28: #{tpu_custom_call.1} parent=0 // pred_region
    _
  $region29: #{tpu_custom_call.1} parent=0 // pred_fallthru
    _
  // Predicated region
  $region30: #{tpu_custom_call.1} parent=0 // pred_check
    _
  $region31: #{tpu_custom_call.1} parent=0 // pred_check_branch
    %32 = sbr.rel (0) target = $region33
  $region32: #{tpu_custom_call.1} parent=0 // pred_region
    _
  $region33: #{tpu_custom_call.1} parent=0 // pred_fallthru
    _
  // Predicated region
  $region34: #{tpu_custom_call.1} parent=0 // pred_check
    _
  $region35: #{tpu_custom_call.1} parent=0 // pred_check_branch
    %34 = sbr.rel (0) target = $region37
  $region36: #{tpu_custom_call.1} parent=0 // pred_region
    _
  $region37: #{tpu_custom_call.1} parent=0 // pred_fallthru
    _
  // Predicated region
  $region38: #{tpu_custom_call.1} parent=0 // pred_check
    _
  $region39: #{tpu_custom_call.1} parent=0 // pred_check_branch
    %36 = sbr.rel (0) target = $region41
  $region40: #{tpu_custom_call.1} parent=0 // pred_region
    _
  $region41: #{tpu_custom_call.1} parent=0 // pred_fallthru
    _
  // Predicated region
  $region42: #{tpu_custom_call.1} parent=0 // pred_check
    _
  $region43: #{tpu_custom_call.1} parent=0 // pred_check_branch
    %38 = sbr.rel (0) target = $region45
  $region44: #{tpu_custom_call.1} parent=0 // pred_region
    _
  $region45: #{tpu_custom_call.1} parent=0 // pred_fallthru
    _
  %p40 = scmp.lt.u32.totalorder 1024, 8
  %p41 = pneg %p40
  // Predicated region
  $region46: #{tpu_custom_call.1} parent=0 // pred_check
    _
  $region47: #{tpu_custom_call.1} parent=0 // pred_check_branch
    %43 = sbr.rel (%p40) target = $region49
  $region48: #{tpu_custom_call.1} parent=0 // pred_region
    %s59 = sand.u32 1024, 7
    %p60 = scmp.eq.s32.totalorder %s59, 0
    // Predicated region
    $region61: #{tpu_custom_call.1} parent=48 // pred_check
      %p61 = pneg %p60
    $region62: #{tpu_custom_call.1} parent=48 // pred_check_branch
      %63 = sbr.rel (%p61) target = $region64
    $region63: #{tpu_custom_call.1} parent=48 // pred_region
      loop: start=0, step=1, limit=1
      $region65: #{tpu_custom_call.1} parent=63 // loop_pre_header
        _
      $region66: #{tpu_custom_call.1} parent=63 // loop_header
        %s65 = sphi 0, %s69
        %p66 = scmp.ge.s32.totalorder %s65, 1
        %s70 = sphi %s6, %s6
        %s71 = sphi [#allocation4], [#allocation4]
      $region67: #{tpu_custom_call.1} parent=63 // loop_header_branch
        %68 = sbr.rel (%p66) target = $region71
      $region68: #{tpu_custom_call.1} parent=63 // loop_body
        %v72 = vld [vmem:[%s70] sm:$0xff]
        %73 = vst [vmem:[%s71] sm:$0xff] %v72
        %v74 = vld [vmem:[%s70 + $0x8] sm:$0xff]
        %75 = vst [vmem:[%s71 + $0x8] sm:$0xff] %v74
        %v76 = vld [vmem:[%s70 + $0x10] sm:$0xff]
        %77 = vst [vmem:[%s71 + $0x10] sm:$0xff] %v76
        %v78 = vld [vmem:[%s70 + $0x18] sm:$0xff]
        %79 = vst [vmem:[%s71 + $0x18] sm:$0xff] %v78
        %v80 = vld [vmem:[%s70 + $0x20] sm:$0xff]
        %81 = vst [vmem:[%s71 + $0x20] sm:$0xff] %v80
        %v82 = vld [vmem:[%s70 + $0x28] sm:$0xff]
        %83 = vst [vmem:[%s71 + $0x28] sm:$0xff] %v82
        %v84 = vld [vmem:[%s70 + $0x30] sm:$0xff]
        %85 = vst [vmem:[%s71 + $0x30] sm:$0xff] %v84
        %v86 = vld [vmem:[%s70 + $0x38] sm:$0xff]
        %87 = vst [vmem:[%s71 + $0x38] sm:$0xff] %v86
        %v88 = vld [vmem:[%s70 + $0x40] sm:$0xff]
        %89 = vst [vmem:[%s71 + $0x40] sm:$0xff] %v88
        %v90 = vld [vmem:[%s70 + $0x48] sm:$0xff]
        %91 = vst [vmem:[%s71 + $0x48] sm:$0xff] %v90
        %v92 = vld [vmem:[%s70 + $0x50] sm:$0xff]
        %93 = vst [vmem:[%s71 + $0x50] sm:$0xff] %v92
        %v94 = vld [vmem:[%s70 + $0x58] sm:$0xff]
        %95 = vst [vmem:[%s71 + $0x58] sm:$0xff] %v94
        %v96 = vld [vmem:[%s70 + $0x60] sm:$0xff]
        %97 = vst [vmem:[%s71 + $0x60] sm:$0xff] %v96
        %v98 = vld [vmem:[%s70 + $0x68] sm:$0xff]
        %99 = vst [vmem:[%s71 + $0x68] sm:$0xff] %v98
        %v100 = vld [vmem:[%s70 + $0x70] sm:$0xff]
        %101 = vst [vmem:[%s71 + $0x70] sm:$0xff] %v100
        %v102 = vld [vmem:[%s70 + $0x78] sm:$0xff]
        %103 = vst [vmem:[%s71 + $0x78] sm:$0xff] %v102
        %v104 = vld [vmem:[%s70 + $0x80] sm:$0xff]
        %105 = vst [vmem:[%s71 + $0x80] sm:$0xff] %v104
        %v106 = vld [vmem:[%s70 + $0x88] sm:$0xff]
        %107 = vst [vmem:[%s71 + $0x88] sm:$0xff] %v106
        %v108 = vld [vmem:[%s70 + $0x90] sm:$0xff]
        %109 = vst [vmem:[%s71 + $0x90] sm:$0xff] %v108
        %v110 = vld [vmem:[%s70 + $0x98] sm:$0xff]
        %111 = vst [vmem:[%s71 + $0x98] sm:$0xff] %v110
        %v112 = vld [vmem:[%s70 + $0xa0] sm:$0xff]
        %113 = vst [vmem:[%s71 + $0xa0] sm:$0xff] %v112
        %v114 = vld [vmem:[%s70 + $0xa8] sm:$0xff]
        %115 = vst [vmem:[%s71 + $0xa8] sm:$0xff] %v114
        %v116 = vld [vmem:[%s70 + $0xb0] sm:$0xff]
        %117 = vst [vmem:[%s71 + $0xb0] sm:$0xff] %v116
        %v118 = vld [vmem:[%s70 + $0xb8] sm:$0xff]
        %119 = vst [vmem:[%s71 + $0xb8] sm:$0xff] %v118
        %v120 = vld [vmem:[%s70 + $0xc0] sm:$0xff]
        %121 = vst [vmem:[%s71 + $0xc0] sm:$0xff] %v120
        %v122 = vld [vmem:[%s70 + $0xc8] sm:$0xff]
        %123 = vst [vmem:[%s71 + $0xc8] sm:$0xff] %v122
        %v124 = vld [vmem:[%s70 + $0xd0] sm:$0xff]
        %125 = vst [vmem:[%s71 + $0xd0] sm:$0xff] %v124
        %v126 = vld [vmem:[%s70 + $0xd8] sm:$0xff]
        %127 = vst [vmem:[%s71 + $0xd8] sm:$0xff] %v126
        %v128 = vld [vmem:[%s70 + $0xe0] sm:$0xff]
        %129 = vst [vmem:[%s71 + $0xe0] sm:$0xff] %v128
        %v130 = vld [vmem:[%s70 + $0xe8] sm:$0xff]
        %131 = vst [vmem:[%s71 + $0xe8] sm:$0xff] %v130
        %v132 = vld [vmem:[%s70 + $0xf0] sm:$0xff]
        %133 = vst [vmem:[%s71 + $0xf0] sm:$0xff] %v132
        %v134 = vld [vmem:[%s70 + $0xf8] sm:$0xff]
        %135 = vst [vmem:[%s71 + $0xf8] sm:$0xff] %v134
        %v136 = vld [vmem:[%s70 + $0x100] sm:$0xff]
        %137 = vst [vmem:[%s71 + $0x100] sm:$0xff] %v136
        %v138 = vld [vmem:[%s70 + $0x108] sm:$0xff]
        %139 = vst [vmem:[%s71 + $0x108] sm:$0xff] %v138
        %v140 = vld [vmem:[%s70 + $0x110] sm:$0xff]
        %141 = vst [vmem:[%s71 + $0x110] sm:$0xff] %v140
        %v142 = vld [vmem:[%s70 + $0x118] sm:$0xff]
        %143 = vst [vmem:[%s71 + $0x118] sm:$0xff] %v142
        %v144 = vld [vmem:[%s70 + $0x120] sm:$0xff]
        %145 = vst [vmem:[%s71 + $0x120] sm:$0xff] %v144
        %v146 = vld [vmem:[%s70 + $0x128] sm:$0xff]
        %147 = vst [vmem:[%s71 + $0x128] sm:$0xff] %v146
        %v148 = vld [vmem:[%s70 + $0x130] sm:$0xff]
        %149 = vst [vmem:[%s71 + $0x130] sm:$0xff] %v148
        %v150 = vld [vmem:[%s70 + $0x138] sm:$0xff]
        %151 = vst [vmem:[%s71 + $0x138] sm:$0xff] %v150
        %v152 = vld [vmem:[%s70 + $0x140] sm:$0xff]
        %153 = vst [vmem:[%s71 + $0x140] sm:$0xff] %v152
        %v154 = vld [vmem:[%s70 + $0x148] sm:$0xff]
        %155 = vst [vmem:[%s71 + $0x148] sm:$0xff] %v154
        %v156 = vld [vmem:[%s70 + $0x150] sm:$0xff]
        %157 = vst [vmem:[%s71 + $0x150] sm:$0xff] %v156
        %v158 = vld [vmem:[%s70 + $0x158] sm:$0xff]
        %159 = vst [vmem:[%s71 + $0x158] sm:$0xff] %v158
        %v160 = vld [vmem:[%s70 + $0x160] sm:$0xff]
        %161 = vst [vmem:[%s71 + $0x160] sm:$0xff] %v160
        %v162 = vld [vmem:[%s70 + $0x168] sm:$0xff]
        %163 = vst [vmem:[%s71 + $0x168] sm:$0xff] %v162
        %v164 = vld [vmem:[%s70 + $0x170] sm:$0xff]
        %165 = vst [vmem:[%s71 + $0x170] sm:$0xff] %v164
        %v166 = vld [vmem:[%s70 + $0x178] sm:$0xff]
        %167 = vst [vmem:[%s71 + $0x178] sm:$0xff] %v166
        %v168 = vld [vmem:[%s70 + $0x180] sm:$0xff]
        %169 = vst [vmem:[%s71 + $0x180] sm:$0xff] %v168
        %v170 = vld [vmem:[%s70 + $0x188] sm:$0xff]
        %171 = vst [vmem:[%s71 + $0x188] sm:$0xff] %v170
        %v172 = vld [vmem:[%s70 + $0x190] sm:$0xff]
        %173 = vst [vmem:[%s71 + $0x190] sm:$0xff] %v172
        %v174 = vld [vmem:[%s70 + $0x198] sm:$0xff]
        %175 = vst [vmem:[%s71 + $0x198] sm:$0xff] %v174
        %v176 = vld [vmem:[%s70 + $0x1a0] sm:$0xff]
        %177 = vst [vmem:[%s71 + $0x1a0] sm:$0xff] %v176
        %v178 = vld [vmem:[%s70 + $0x1a8] sm:$0xff]
        %179 = vst [vmem:[%s71 + $0x1a8] sm:$0xff] %v178
        %v180 = vld [vmem:[%s70 + $0x1b0] sm:$0xff]
        %181 = vst [vmem:[%s71 + $0x1b0] sm:$0xff] %v180
        %v182 = vld [vmem:[%s70 + $0x1b8] sm:$0xff]
        %183 = vst [vmem:[%s71 + $0x1b8] sm:$0xff] %v182
        %v184 = vld [vmem:[%s70 + $0x1c0] sm:$0xff]
        %185 = vst [vmem:[%s71 + $0x1c0] sm:$0xff] %v184
        %v186 = vld [vmem:[%s70 + $0x1c8] sm:$0xff]
        %187 = vst [vmem:[%s71 + $0x1c8] sm:$0xff] %v186
        %v188 = vld [vmem:[%s70 + $0x1d0] sm:$0xff]
        %189 = vst [vmem:[%s71 + $0x1d0] sm:$0xff] %v188
        %v190 = vld [vmem:[%s70 + $0x1d8] sm:$0xff]
        %191 = vst [vmem:[%s71 + $0x1d8] sm:$0xff] %v190
        %v192 = vld [vmem:[%s70 + $0x1e0] sm:$0xff]
        %193 = vst [vmem:[%s71 + $0x1e0] sm:$0xff] %v192
        %v194 = vld [vmem:[%s70 + $0x1e8] sm:$0xff]
        %195 = vst [vmem:[%s71 + $0x1e8] sm:$0xff] %v194
        %v196 = vld [vmem:[%s70 + $0x1f0] sm:$0xff]
        %197 = vst [vmem:[%s71 + $0x1f0] sm:$0xff] %v196
        %v198 = vld [vmem:[%s70 + $0x1f8] sm:$0xff]
        %199 = vst [vmem:[%s71 + $0x1f8] sm:$0xff] %v198
        %v200 = vld [vmem:[%s70 + $0x200] sm:$0xff]
        %201 = vst [vmem:[%s71 + $0x200] sm:$0xff] %v200
        %v202 = vld [vmem:[%s70 + $0x208] sm:$0xff]
        %203 = vst [vmem:[%s71 + $0x208] sm:$0xff] %v202
        %v204 = vld [vmem:[%s70 + $0x210] sm:$0xff]
        %205 = vst [vmem:[%s71 + $0x210] sm:$0xff] %v204
        %v206 = vld [vmem:[%s70 + $0x218] sm:$0xff]
        %207 = vst [vmem:[%s71 + $0x218] sm:$0xff] %v206
        %v208 = vld [vmem:[%s70 + $0x220] sm:$0xff]
        %209 = vst [vmem:[%s71 + $0x220] sm:$0xff] %v208
        %v210 = vld [vmem:[%s70 + $0x228] sm:$0xff]
        %211 = vst [vmem:[%s71 + $0x228] sm:$0xff] %v210
        %v212 = vld [vmem:[%s70 + $0x230] sm:$0xff]
        %213 = vst [vmem:[%s71 + $0x230] sm:$0xff] %v212
        %v214 = vld [vmem:[%s70 + $0x238] sm:$0xff]
        %215 = vst [vmem:[%s71 + $0x238] sm:$0xff] %v214
        %v216 = vld [vmem:[%s70 + $0x240] sm:$0xff]
        %217 = vst [vmem:[%s71 + $0x240] sm:$0xff] %v216
        %v218 = vld [vmem:[%s70 + $0x248] sm:$0xff]
        %219 = vst [vmem:[%s71 + $0x248] sm:$0xff] %v218
        %v220 = vld [vmem:[%s70 + $0x250] sm:$0xff]
        %221 = vst [vmem:[%s71 + $0x250] sm:$0xff] %v220
        %v222 = vld [vmem:[%s70 + $0x258] sm:$0xff]
        %223 = vst [vmem:[%s71 + $0x258] sm:$0xff] %v222
        %v224 = vld [vmem:[%s70 + $0x260] sm:$0xff]
        %225 = vst [vmem:[%s71 + $0x260] sm:$0xff] %v224
        %v226 = vld [vmem:[%s70 + $0x268] sm:$0xff]
        %227 = vst [vmem:[%s71 + $0x268] sm:$0xff] %v226
        %v228 = vld [vmem:[%s70 + $0x270] sm:$0xff]
        %229 = vst [vmem:[%s71 + $0x270] sm:$0xff] %v228
        %v230 = vld [vmem:[%s70 + $0x278] sm:$0xff]
        %231 = vst [vmem:[%s71 + $0x278] sm:$0xff] %v230
        %v232 = vld [vmem:[%s70 + $0x280] sm:$0xff]
        %233 = vst [vmem:[%s71 + $0x280] sm:$0xff] %v232
        %v234 = vld [vmem:[%s70 + $0x288] sm:$0xff]
        %235 = vst [vmem:[%s71 + $0x288] sm:$0xff] %v234
        %v236 = vld [vmem:[%s70 + $0x290] sm:$0xff]
        %237 = vst [vmem:[%s71 + $0x290] sm:$0xff] %v236
        %v238 = vld [vmem:[%s70 + $0x298] sm:$0xff]
        %239 = vst [vmem:[%s71 + $0x298] sm:$0xff] %v238
        %v240 = vld [vmem:[%s70 + $0x2a0] sm:$0xff]
        %241 = vst [vmem:[%s71 + $0x2a0] sm:$0xff] %v240
        %v242 = vld [vmem:[%s70 + $0x2a8] sm:$0xff]
        %243 = vst [vmem:[%s71 + $0x2a8] sm:$0xff] %v242
        %v244 = vld [vmem:[%s70 + $0x2b0] sm:$0xff]
        %245 = vst [vmem:[%s71 + $0x2b0] sm:$0xff] %v244
        %v246 = vld [vmem:[%s70 + $0x2b8] sm:$0xff]
        %247 = vst [vmem:[%s71 + $0x2b8] sm:$0xff] %v246
        %v248 = vld [vmem:[%s70 + $0x2c0] sm:$0xff]
        %249 = vst [vmem:[%s71 + $0x2c0] sm:$0xff] %v248
        %v250 = vld [vmem:[%s70 + $0x2c8] sm:$0xff]
        %251 = vst [vmem:[%s71 + $0x2c8] sm:$0xff] %v250
        %v252 = vld [vmem:[%s70 + $0x2d0] sm:$0xff]
        %253 = vst [vmem:[%s71 + $0x2d0] sm:$0xff] %v252
        %v254 = vld [vmem:[%s70 + $0x2d8] sm:$0xff]
        %255 = vst [vmem:[%s71 + $0x2d8] sm:$0xff] %v254
        %v256 = vld [vmem:[%s70 + $0x2e0] sm:$0xff]
        %257 = vst [vmem:[%s71 + $0x2e0] sm:$0xff] %v256
        %v258 = vld [vmem:[%s70 + $0x2e8] sm:$0xff]
        %259 = vst [vmem:[%s71 + $0x2e8] sm:$0xff] %v258
        %v260 = vld [vmem:[%s70 + $0x2f0] sm:$0xff]
        %261 = vst [vmem:[%s71 + $0x2f0] sm:$0xff] %v260
        %v262 = vld [vmem:[%s70 + $0x2f8] sm:$0xff]
        %263 = vst [vmem:[%s71 + $0x2f8] sm:$0xff] %v262
        %v264 = vld [vmem:[%s70 + $0x300] sm:$0xff]
        %265 = vst [vmem:[%s71 + $0x300] sm:$0xff] %v264
        %v266 = vld [vmem:[%s70 + $0x308] sm:$0xff]
        %267 = vst [vmem:[%s71 + $0x308] sm:$0xff] %v266
        %v268 = vld [vmem:[%s70 + $0x310] sm:$0xff]
        %269 = vst [vmem:[%s71 + $0x310] sm:$0xff] %v268
        %v270 = vld [vmem:[%s70 + $0x318] sm:$0xff]
        %271 = vst [vmem:[%s71 + $0x318] sm:$0xff] %v270
        %v272 = vld [vmem:[%s70 + $0x320] sm:$0xff]
        %273 = vst [vmem:[%s71 + $0x320] sm:$0xff] %v272
        %v274 = vld [vmem:[%s70 + $0x328] sm:$0xff]
        %275 = vst [vmem:[%s71 + $0x328] sm:$0xff] %v274
        %v276 = vld [vmem:[%s70 + $0x330] sm:$0xff]
        %277 = vst [vmem:[%s71 + $0x330] sm:$0xff] %v276
        %v278 = vld [vmem:[%s70 + $0x338] sm:$0xff]
        %279 = vst [vmem:[%s71 + $0x338] sm:$0xff] %v278
        %v280 = vld [vmem:[%s70 + $0x340] sm:$0xff]
        %281 = vst [vmem:[%s71 + $0x340] sm:$0xff] %v280
        %v282 = vld [vmem:[%s70 + $0x348] sm:$0xff]
        %283 = vst [vmem:[%s71 + $0x348] sm:$0xff] %v282
        %v284 = vld [vmem:[%s70 + $0x350] sm:$0xff]
        %285 = vst [vmem:[%s71 + $0x350] sm:$0xff] %v284
        %v286 = vld [vmem:[%s70 + $0x358] sm:$0xff]
        %287 = vst [vmem:[%s71 + $0x358] sm:$0xff] %v286
        %v288 = vld [vmem:[%s70 + $0x360] sm:$0xff]
        %289 = vst [vmem:[%s71 + $0x360] sm:$0xff] %v288
        %v290 = vld [vmem:[%s70 + $0x368] sm:$0xff]
        %291 = vst [vmem:[%s71 + $0x368] sm:$0xff] %v290
        %v292 = vld [vmem:[%s70 + $0x370] sm:$0xff]
        %293 = vst [vmem:[%s71 + $0x370] sm:$0xff] %v292
        %v294 = vld [vmem:[%s70 + $0x378] sm:$0xff]
        %295 = vst [vmem:[%s71 + $0x378] sm:$0xff] %v294
        %v296 = vld [vmem:[%s70 + $0x380] sm:$0xff]
        %297 = vst [vmem:[%s71 + $0x380] sm:$0xff] %v296
        %v298 = vld [vmem:[%s70 + $0x388] sm:$0xff]
        %299 = vst [vmem:[%s71 + $0x388] sm:$0xff] %v298
        %v300 = vld [vmem:[%s70 + $0x390] sm:$0xff]
        %301 = vst [vmem:[%s71 + $0x390] sm:$0xff] %v300
        %v302 = vld [vmem:[%s70 + $0x398] sm:$0xff]
        %303 = vst [vmem:[%s71 + $0x398] sm:$0xff] %v302
        %v304 = vld [vmem:[%s70 + $0x3a0] sm:$0xff]
        %305 = vst [vmem:[%s71 + $0x3a0] sm:$0xff] %v304
        %v306 = vld [vmem:[%s70 + $0x3a8] sm:$0xff]
        %307 = vst [vmem:[%s71 + $0x3a8] sm:$0xff] %v306
        %v308 = vld [vmem:[%s70 + $0x3b0] sm:$0xff]
        %309 = vst [vmem:[%s71 + $0x3b0] sm:$0xff] %v308
        %v310 = vld [vmem:[%s70 + $0x3b8] sm:$0xff]
        %311 = vst [vmem:[%s71 + $0x3b8] sm:$0xff] %v310
        %v312 = vld [vmem:[%s70 + $0x3c0] sm:$0xff]
        %313 = vst [vmem:[%s71 + $0x3c0] sm:$0xff] %v312
        %v314 = vld [vmem:[%s70 + $0x3c8] sm:$0xff]
        %315 = vst [vmem:[%s71 + $0x3c8] sm:$0xff] %v314
        %v316 = vld [vmem:[%s70 + $0x3d0] sm:$0xff]
        %317 = vst [vmem:[%s71 + $0x3d0] sm:$0xff] %v316
        %v318 = vld [vmem:[%s70 + $0x3d8] sm:$0xff]
        %319 = vst [vmem:[%s71 + $0x3d8] sm:$0xff] %v318
        %v320 = vld [vmem:[%s70 + $0x3e0] sm:$0xff]
        %321 = vst [vmem:[%s71 + $0x3e0] sm:$0xff] %v320
        %v322 = vld [vmem:[%s70 + $0x3e8] sm:$0xff]
        %323 = vst [vmem:[%s71 + $0x3e8] sm:$0xff] %v322
        %v324 = vld [vmem:[%s70 + $0x3f0] sm:$0xff]
        %325 = vst [vmem:[%s71 + $0x3f0] sm:$0xff] %v324
        %v326 = vld [vmem:[%s70 + $0x3f8] sm:$0xff]
        %327 = vst [vmem:[%s71 + $0x3f8] sm:$0xff] %v326
      $region69: #{tpu_custom_call.1} parent=63 // loop_footer
        %s69 = sadd.s32 1, %s65
      $region70: #{tpu_custom_call.1} parent=63 // loop_footer_branch
        %64 = sbr.rel target = $region66
      $region71: #{tpu_custom_call.1} parent=63 // loop_exit
        _
    $region64: #{tpu_custom_call.1} parent=48 // pred_fallthru
      _
    %p328 = pneg %p60
    // Predicated region
    $region72: #{tpu_custom_call.1} parent=48 // pred_check
      _
    $region73: #{tpu_custom_call.1} parent=48 // pred_check_branch
      %330 = sbr.rel (%p60) target = $region75
    $region74: #{tpu_custom_call.1} parent=48 // pred_region
      %s331 = sand.u32 1024, 7
    $region75: #{tpu_custom_call.1} parent=48 // pred_fallthru
      _
  $region49: #{tpu_custom_call.1} parent=0 // pred_fallthru
    _
  // Predicated region
  $region50: #{tpu_custom_call.1} parent=0 // pred_check
    %p44 = pneg %p40
  $region51: #{tpu_custom_call.1} parent=0 // pred_check_branch
    %46 = sbr.rel (%p44) target = $region53
  $region52: #{tpu_custom_call.1} parent=0 // pred_region
    %s47 = sshll.u32 1, 1024
    %s48 = ssub.s32 %s47, 1
    loop: start=0, step=1, limit=1
    $region54: #{tpu_custom_call.1} parent=52 // loop_pre_header
      _
    $region55: #{tpu_custom_call.1} parent=52 // loop_header
      %s50 = sphi 0, %s54
      %p51 = scmp.ge.s32.totalorder %s50, 1
      %s55 = sphi %s6, %s6
      %s56 = sphi [#allocation4], [#allocation4]
    $region56: #{tpu_custom_call.1} parent=52 // loop_header_branch
      %53 = sbr.rel (%p51) target = $region60
    $region57: #{tpu_custom_call.1} parent=52 // loop_body
      %v57 = vld [vmem:[%s55] sm:%s48]
      %58 = vst [vmem:[%s56] sm:%s48] %v57
    $region58: #{tpu_custom_call.1} parent=52 // loop_footer
      %s54 = sadd.s32 1, %s50
    $region59: #{tpu_custom_call.1} parent=52 // loop_footer_branch
      %49 = sbr.rel target = $region55
    $region60: #{tpu_custom_call.1} parent=52 // loop_exit
      _
  $region53: #{tpu_custom_call.1} parent=0 // pred_fallthru
    _
  // Predicated region
  $region76: #{tpu_custom_call.1} parent=0 // pred_check
    _
  $region77: #{tpu_custom_call.1} parent=0 // pred_check_branch
    %334 = sbr.rel (0) target = $region79
  $region78: #{tpu_custom_call.1} parent=0 // pred_region
    %335 = vsyncadd [#allocation5], 16384
  $region79: #{tpu_custom_call.1} parent=0 // pred_fallthru
    _
  %v336 = vld [vmem:[%s0] sm:$0xff]
  %v337 = vld [vmem:[%s0 + $0x8] sm:$0xff]
  %v338 = vld [vmem:[%s0 + $0x10] sm:$0xff]
  %v339 = vld [vmem:[%s0 + $0x18] sm:$0xff]
  %v340 = vld [vmem:[%s0 + $0x20] sm:$0xff]
  %v341 = vld [vmem:[%s0 + $0x28] sm:$0xff]
  %v342 = vld [vmem:[%s0 + $0x30] sm:$0xff]
  %v343 = vld [vmem:[%s0 + $0x38] sm:$0xff]
  %v344 = vld [vmem:[%s0 + $0x40] sm:$0xff]
  %v345 = vld [vmem:[%s0 + $0x48] sm:$0xff]
  %v346 = vld [vmem:[%s0 + $0x50] sm:$0xff]
  %v347 = vld [vmem:[%s0 + $0x58] sm:$0xff]
  %v348 = vld [vmem:[%s0 + $0x60] sm:$0xff]
  %v349 = vld [vmem:[%s0 + $0x68] sm:$0xff]
  %v350 = vld [vmem:[%s0 + $0x70] sm:$0xff]
  %v351 = vld [vmem:[%s0 + $0x78] sm:$0xff]
  %v352 = vld [vmem:[%s0 + $0x80] sm:$0xff]
  %v353 = vld [vmem:[%s0 + $0x88] sm:$0xff]
  %v354 = vld [vmem:[%s0 + $0x90] sm:$0xff]
  %v355 = vld [vmem:[%s0 + $0x98] sm:$0xff]
  %v356 = vld [vmem:[%s0 + $0xa0] sm:$0xff]
  %v357 = vld [vmem:[%s0 + $0xa8] sm:$0xff]
  %v358 = vld [vmem:[%s0 + $0xb0] sm:$0xff]
  %v359 = vld [vmem:[%s0 + $0xb8] sm:$0xff]
  %v360 = vld [vmem:[%s0 + $0xc0] sm:$0xff]
  %v361 = vld [vmem:[%s0 + $0xc8] sm:$0xff]
  %v362 = vld [vmem:[%s0 + $0xd0] sm:$0xff]
  %v363 = vld [vmem:[%s0 + $0xd8] sm:$0xff]
  %v364 = vld [vmem:[%s0 + $0xe0] sm:$0xff]
  %v365 = vld [vmem:[%s0 + $0xe8] sm:$0xff]
  %v366 = vld [vmem:[%s0 + $0xf0] sm:$0xff]
  %v367 = vld [vmem:[%s0 + $0xf8] sm:$0xff]
  %v368 = vld [vmem:[%s0 + $0x100] sm:$0xff]
  %v369 = vld [vmem:[%s0 + $0x108] sm:$0xff]
  %v370 = vld [vmem:[%s0 + $0x110] sm:$0xff]
  %v371 = vld [vmem:[%s0 + $0x118] sm:$0xff]
  %v372 = vld [vmem:[%s0 + $0x120] sm:$0xff]
  %v373 = vld [vmem:[%s0 + $0x128] sm:$0xff]
  %v374 = vld [vmem:[%s0 + $0x130] sm:$0xff]
  %v375 = vld [vmem:[%s0 + $0x138] sm:$0xff]
  %v376 = vld [vmem:[%s0 + $0x140] sm:$0xff]
  %v377 = vld [vmem:[%s0 + $0x148] sm:$0xff]
  %v378 = vld [vmem:[%s0 + $0x150] sm:$0xff]
  %v379 = vld [vmem:[%s0 + $0x158] sm:$0xff]
  %v380 = vld [vmem:[%s0 + $0x160] sm:$0xff]
  %v381 = vld [vmem:[%s0 + $0x168] sm:$0xff]
  %v382 = vld [vmem:[%s0 + $0x170] sm:$0xff]
  %v383 = vld [vmem:[%s0 + $0x178] sm:$0xff]
  %v384 = vld [vmem:[%s0 + $0x180] sm:$0xff]
  %v385 = vld [vmem:[%s0 + $0x188] sm:$0xff]
  %v386 = vld [vmem:[%s0 + $0x190] sm:$0xff]
  %v387 = vld [vmem:[%s0 + $0x198] sm:$0xff]
  %v388 = vld [vmem:[%s0 + $0x1a0] sm:$0xff]
  %v389 = vld [vmem:[%s0 + $0x1a8] sm:$0xff]
  %v390 = vld [vmem:[%s0 + $0x1b0] sm:$0xff]
  %v391 = vld [vmem:[%s0 + $0x1b8] sm:$0xff]
  %v392 = vld [vmem:[%s0 + $0x1c0] sm:$0xff]
  %v393 = vld [vmem:[%s0 + $0x1c8] sm:$0xff]
  %v394 = vld [vmem:[%s0 + $0x1d0] sm:$0xff]
  %v395 = vld [vmem:[%s0 + $0x1d8] sm:$0xff]
  %v396 = vld [vmem:[%s0 + $0x1e0] sm:$0xff]
  %v397 = vld [vmem:[%s0 + $0x1e8] sm:$0xff]
  %v398 = vld [vmem:[%s0 + $0x1f0] sm:$0xff]
  %v399 = vld [vmem:[%s0 + $0x1f8] sm:$0xff]
  %v400 = vld [vmem:[%s1] sm:$0xff]
  %v401 = vld [vmem:[%s1 + $0x8] sm:$0xff]
  %v402 = vld [vmem:[%s2] sm:$0x1]
  %v404 = vlaneseq
  %v405 = vshrl.u32 %v404, 7
  %v406 = vsub.s32 0, %v405
  %v407 = vrot.slane %v402, %v406
  %vm409 = vcmask 130048
  %v411 = vsel %vm409, %v336, 0
  %v414 = vsel %vm409, %v337, 0
  %v417 = vsel %vm409, %v338, 0
  %v420 = vsel %vm409, %v339, 0
  %v423 = vsel %vm409, %v340, 0
  %v426 = vsel %vm409, %v341, 0
  %v429 = vsel %vm409, %v342, 0
  %v432 = vsel %vm409, %v343, 0
  %v435 = vsel %vm409, %v344, 0
  %v438 = vsel %vm409, %v345, 0
  %v441 = vsel %vm409, %v346, 0
  %v444 = vsel %vm409, %v347, 0
  %v447 = vsel %vm409, %v348, 0
  %v450 = vsel %vm409, %v349, 0
  %v453 = vsel %vm409, %v350, 0
  %v456 = vsel %vm409, %v351, 0
  %v459 = vsel %vm409, %v352, 0
  %v462 = vsel %vm409, %v353, 0
  %v465 = vsel %vm409, %v354, 0
  %v468 = vsel %vm409, %v355, 0
  %v471 = vsel %vm409, %v356, 0
  %v474 = vsel %vm409, %v357, 0
  %v477 = vsel %vm409, %v358, 0
  %v480 = vsel %vm409, %v359, 0
  %v483 = vsel %vm409, %v360, 0
  %v486 = vsel %vm409, %v361, 0
  %v489 = vsel %vm409, %v362, 0
  %v492 = vsel %vm409, %v363, 0
  %v495 = vsel %vm409, %v364, 0
  %v498 = vsel %vm409, %v365, 0
  %v501 = vsel %vm409, %v366, 0
  %v504 = vsel %vm409, %v367, 0
  %v507 = vsel %vm409, %v368, 0
  %v510 = vsel %vm409, %v369, 0
  %v513 = vsel %vm409, %v370, 0
  %v516 = vsel %vm409, %v371, 0
  %v519 = vsel %vm409, %v372, 0
  %v522 = vsel %vm409, %v373, 0
  %v525 = vsel %vm409, %v374, 0
  %v528 = vsel %vm409, %v375, 0
  %v531 = vsel %vm409, %v376, 0
  %v534 = vsel %vm409, %v377, 0
  %v537 = vsel %vm409, %v378, 0
  %v540 = vsel %vm409, %v379, 0
  %v543 = vsel %vm409, %v380, 0
  %v546 = vsel %vm409, %v381, 0
  %v549 = vsel %vm409, %v382, 0
  %v552 = vsel %vm409, %v383, 0
  %v555 = vsel %vm409, %v384, 0
  %v558 = vsel %vm409, %v385, 0
  %v561 = vsel %vm409, %v386, 0
  %v564 = vsel %vm409, %v387, 0
  %v567 = vsel %vm409, %v388, 0
  %v570 = vsel %vm409, %v389, 0
  %v573 = vsel %vm409, %v390, 0
  %v576 = vsel %vm409, %v391, 0
  %v579 = vsel %vm409, %v392, 0
  %v582 = vsel %vm409, %v393, 0
  %v585 = vsel %vm409, %v394, 0
  %v588 = vsel %vm409, %v395, 0
  %v591 = vsel %vm409, %v396, 0
  %v594 = vsel %vm409, %v397, 0
  %v597 = vsel %vm409, %v398, 0
  %v600 = vsel %vm409, %v399, 0
  %602 = vmatprep.subr.mxu0 0.0
  %603 = vmatpush1.msra.mxu0 0.0
  %604 = vmatprep.subr.mxu0 0.0
  %605 = vmatpush1.msra.mxu0 0.0
  %606 = vmatprep.subr.mxu0 0.0
  %607 = vmatpush1.msra.mxu0 0.0
  %608 = vmatprep.subr.mxu0 0.0
  %609 = vmatpush1.msra.mxu0 0.0
  %610 = vmatprep.subr.mxu0 0.0
  %611 = vmatpush1.msra.mxu0 0.0
  %612 = vmatprep.subr.mxu0 0.0
  %613 = vmatpush1.msra.mxu0 0.0
  %614 = vmatprep.subr.mxu0 0.0
  %615 = vmatpush1.msra.mxu0 0.0
  %616 = vmatprep.subr.mxu0 0.0
  %617 = vmatpush1.msra.mxu0 0.0
  %618 = vmatprep.subr.mxu0 0.0
  %619 = vmatpush1.msra.mxu0 0.0
  %620 = vmatprep.subr.mxu0 0.0
  %621 = vmatpush1.msra.mxu0 0.0
  %622 = vmatprep.subr.mxu0 0.0
  %623 = vmatpush1.msra.mxu0 0.0
  %624 = vmatprep.subr.mxu0 0.0
  %625 = vmatpush1.msra.mxu0 0.0
  %626 = vmatprep.subr.mxu0 0.0
  %627 = vmatpush1.msra.mxu0 0.0
  %628 = vmatprep.subr.mxu0 0.0
  %629 = vmatpush1.msra.mxu0 0.0
  %630 = vmatprep.subr.mxu0 0.0
  %631 = vmatpush1.msra.mxu0 %v401
  %632 = vmatprep.subr.mxu0 0.0
  %633 = vmatpush1.msra.mxu0 %v400
  %634 = vmatprep.subr.mxu0 0.0
  %635 = vmatpush2.msra.mxu0 0.0
  %636 = vmatprep.subr.mxu0 0.0
  %637 = vmatpush2.msra.mxu0 0.0
  %638 = vmatprep.subr.mxu0 0.0
  %639 = vmatpush2.msra.mxu0 0.0
  %640 = vmatprep.subr.mxu0 0.0
  %641 = vmatpush2.msra.mxu0 0.0
  %642 = vmatprep.subr.mxu0 0.0
  %643 = vmatpush2.msra.mxu0 0.0
  %644 = vmatprep.subr.mxu0 0.0
  %645 = vmatpush2.msra.mxu0 0.0
  %646 = vmatprep.subr.mxu0 0.0
  %647 = vmatpush2.msra.mxu0 0.0
  %648 = vmatprep.subr.mxu0 0.0
  %649 = vmatpush2.msra.mxu0 0.0
  %650 = vmatprep.subr.mxu0 0.0
  %651 = vmatpush2.msra.mxu0 0.0
  %652 = vmatprep.subr.mxu0 0.0
  %653 = vmatpush2.msra.mxu0 0.0
  %654 = vmatprep.subr.mxu0 0.0
  %655 = vmatpush2.msra.mxu0 0.0
  %656 = vmatprep.subr.mxu0 0.0
  %657 = vmatpush2.msra.mxu0 0.0
  %658 = vmatprep.subr.mxu0 0.0
  %659 = vmatpush2.msra.mxu0 0.0
  %660 = vmatprep.subr.mxu0 0.0
  %661 = vmatpush2.msra.mxu0 0.0
  %662 = vmatprep.subr.mxu0 0.0
  %663 = vmatpush2.msra.mxu0 0.0
  %664 = vmatprep.subr.mxu0 0.0
  %665 = vmatpush2.msra.mxu0 0.0
  %666 = vmatprep.mubr.f32.mxu0 0.0
  %667 = vmatmul.mubr.f32.gmra.mxu0 %v411
  %v668 = vpop.f32.mrf.mxu0
  %v669 = vadd.f32 %v407, %v668
  %v670 = vpop.f32.mrf.mxu0
  %671 = vmatprep.mubr.f32.mxu0 0.0
  %672 = vmatmul.mubr.f32.gmra.mxu0 %v414
  %v673 = vpop.f32.mrf.mxu0
  %v674 = vadd.f32 %v407, %v673
  %v675 = vpop.f32.mrf.mxu0
  %676 = vmatprep.mubr.f32.mxu0 0.0
  %677 = vmatmul.mubr.f32.gmra.mxu0 %v417
  %v678 = vpop.f32.mrf.mxu0
  %v679 = vadd.f32 %v407, %v678
  %v680 = vpop.f32.mrf.mxu0
  %681 = vmatprep.mubr.f32.mxu0 0.0
  %682 = vmatmul.mubr.f32.gmra.mxu0 %v420
  %v683 = vpop.f32.mrf.mxu0
  %v684 = vadd.f32 %v407, %v683
  %v685 = vpop.f32.mrf.mxu0
  %686 = vmatprep.mubr.f32.mxu0 0.0
  %687 = vmatmul.mubr.f32.gmra.mxu0 %v423
  %v688 = vpop.f32.mrf.mxu0
  %v689 = vadd.f32 %v407, %v688
  %v690 = vpop.f32.mrf.mxu0
  %691 = vmatprep.mubr.f32.mxu0 0.0
  %692 = vmatmul.mubr.f32.gmra.mxu0 %v426
  %v693 = vpop.f32.mrf.mxu0
  %v694 = vadd.f32 %v407, %v693
  %v695 = vpop.f32.mrf.mxu0
  %696 = vmatprep.mubr.f32.mxu0 0.0
  %697 = vmatmul.mubr.f32.gmra.mxu0 %v429
  %v698 = vpop.f32.mrf.mxu0
  %v699 = vadd.f32 %v407, %v698
  %v700 = vpop.f32.mrf.mxu0
  %701 = vmatprep.mubr.f32.mxu0 0.0
  %702 = vmatmul.mubr.f32.gmra.mxu0 %v432
  %v703 = vpop.f32.mrf.mxu0
  %v704 = vadd.f32 %v407, %v703
  %v705 = vpop.f32.mrf.mxu0
  %706 = vmatprep.mubr.f32.mxu0 0.0
  %707 = vmatmul.mubr.f32.gmra.mxu0 %v435
  %v708 = vpop.f32.mrf.mxu0
  %v709 = vadd.f32 %v407, %v708
  %v710 = vpop.f32.mrf.mxu0
  %711 = vmatprep.mubr.f32.mxu0 0.0
  %712 = vmatmul.mubr.f32.gmra.mxu0 %v438
  %v713 = vpop.f32.mrf.mxu0
  %v714 = vadd.f32 %v407, %v713
  %v715 = vpop.f32.mrf.mxu0
  %716 = vmatprep.mubr.f32.mxu0 0.0
  %717 = vmatmul.mubr.f32.gmra.mxu0 %v441
  %v718 = vpop.f32.mrf.mxu0
  %v719 = vadd.f32 %v407, %v718
  %v720 = vpop.f32.mrf.mxu0
  %721 = vmatprep.mubr.f32.mxu0 0.0
  %722 = vmatmul.mubr.f32.gmra.mxu0 %v444
  %v723 = vpop.f32.mrf.mxu0
  %v724 = vadd.f32 %v407, %v723
  %v725 = vpop.f32.mrf.mxu0
  %726 = vmatprep.mubr.f32.mxu0 0.0
  %727 = vmatmul.mubr.f32.gmra.mxu0 %v447
  %v728 = vpop.f32.mrf.mxu0
  %v729 = vadd.f32 %v407, %v728
  %v730 = vpop.f32.mrf.mxu0
  %731 = vmatprep.mubr.f32.mxu0 0.0
  %732 = vmatmul.mubr.f32.gmra.mxu0 %v450
  %v733 = vpop.f32.mrf.mxu0
  %v734 = vadd.f32 %v407, %v733
  %v735 = vpop.f32.mrf.mxu0
  %736 = vmatprep.mubr.f32.mxu0 0.0
  %737 = vmatmul.mubr.f32.gmra.mxu0 %v453
  %v738 = vpop.f32.mrf.mxu0
  %v739 = vadd.f32 %v407, %v738
  %v740 = vpop.f32.mrf.mxu0
  %741 = vmatprep.mubr.f32.mxu0 0.0
  %742 = vmatmul.mubr.f32.gmra.mxu0 %v456
  %v743 = vpop.f32.mrf.mxu0
  %v744 = vadd.f32 %v407, %v743
  %v745 = vpop.f32.mrf.mxu0
  %746 = vmatprep.mubr.f32.mxu0 0.0
  %747 = vmatmul.mubr.f32.gmra.mxu0 %v459
  %v748 = vpop.f32.mrf.mxu0
  %v749 = vadd.f32 %v407, %v748
  %v750 = vpop.f32.mrf.mxu0
  %751 = vmatprep.mubr.f32.mxu0 0.0
  %752 = vmatmul.mubr.f32.gmra.mxu0 %v462
  %v753 = vpop.f32.mrf.mxu0
  %v754 = vadd.f32 %v407, %v753
  %v755 = vpop.f32.mrf.mxu0
  %756 = vmatprep.mubr.f32.mxu0 0.0
  %757 = vmatmul.mubr.f32.gmra.mxu0 %v465
  %v758 = vpop.f32.mrf.mxu0
  %v759 = vadd.f32 %v407, %v758
  %v760 = vpop.f32.mrf.mxu0
  %761 = vmatprep.mubr.f32.mxu0 0.0
  %762 = vmatmul.mubr.f32.gmra.mxu0 %v468
  %v763 = vpop.f32.mrf.mxu0
  %v764 = vadd.f32 %v407, %v763
  %v765 = vpop.f32.mrf.mxu0
  %766 = vmatprep.mubr.f32.mxu0 0.0
  %767 = vmatmul.mubr.f32.gmra.mxu0 %v471
  %v768 = vpop.f32.mrf.mxu0
  %v769 = vadd.f32 %v407, %v768
  %v770 = vpop.f32.mrf.mxu0
  %771 = vmatprep.mubr.f32.mxu0 0.0
  %772 = vmatmul.mubr.f32.gmra.mxu0 %v474
  %v773 = vpop.f32.mrf.mxu0
  %v774 = vadd.f32 %v407, %v773
  %v775 = vpop.f32.mrf.mxu0
  %776 = vmatprep.mubr.f32.mxu0 0.0
  %777 = vmatmul.mubr.f32.gmra.mxu0 %v477
  %v778 = vpop.f32.mrf.mxu0
  %v779 = vadd.f32 %v407, %v778
  %v780 = vpop.f32.mrf.mxu0
  %781 = vmatprep.mubr.f32.mxu0 0.0
  %782 = vmatmul.mubr.f32.gmra.mxu0 %v480
  %v783 = vpop.f32.mrf.mxu0
  %v784 = vadd.f32 %v407, %v783
  %v785 = vpop.f32.mrf.mxu0
  %786 = vmatprep.mubr.f32.mxu0 0.0
  %787 = vmatmul.mubr.f32.gmra.mxu0 %v483
  %v788 = vpop.f32.mrf.mxu0
  %v789 = vadd.f32 %v407, %v788
  %v790 = vpop.f32.mrf.mxu0
  %791 = vmatprep.mubr.f32.mxu0 0.0
  %792 = vmatmul.mubr.f32.gmra.mxu0 %v486
  %v793 = vpop.f32.mrf.mxu0
  %v794 = vadd.f32 %v407, %v793
  %v795 = vpop.f32.mrf.mxu0
  %796 = vmatprep.mubr.f32.mxu0 0.0
  %797 = vmatmul.mubr.f32.gmra.mxu0 %v489
  %v798 = vpop.f32.mrf.mxu0
  %v799 = vadd.f32 %v407, %v798
  %v800 = vpop.f32.mrf.mxu0
  %801 = vmatprep.mubr.f32.mxu0 0.0
  %802 = vmatmul.mubr.f32.gmra.mxu0 %v492
  %v803 = vpop.f32.mrf.mxu0
  %v804 = vadd.f32 %v407, %v803
  %v805 = vpop.f32.mrf.mxu0
  %806 = vmatprep.mubr.f32.mxu0 0.0
  %807 = vmatmul.mubr.f32.gmra.mxu0 %v495
  %v808 = vpop.f32.mrf.mxu0
  %v809 = vadd.f32 %v407, %v808
  %v810 = vpop.f32.mrf.mxu0
  %811 = vmatprep.mubr.f32.mxu0 0.0
  %812 = vmatmul.mubr.f32.gmra.mxu0 %v498
  %v813 = vpop.f32.mrf.mxu0
  %v814 = vadd.f32 %v407, %v813
  %v815 = vpop.f32.mrf.mxu0
  %816 = vmatprep.mubr.f32.mxu0 0.0
  %817 = vmatmul.mubr.f32.gmra.mxu0 %v501
  %v818 = vpop.f32.mrf.mxu0
  %v819 = vadd.f32 %v407, %v818
  %v820 = vpop.f32.mrf.mxu0
  %821 = vmatprep.mubr.f32.mxu0 0.0
  %822 = vmatmul.mubr.f32.gmra.mxu0 %v504
  %v823 = vpop.f32.mrf.mxu0
  %v824 = vadd.f32 %v407, %v823
  %v825 = vpop.f32.mrf.mxu0
  %826 = vmatprep.mubr.f32.mxu0 0.0
  %827 = vmatmul.mubr.f32.gmra.mxu0 %v507
  %v828 = vpop.f32.mrf.mxu0
  %v829 = vadd.f32 %v407, %v828
  %v830 = vpop.f32.mrf.mxu0
  %831 = vmatprep.mubr.f32.mxu0 0.0
  %832 = vmatmul.mubr.f32.gmra.mxu0 %v510
  %v833 = vpop.f32.mrf.mxu0
  %v834 = vadd.f32 %v407, %v833
  %v835 = vpop.f32.mrf.mxu0
  %836 = vmatprep.mubr.f32.mxu0 0.0
  %837 = vmatmul.mubr.f32.gmra.mxu0 %v513
  %v838 = vpop.f32.mrf.mxu0
  %v839 = vadd.f32 %v407, %v838
  %v840 = vpop.f32.mrf.mxu0
  %841 = vmatprep.mubr.f32.mxu0 0.0
  %842 = vmatmul.mubr.f32.gmra.mxu0 %v516
  %v843 = vpop.f32.mrf.mxu0
  %v844 = vadd.f32 %v407, %v843
  %v845 = vpop.f32.mrf.mxu0
  %846 = vmatprep.mubr.f32.mxu0 0.0
  %847 = vmatmul.mubr.f32.gmra.mxu0 %v519
  %v848 = vpop.f32.mrf.mxu0
  %v849 = vadd.f32 %v407, %v848
  %v850 = vpop.f32.mrf.mxu0
  %851 = vmatprep.mubr.f32.mxu0 0.0
  %852 = vmatmul.mubr.f32.gmra.mxu0 %v522
  %v853 = vpop.f32.mrf.mxu0
  %v854 = vadd.f32 %v407, %v853
  %v855 = vpop.f32.mrf.mxu0
  %856 = vmatprep.mubr.f32.mxu0 0.0
  %857 = vmatmul.mubr.f32.gmra.mxu0 %v525
  %v858 = vpop.f32.mrf.mxu0
  %v859 = vadd.f32 %v407, %v858
  %v860 = vpop.f32.mrf.mxu0
  %861 = vmatprep.mubr.f32.mxu0 0.0
  %862 = vmatmul.mubr.f32.gmra.mxu0 %v528
  %v863 = vpop.f32.mrf.mxu0
  %v864 = vadd.f32 %v407, %v863
  %v865 = vpop.f32.mrf.mxu0
  %866 = vmatprep.mubr.f32.mxu0 0.0
  %867 = vmatmul.mubr.f32.gmra.mxu0 %v531
  %v868 = vpop.f32.mrf.mxu0
  %v869 = vadd.f32 %v407, %v868
  %v870 = vpop.f32.mrf.mxu0
  %871 = vmatprep.mubr.f32.mxu0 0.0
  %872 = vmatmul.mubr.f32.gmra.mxu0 %v534
  %v873 = vpop.f32.mrf.mxu0
  %v874 = vadd.f32 %v407, %v873
  %v875 = vpop.f32.mrf.mxu0
  %876 = vmatprep.mubr.f32.mxu0 0.0
  %877 = vmatmul.mubr.f32.gmra.mxu0 %v537
  %v878 = vpop.f32.mrf.mxu0
  %v879 = vadd.f32 %v407, %v878
  %v880 = vpop.f32.mrf.mxu0
  %881 = vmatprep.mubr.f32.mxu0 0.0
  %882 = vmatmul.mubr.f32.gmra.mxu0 %v540
  %v883 = vpop.f32.mrf.mxu0
  %v884 = vadd.f32 %v407, %v883
  %v885 = vpop.f32.mrf.mxu0
  %886 = vmatprep.mubr.f32.mxu0 0.0
  %887 = vmatmul.mubr.f32.gmra.mxu0 %v543
  %v888 = vpop.f32.mrf.mxu0
  %v889 = vadd.f32 %v407, %v888
  %v890 = vpop.f32.mrf.mxu0
  %891 = vmatprep.mubr.f32.mxu0 0.0
  %892 = vmatmul.mubr.f32.gmra.mxu0 %v546
  %v893 = vpop.f32.mrf.mxu0
  %v894 = vadd.f32 %v407, %v893
  %v895 = vpop.f32.mrf.mxu0
  %896 = vmatprep.mubr.f32.mxu0 0.0
  %897 = vmatmul.mubr.f32.gmra.mxu0 %v549
  %v898 = vpop.f32.mrf.mxu0
  %v899 = vadd.f32 %v407, %v898
  %v900 = vpop.f32.mrf.mxu0
  %901 = vmatprep.mubr.f32.mxu0 0.0
  %902 = vmatmul.mubr.f32.gmra.mxu0 %v552
  %v903 = vpop.f32.mrf.mxu0
  %v904 = vadd.f32 %v407, %v903
  %v905 = vpop.f32.mrf.mxu0
  %906 = vmatprep.mubr.f32.mxu0 0.0
  %907 = vmatmul.mubr.f32.gmra.mxu0 %v555
  %v908 = vpop.f32.mrf.mxu0
  %v909 = vadd.f32 %v407, %v908
  %v910 = vpop.f32.mrf.mxu0
  %911 = vmatprep.mubr.f32.mxu0 0.0
  %912 = vmatmul.mubr.f32.gmra.mxu0 %v558
  %v913 = vpop.f32.mrf.mxu0
  %v914 = vadd.f32 %v407, %v913
  %v915 = vpop.f32.mrf.mxu0
  %916 = vmatprep.mubr.f32.mxu0 0.0
  %917 = vmatmul.mubr.f32.gmra.mxu0 %v561
  %v918 = vpop.f32.mrf.mxu0
  %v919 = vadd.f32 %v407, %v918
  %v920 = vpop.f32.mrf.mxu0
  %921 = vmatprep.mubr.f32.mxu0 0.0
  %922 = vmatmul.mubr.f32.gmra.mxu0 %v564
  %v923 = vpop.f32.mrf.mxu0
  %v924 = vadd.f32 %v407, %v923
  %v925 = vpop.f32.mrf.mxu0
  %926 = vmatprep.mubr.f32.mxu0 0.0
  %927 = vmatmul.mubr.f32.gmra.mxu0 %v567
  %v928 = vpop.f32.mrf.mxu0
  %v929 = vadd.f32 %v407, %v928
  %v930 = vpop.f32.mrf.mxu0
  %931 = vmatprep.mubr.f32.mxu0 0.0
  %932 = vmatmul.mubr.f32.gmra.mxu0 %v570
  %v933 = vpop.f32.mrf.mxu0
  %v934 = vadd.f32 %v407, %v933
  %v935 = vpop.f32.mrf.mxu0
  %936 = vmatprep.mubr.f32.mxu0 0.0
  %937 = vmatmul.mubr.f32.gmra.mxu0 %v573
  %v938 = vpop.f32.mrf.mxu0
  %v939 = vadd.f32 %v407, %v938
  %v940 = vpop.f32.mrf.mxu0
  %941 = vmatprep.mubr.f32.mxu0 0.0
  %942 = vmatmul.mubr.f32.gmra.mxu0 %v576
  %v943 = vpop.f32.mrf.mxu0
  %v944 = vadd.f32 %v407, %v943
  %v945 = vpop.f32.mrf.mxu0
  %946 = vmatprep.mubr.f32.mxu0 0.0
  %947 = vmatmul.mubr.f32.gmra.mxu0 %v579
  %v948 = vpop.f32.mrf.mxu0
  %v949 = vadd.f32 %v407, %v948
  %v950 = vpop.f32.mrf.mxu0
  %951 = vmatprep.mubr.f32.mxu0 0.0
  %952 = vmatmul.mubr.f32.gmra.mxu0 %v582
  %v953 = vpop.f32.mrf.mxu0
  %v954 = vadd.f32 %v407, %v953
  %v955 = vpop.f32.mrf.mxu0
  %956 = vmatprep.mubr.f32.mxu0 0.0
  %957 = vmatmul.mubr.f32.gmra.mxu0 %v585
  %v958 = vpop.f32.mrf.mxu0
  %v959 = vadd.f32 %v407, %v958
  %v960 = vpop.f32.mrf.mxu0
  %961 = vmatprep.mubr.f32.mxu0 0.0
  %962 = vmatmul.mubr.f32.gmra.mxu0 %v588
  %v963 = vpop.f32.mrf.mxu0
  %v964 = vadd.f32 %v407, %v963
  %v965 = vpop.f32.mrf.mxu0
  %966 = vmatprep.mubr.f32.mxu0 0.0
  %967 = vmatmul.mubr.f32.gmra.mxu0 %v591
  %v968 = vpop.f32.mrf.mxu0
  %v969 = vadd.f32 %v407, %v968
  %v970 = vpop.f32.mrf.mxu0
  %971 = vmatprep.mubr.f32.mxu0 0.0
  %972 = vmatmul.mubr.f32.gmra.mxu0 %v594
  %v973 = vpop.f32.mrf.mxu0
  %v974 = vadd.f32 %v407, %v973
  %v975 = vpop.f32.mrf.mxu0
  %976 = vmatprep.mubr.f32.mxu0 0.0
  %977 = vmatmul.mubr.f32.gmra.mxu0 %v597
  %v978 = vpop.f32.mrf.mxu0
  %v979 = vadd.f32 %v407, %v978
  %v980 = vpop.f32.mrf.mxu0
  %981 = vmatprep.mubr.f32.mxu0 0.0
  %982 = vmatmul.mubr.f32.gmra.mxu0 %v600
  %v983 = vpop.f32.mrf.mxu0
  %v984 = vadd.f32 %v407, %v983
  %v985 = vpop.f32.mrf.mxu0
  %986 = vdwg.mxu0
  %987 = vst [vmem:[#allocation2] sm:$0xff] %v669
  %988 = vst [vmem:[#allocation2 + $0x8] sm:$0xff] %v674
  %989 = vst [vmem:[#allocation2 + $0x10] sm:$0xff] %v679
  %990 = vst [vmem:[#allocation2 + $0x18] sm:$0xff] %v684
  %991 = vst [vmem:[#allocation2 + $0x20] sm:$0xff] %v689
  %992 = vst [vmem:[#allocation2 + $0x28] sm:$0xff] %v694
  %993 = vst [vmem:[#allocation2 + $0x30] sm:$0xff] %v699
  %994 = vst [vmem:[#allocation2 + $0x38] sm:$0xff] %v704
  %995 = vst [vmem:[#allocation2 + $0x40] sm:$0xff] %v709
  %996 = vst [vmem:[#allocation2 + $0x48] sm:$0xff] %v714
  %997 = vst [vmem:[#allocation2 + $0x50] sm:$0xff] %v719
  %998 = vst [vmem:[#allocation2 + $0x58] sm:$0xff] %v724
  %999 = vst [vmem:[#allocation2 + $0x60] sm:$0xff] %v729
  %1000 = vst [vmem:[#allocation2 + $0x68] sm:$0xff] %v734
  %1001 = vst [vmem:[#allocation2 + $0x70] sm:$0xff] %v739
  %1002 = vst [vmem:[#allocation2 + $0x78] sm:$0xff] %v744
  %1003 = vst [vmem:[#allocation2 + $0x80] sm:$0xff] %v749
  %1004 = vst [vmem:[#allocation2 + $0x88] sm:$0xff] %v754
  %1005 = vst [vmem:[#allocation2 + $0x90] sm:$0xff] %v759
  %1006 = vst [vmem:[#allocation2 + $0x98] sm:$0xff] %v764
  %1007 = vst [vmem:[#allocation2 + $0xa0] sm:$0xff] %v769
  %1008 = vst [vmem:[#allocation2 + $0xa8] sm:$0xff] %v774
  %1009 = vst [vmem:[#allocation2 + $0xb0] sm:$0xff] %v779
  %1010 = vst [vmem:[#allocation2 + $0xb8] sm:$0xff] %v784
  %1011 = vst [vmem:[#allocation2 + $0xc0] sm:$0xff] %v789
  %1012 = vst [vmem:[#allocation2 + $0xc8] sm:$0xff] %v794
  %1013 = vst [vmem:[#allocation2 + $0xd0] sm:$0xff] %v799
  %1014 = vst [vmem:[#allocation2 + $0xd8] sm:$0xff] %v804
  %1015 = vst [vmem:[#allocation2 + $0xe0] sm:$0xff] %v809
  %1016 = vst [vmem:[#allocation2 + $0xe8] sm:$0xff] %v814
  %1017 = vst [vmem:[#allocation2 + $0xf0] sm:$0xff] %v819
  %1018 = vst [vmem:[#allocation2 + $0xf8] sm:$0xff] %v824
  %1019 = vst [vmem:[#allocation2 + $0x100] sm:$0xff] %v829
  %1020 = vst [vmem:[#allocation2 + $0x108] sm:$0xff] %v834
  %1021 = vst [vmem:[#allocation2 + $0x110] sm:$0xff] %v839
  %1022 = vst [vmem:[#allocation2 + $0x118] sm:$0xff] %v844
  %1023 = vst [vmem:[#allocation2 + $0x120] sm:$0xff] %v849
  %1024 = vst [vmem:[#allocation2 + $0x128] sm:$0xff] %v854
  %1025 = vst [vmem:[#allocation2 + $0x130] sm:$0xff] %v859
  %1026 = vst [vmem:[#allocation2 + $0x138] sm:$0xff] %v864
  %1027 = vst [vmem:[#allocation2 + $0x140] sm:$0xff] %v869
  %1028 = vst [vmem:[#allocation2 + $0x148] sm:$0xff] %v874
  %1029 = vst [vmem:[#allocation2 + $0x150] sm:$0xff] %v879
  %1030 = vst [vmem:[#allocation2 + $0x158] sm:$0xff] %v884
  %1031 = vst [vmem:[#allocation2 + $0x160] sm:$0xff] %v889
  %1032 = vst [vmem:[#allocation2 + $0x168] sm:$0xff] %v894
  %1033 = vst [vmem:[#allocation2 + $0x170] sm:$0xff] %v899
  %1034 = vst [vmem:[#allocation2 + $0x178] sm:$0xff] %v904
  %1035 = vst [vmem:[#allocation2 + $0x180] sm:$0xff] %v909
  %1036 = vst [vmem:[#allocation2 + $0x188] sm:$0xff] %v914
  %1037 = vst [vmem:[#allocation2 + $0x190] sm:$0xff] %v919
  %1038 = vst [vmem:[#allocation2 + $0x198] sm:$0xff] %v924
  %1039 = vst [vmem:[#allocation2 + $0x1a0] sm:$0xff] %v929
  %1040 = vst [vmem:[#allocation2 + $0x1a8] sm:$0xff] %v934
  %1041 = vst [vmem:[#allocation2 + $0x1b0] sm:$0xff] %v939
  %1042 = vst [vmem:[#allocation2 + $0x1b8] sm:$0xff] %v944
  %1043 = vst [vmem:[#allocation2 + $0x1c0] sm:$0xff] %v949
  %1044 = vst [vmem:[#allocation2 + $0x1c8] sm:$0xff] %v954
  %1045 = vst [vmem:[#allocation2 + $0x1d0] sm:$0xff] %v959
  %1046 = vst [vmem:[#allocation2 + $0x1d8] sm:$0xff] %v964
  %1047 = vst [vmem:[#allocation2 + $0x1e0] sm:$0xff] %v969
  %1048 = vst [vmem:[#allocation2 + $0x1e8] sm:$0xff] %v974
  %1049 = vst [vmem:[#allocation2 + $0x1f0] sm:$0xff] %v979
  %1050 = vst [vmem:[#allocation2 + $0x1f8] sm:$0xff] %v984
  %v1051 = vld [vmem:[%s5] sm:$0x1]
  %v1053 = vlaneseq
  %v1054 = vshrl.u32 %v1053, 7
  %v1055 = vsub.s32 0, %v1054
  %v1056 = vrot.slane %v1051, %v1055
  %v1058 = vld [vmem:[#allocation2] sm:$0xff]
  %v1059 = vld [vmem:[#allocation2 + $0x8] sm:$0xff]
  %v1060 = vld [vmem:[#allocation2 + $0x10] sm:$0xff]
  %v1061 = vld [vmem:[#allocation2 + $0x18] sm:$0xff]
  %v1062 = vld [vmem:[#allocation2 + $0x20] sm:$0xff]
  %v1063 = vld [vmem:[#allocation2 + $0x28] sm:$0xff]
  %v1064 = vld [vmem:[#allocation2 + $0x30] sm:$0xff]
  %v1065 = vld [vmem:[#allocation2 + $0x38] sm:$0xff]
  %v1066 = vld [vmem:[%s3] sm:$0xff]
  %v1067 = vld [vmem:[%s3 + $0x8] sm:$0xff]
  %v1068 = vld [vmem:[%s3 + $0x10] sm:$0xff]
  %v1069 = vld [vmem:[%s3 + $0x18] sm:$0xff]
  %v1070 = vld [vmem:[%s3 + $0x20] sm:$0xff]
  %v1071 = vld [vmem:[%s3 + $0x28] sm:$0xff]
  %v1072 = vld [vmem:[%s3 + $0x30] sm:$0xff]
  %v1073 = vld [vmem:[%s3 + $0x38] sm:$0xff]
  %v1074 = vld [vmem:[%s3 + $0x40] sm:$0xff]
  %v1075 = vld [vmem:[%s3 + $0x48] sm:$0xff]
  %v1076 = vld [vmem:[%s3 + $0x50] sm:$0xff]
  %v1077 = vld [vmem:[%s3 + $0x58] sm:$0xff]
  %v1078 = vld [vmem:[%s3 + $0x60] sm:$0xff]
  %v1079 = vld [vmem:[%s3 + $0x68] sm:$0xff]
  %v1080 = vld [vmem:[%s3 + $0x70] sm:$0xff]
  %v1081 = vld [vmem:[%s3 + $0x78] sm:$0xff]
  %1082 = vmatprep.subr.mxu0 0.0
  %1083 = vmatpush1.msra.mxu0 %v1081
  %1084 = vmatprep.subr.mxu0 0.0
  %1085 = vmatpush1.msra.mxu0 %v1080
  %1086 = vmatprep.subr.mxu0 0.0
  %1087 = vmatpush1.msra.mxu0 %v1079
  %1088 = vmatprep.subr.mxu0 0.0
  %1089 = vmatpush1.msra.mxu0 %v1078
  %1090 = vmatprep.subr.mxu0 0.0
  %1091 = vmatpush1.msra.mxu0 %v1077
  %1092 = vmatprep.subr.mxu0 0.0
  %1093 = vmatpush1.msra.mxu0 %v1076
  %1094 = vmatprep.subr.mxu0 0.0
  %1095 = vmatpush1.msra.mxu0 %v1075
  %1096 = vmatprep.subr.mxu0 0.0
  %1097 = vmatpush1.msra.mxu0 %v1074
  %1098 = vmatprep.subr.mxu0 0.0
  %1099 = vmatpush1.msra.mxu0 %v1073
  %1100 = vmatprep.subr.mxu0 0.0
  %1101 = vmatpush1.msra.mxu0 %v1072
  %1102 = vmatprep.subr.mxu0 0.0
  %1103 = vmatpush1.msra.mxu0 %v1071
  %1104 = vmatprep.subr.mxu0 0.0
  %1105 = vmatpush1.msra.mxu0 %v1070
  %1106 = vmatprep.subr.mxu0 0.0
  %1107 = vmatpush1.msra.mxu0 %v1069
  %1108 = vmatprep.subr.mxu0 0.0
  %1109 = vmatpush1.msra.mxu0 %v1068
  %1110 = vmatprep.subr.mxu0 0.0
  %1111 = vmatpush1.msra.mxu0 %v1067
  %1112 = vmatprep.subr.mxu0 0.0
  %1113 = vmatpush1.msra.mxu0 %v1066
  %1114 = vmatprep.subr.mxu0 0.0
  %1115 = vmatpush2.msra.mxu0 0.0
  %1116 = vmatprep.subr.mxu0 0.0
  %1117 = vmatpush2.msra.mxu0 0.0
  %1118 = vmatprep.subr.mxu0 0.0
  %1119 = vmatpush2.msra.mxu0 0.0
  %1120 = vmatprep.subr.mxu0 0.0
  %1121 = vmatpush2.msra.mxu0 0.0
  %1122 = vmatprep.subr.mxu0 0.0
  %1123 = vmatpush2.msra.mxu0 0.0
  %1124 = vmatprep.subr.mxu0 0.0
  %1125 = vmatpush2.msra.mxu0 0.0
  %1126 = vmatprep.subr.mxu0 0.0
  %1127 = vmatpush2.msra.mxu0 0.0
  %1128 = vmatprep.subr.mxu0 0.0
  %1129 = vmatpush2.msra.mxu0 0.0
  %1130 = vmatprep.subr.mxu0 0.0
  %1131 = vmatpush2.msra.mxu0 0.0
  %1132 = vmatprep.subr.mxu0 0.0
  %1133 = vmatpush2.msra.mxu0 0.0
  %1134 = vmatprep.subr.mxu0 0.0
  %1135 = vmatpush2.msra.mxu0 0.0
  %1136 = vmatprep.subr.mxu0 0.0
  %1137 = vmatpush2.msra.mxu0 0.0
  %1138 = vmatprep.subr.mxu0 0.0
  %1139 = vmatpush2.msra.mxu0 0.0
  %1140 = vmatprep.subr.mxu0 0.0
  %1141 = vmatpush2.msra.mxu0 0.0
  %1142 = vmatprep.subr.mxu0 0.0
  %1143 = vmatpush2.msra.mxu0 0.0
  %1144 = vmatprep.subr.mxu0 0.0
  %1145 = vmatpush2.msra.mxu0 0.0
  %1146 = vmatprep.mubr.f32.mxu0 0.0
  %1147 = vmatmul.mubr.f32.gmra.mxu0 0.0
  %v1148 = vpop.f32.mrf.mxu0
  %v1149 = vadd.f32 0.0, %v1148
  %v1150 = vpop.f32.mrf.mxu0
  %1151 = vmatprep.mubr.f32.mxu0 0.0
  %1152 = vmatmul.mubr.f32.gmra.mxu0 0.0
  %v1153 = vpop.f32.mrf.mxu0
  %v1154 = vadd.f32 0.0, %v1153
  %v1155 = vpop.f32.mrf.mxu0
  %1156 = vmatprep.mubr.f32.mxu0 0.0
  %1157 = vmatmul.mubr.f32.gmra.mxu0 0.0
  %v1158 = vpop.f32.mrf.mxu0
  %v1159 = vadd.f32 0.0, %v1158
  %v1160 = vpop.f32.mrf.mxu0
  %1161 = vmatprep.mubr.f32.mxu0 0.0
  %1162 = vmatmul.mubr.f32.gmra.mxu0 0.0
  %v1163 = vpop.f32.mrf.mxu0
  %v1164 = vadd.f32 0.0, %v1163
  %v1165 = vpop.f32.mrf.mxu0
  %1166 = vmatprep.mubr.f32.mxu0 0.0
  %1167 = vmatmul.mubr.f32.gmra.mxu0 0.0
  %v1168 = vpop.f32.mrf.mxu0
  %v1169 = vadd.f32 0.0, %v1168
  %v1170 = vpop.f32.mrf.mxu0
  %1171 = vmatprep.mubr.f32.mxu0 0.0
  %1172 = vmatmul.mubr.f32.gmra.mxu0 0.0
  %v1173 = vpop.f32.mrf.mxu0
  %v1174 = vadd.f32 0.0, %v1173
  %v1175 = vpop.f32.mrf.mxu0
  %1176 = vmatprep.mubr.f32.mxu0 0.0
  %1177 = vmatmul.mubr.f32.gmra.mxu0 0.0
  %v1178 = vpop.f32.mrf.mxu0
  %v1179 = vadd.f32 0.0, %v1178
  %v1180 = vpop.f32.mrf.mxu0
  %1181 = vmatprep.mubr.f32.mxu0 0.0
  %1182 = vmatmul.mubr.f32.gmra.mxu0 0.0
  %v1183 = vpop.f32.mrf.mxu0
  %v1184 = vadd.f32 0.0, %v1183
  %v1185 = vpop.f32.mrf.mxu0
  %1186 = vdwg.mxu0
  %v1187 = vadd.f32 %v1058, %v1149
  %v1188 = vadd.f32 %v1059, %v1154
  %v1189 = vadd.f32 %v1060, %v1159
  %v1190 = vadd.f32 %v1061, %v1164
  %v1191 = vadd.f32 %v1062, %v1169
  %v1192 = vadd.f32 %v1063, %v1174
  %v1193 = vadd.f32 %v1064, %v1179
  %v1194 = vadd.f32 %v1065, %v1184
  %v1195 = vtanh.pop %v1187
  %v1196 = vtanh.pop %v1188
  %v1197 = vtanh.pop %v1189
  %v1198 = vtanh.pop %v1190
  %v1199 = vtanh.pop %v1191
  %v1200 = vtanh.pop %v1192
  %v1201 = vtanh.pop %v1193
  %v1202 = vtanh.pop %v1194
  %v1203 = vld [vmem:[%s4] sm:$0xff]
  %v1204 = vld [vmem:[%s4 + $0x8] sm:$0xff]
  %v1205 = vld [vmem:[%s4 + $0x10] sm:$0xff]
  %v1206 = vld [vmem:[%s4 + $0x18] sm:$0xff]
  %v1207 = vld [vmem:[%s4 + $0x20] sm:$0xff]
  %v1208 = vld [vmem:[%s4 + $0x28] sm:$0xff]
  %v1209 = vld [vmem:[%s4 + $0x30] sm:$0xff]
  %v1210 = vld [vmem:[%s4 + $0x38] sm:$0xff]
  %v1211 = vld [vmem:[%s4 + $0x40] sm:$0xff]
  %v1212 = vld [vmem:[%s4 + $0x48] sm:$0xff]
  %v1213 = vld [vmem:[%s4 + $0x50] sm:$0xff]
  %v1214 = vld [vmem:[%s4 + $0x58] sm:$0xff]
  %v1215 = vld [vmem:[%s4 + $0x60] sm:$0xff]
  %v1216 = vld [vmem:[%s4 + $0x68] sm:$0xff]
  %v1217 = vld [vmem:[%s4 + $0x70] sm:$0xff]
  %v1218 = vld [vmem:[%s4 + $0x78] sm:$0xff]
  %v1219 = vld [vmem:[%s4 + $0x80] sm:$0xff]
  %v1220 = vld [vmem:[%s4 + $0x88] sm:$0xff]
  %v1221 = vld [vmem:[%s4 + $0x90] sm:$0xff]
  %v1222 = vld [vmem:[%s4 + $0x98] sm:$0xff]
  %v1223 = vld [vmem:[%s4 + $0xa0] sm:$0xff]
  %v1224 = vld [vmem:[%s4 + $0xa8] sm:$0xff]
  %v1225 = vld [vmem:[%s4 + $0xb0] sm:$0xff]
  %v1226 = vld [vmem:[%s4 + $0xb8] sm:$0xff]
  %v1227 = vld [vmem:[%s4 + $0xc0] sm:$0xff]
  %v1228 = vld [vmem:[%s4 + $0xc8] sm:$0xff]
  %v1229 = vld [vmem:[%s4 + $0xd0] sm:$0xff]
  %v1230 = vld [vmem:[%s4 + $0xd8] sm:$0xff]
  %v1231 = vld [vmem:[%s4 + $0xe0] sm:$0xff]
  %v1232 = vld [vmem:[%s4 + $0xe8] sm:$0xff]
  %v1233 = vld [vmem:[%s4 + $0xf0] sm:$0xff]
  %v1234 = vld [vmem:[%s4 + $0xf8] sm:$0xff]
  %1235 = vmatprep.subr.mxu0 0.0
  %1236 = vmatpush1.msra.mxu0 %v1218
  %1237 = vmatprep.subr.mxu0 0.0
  %1238 = vmatpush1.msra.mxu0 %v1217
  %1239 = vmatprep.subr.mxu0 0.0
  %1240 = vmatpush1.msra.mxu0 %v1216
  %1241 = vmatprep.subr.mxu0 0.0
  %1242 = vmatpush1.msra.mxu0 %v1215
  %1243 = vmatprep.subr.mxu0 0.0
  %1244 = vmatpush1.msra.mxu0 %v1214
  %1245 = vmatprep.subr.mxu0 0.0
  %1246 = vmatpush1.msra.mxu0 %v1213
  %1247 = vmatprep.subr.mxu0 0.0
  %1248 = vmatpush1.msra.mxu0 %v1212
  %1249 = vmatprep.subr.mxu0 0.0
  %1250 = vmatpush1.msra.mxu0 %v1211
  %1251 = vmatprep.subr.mxu0 0.0
  %1252 = vmatpush1.msra.mxu0 %v1210
  %1253 = vmatprep.subr.mxu0 0.0
  %1254 = vmatpush1.msra.mxu0 %v1209
  %1255 = vmatprep.subr.mxu0 0.0
  %1256 = vmatpush1.msra.mxu0 %v1208
  %1257 = vmatprep.subr.mxu0 0.0
  %1258 = vmatpush1.msra.mxu0 %v1207
  %1259 = vmatprep.subr.mxu0 0.0
  %1260 = vmatpush1.msra.mxu0 %v1206
  %1261 = vmatprep.subr.mxu0 0.0
  %1262 = vmatpush1.msra.mxu0 %v1205
  %1263 = vmatprep.subr.mxu0 0.0
  %1264 = vmatpush1.msra.mxu0 %v1204
  %1265 = vmatprep.subr.mxu0 0.0
  %1266 = vmatpush1.msra.mxu0 %v1203
  %1267 = vmatprep.subr.mxu0 0.0
  %1268 = vmatpush2.msra.mxu0 %v1234
  %1269 = vmatprep.subr.mxu0 0.0
  %1270 = vmatpush2.msra.mxu0 %v1233
  %1271 = vmatprep.subr.mxu0 0.0
  %1272 = vmatpush2.msra.mxu0 %v1232
  %1273 = vmatprep.subr.mxu0 0.0
  %1274 = vmatpush2.msra.mxu0 %v1231
  %1275 = vmatprep.subr.mxu0 0.0
  %1276 = vmatpush2.msra.mxu0 %v1230
  %1277 = vmatprep.subr.mxu0 0.0
  %1278 = vmatpush2.msra.mxu0 %v1229
  %1279 = vmatprep.subr.mxu0 0.0
  %1280 = vmatpush2.msra.mxu0 %v1228
  %1281 = vmatprep.subr.mxu0 0.0
  %1282 = vmatpush2.msra.mxu0 %v1227
  %1283 = vmatprep.subr.mxu0 0.0
  %1284 = vmatpush2.msra.mxu0 %v1226
  %1285 = vmatprep.subr.mxu0 0.0
  %1286 = vmatpush2.msra.mxu0 %v1225
  %1287 = vmatprep.subr.mxu0 0.0
  %1288 = vmatpush2.msra.mxu0 %v1224
  %1289 = vmatprep.subr.mxu0 0.0
  %1290 = vmatpush2.msra.mxu0 %v1223
  %1291 = vmatprep.subr.mxu0 0.0
  %1292 = vmatpush2.msra.mxu0 %v1222
  %1293 = vmatprep.subr.mxu0 0.0
  %1294 = vmatpush2.msra.mxu0 %v1221
  %1295 = vmatprep.subr.mxu0 0.0
  %1296 = vmatpush2.msra.mxu0 %v1220
  %1297 = vmatprep.subr.mxu0 0.0
  %1298 = vmatpush2.msra.mxu0 %v1219
  %1299 = vmatprep.mubr.f32.mxu0 0.0
  %1300 = vmatmul.mubr.f32.gmra.mxu0 %v1195
  %v1301 = vpop.f32.mrf.mxu0
  %v1302 = vadd.f32 %v1056, %v1301
  %v1303 = vpop.f32.mrf.mxu0
  %1304 = vmatprep.mubr.f32.mxu0 0.0
  %1305 = vmatmul.mubr.f32.gmra.mxu0 %v1196
  %v1306 = vpop.f32.mrf.mxu0
  %v1307 = vadd.f32 %v1056, %v1306
  %v1308 = vpop.f32.mrf.mxu0
  %1309 = vmatprep.mubr.f32.mxu0 0.0
  %1310 = vmatmul.mubr.f32.gmra.mxu0 %v1197
  %v1311 = vpop.f32.mrf.mxu0
  %v1312 = vadd.f32 %v1056, %v1311
  %v1313 = vpop.f32.mrf.mxu0
  %1314 = vmatprep.mubr.f32.mxu0 0.0
  %1315 = vmatmul.mubr.f32.gmra.mxu0 %v1198
  %v1316 = vpop.f32.mrf.mxu0
  %v1317 = vadd.f32 %v1056, %v1316
  %v1318 = vpop.f32.mrf.mxu0
  %1319 = vmatprep.mubr.f32.mxu0 0.0
  %1320 = vmatmul.mubr.f32.gmra.mxu0 %v1199
  %v1321 = vpop.f32.mrf.mxu0
  %v1322 = vadd.f32 %v1056, %v1321
  %v1323 = vpop.f32.mrf.mxu0
  %1324 = vmatprep.mubr.f32.mxu0 0.0
  %1325 = vmatmul.mubr.f32.gmra.mxu0 %v1200
  %v1326 = vpop.f32.mrf.mxu0
  %v1327 = vadd.f32 %v1056, %v1326
  %v1328 = vpop.f32.mrf.mxu0
  %1329 = vmatprep.mubr.f32.mxu0 0.0
  %1330 = vmatmul.mubr.f32.gmra.mxu0 %v1201
  %v1331 = vpop.f32.mrf.mxu0
  %v1332 = vadd.f32 %v1056, %v1331
  %v1333 = vpop.f32.mrf.mxu0
  %1334 = vmatprep.mubr.f32.mxu0 0.0
  %1335 = vmatmul.mubr.f32.gmra.mxu0 %v1202
  %v1336 = vpop.f32.mrf.mxu0
  %v1337 = vadd.f32 %v1056, %v1336
  %v1338 = vpop.f32.mrf.mxu0
  %1339 = vdwg.mxu0
  %v1340 = vtanh.pop %v1302
  %v1341 = vtanh.pop %v1307
  %v1342 = vtanh.pop %v1312
  %v1343 = vtanh.pop %v1317
  %v1344 = vtanh.pop %v1322
  %v1345 = vtanh.pop %v1327
  %v1346 = vtanh.pop %v1332
  %v1347 = vtanh.pop %v1337
  %1348 = vst [vmem:[#allocation3] sm:$0xff] %v1340
  %1349 = vst [vmem:[#allocation3 + $0x40] sm:$0xff] %v1341
  %1350 = vst [vmem:[#allocation3 + $0x80] sm:$0xff] %v1342
  %1351 = vst [vmem:[#allocation3 + $0xc0] sm:$0xff] %v1343
  %1352 = vst [vmem:[#allocation3 + $0x100] sm:$0xff] %v1344
  %1353 = vst [vmem:[#allocation3 + $0x140] sm:$0xff] %v1345
  %1354 = vst [vmem:[#allocation3 + $0x180] sm:$0xff] %v1346
  %1355 = vst [vmem:[#allocation3 + $0x1c0] sm:$0xff] %v1347
  %v1356 = vld [vmem:[#allocation2 + $0x40] sm:$0xff]
  %v1357 = vld [vmem:[#allocation2 + $0x48] sm:$0xff]
  %v1358 = vld [vmem:[#allocation2 + $0x50] sm:$0xff]
  %v1359 = vld [vmem:[#allocation2 + $0x58] sm:$0xff]
  %v1360 = vld [vmem:[#allocation2 + $0x60] sm:$0xff]
  %v1361 = vld [vmem:[#allocation2 + $0x68] sm:$0xff]
  %v1362 = vld [vmem:[#allocation2 + $0x70] sm:$0xff]
  %v1363 = vld [vmem:[#allocation2 + $0x78] sm:$0xff]
  %v1364 = vld [vmem:[%s3] sm:$0xff]
  %v1365 = vld [vmem:[%s3 + $0x8] sm:$0xff]
  %v1366 = vld [vmem:[%s3 + $0x10] sm:$0xff]
  %v1367 = vld [vmem:[%s3 + $0x18] sm:$0xff]
  %v1368 = vld [vmem:[%s3 + $0x20] sm:$0xff]
  %v1369 = vld [vmem:[%s3 + $0x28] sm:$0xff]
  %v1370 = vld [vmem:[%s3 + $0x30] sm:$0xff]
  %v1371 = vld [vmem:[%s3 + $0x38] sm:$0xff]
  %v1372 = vld [vmem:[%s3 + $0x40] sm:$0xff]
  %v1373 = vld [vmem:[%s3 + $0x48] sm:$0xff]
  %v1374 = vld [vmem:[%s3 + $0x50] sm:$0xff]
  %v1375 = vld [vmem:[%s3 + $0x58] sm:$0xff]
  %v1376 = vld [vmem:[%s3 + $0x60] sm:$0xff]
  %v1377 = vld [vmem:[%s3 + $0x68] sm:$0xff]
  %v1378 = vld [vmem:[%s3 + $0x70] sm:$0xff]
  %v1379 = vld [vmem:[%s3 + $0x78] sm:$0xff]
  %1380 = vmatprep.subr.mxu0 0.0
  %1381 = vmatpush1.msra.mxu0 %v1379
  %1382 = vmatprep.subr.mxu0 0.0
  %1383 = vmatpush1.msra.mxu0 %v1378
  %1384 = vmatprep.subr.mxu0 0.0
  %1385 = vmatpush1.msra.mxu0 %v1377
  %1386 = vmatprep.subr.mxu0 0.0
  %1387 = vmatpush1.msra.mxu0 %v1376
  %1388 = vmatprep.subr.mxu0 0.0
  %1389 = vmatpush1.msra.mxu0 %v1375
  %1390 = vmatprep.subr.mxu0 0.0
  %1391 = vmatpush1.msra.mxu0 %v1374
  %1392 = vmatprep.subr.mxu0 0.0
  %1393 = vmatpush1.msra.mxu0 %v1373
  %1394 = vmatprep.subr.mxu0 0.0
  %1395 = vmatpush1.msra.mxu0 %v1372
  %1396 = vmatprep.subr.mxu0 0.0
  %1397 = vmatpush1.msra.mxu0 %v1371
  %1398 = vmatprep.subr.mxu0 0.0
  %1399 = vmatpush1.msra.mxu0 %v1370
  %1400 = vmatprep.subr.mxu0 0.0
  %1401 = vmatpush1.msra.mxu0 %v1369
  %1402 = vmatprep.subr.mxu0 0.0
  %1403 = vmatpush1.msra.mxu0 %v1368
  %1404 = vmatprep.subr.mxu0 0.0
  %1405 = vmatpush1.msra.mxu0 %v1367
  %1406 = vmatprep.subr.mxu0 0.0
  %1407 = vmatpush1.msra.mxu0 %v1366
  %1408 = vmatprep.subr.mxu0 0.0
  %1409 = vmatpush1.msra.mxu0 %v1365
  %1410 = vmatprep.subr.mxu0 0.0
  %1411 = vmatpush1.msra.mxu0 %v1364
  %1412 = vmatprep.subr.mxu0 0.0
  %1413 = vmatpush2.msra.mxu0 0.0
  %1414 = vmatprep.subr.mxu0 0.0
  %1415 = vmatpush2.msra.mxu0 0.0
  %1416 = vmatprep.subr.mxu0 0.0
  %1417 = vmatpush2.msra.mxu0 0.0
  %1418 = vmatprep.subr.mxu0 0.0
  %1419 = vmatpush2.msra.mxu0 0.0
  %1420 = vmatprep.subr.mxu0 0.0
  %1421 = vmatpush2.msra.mxu0 0.0
  %1422 = vmatprep.subr.mxu0 0.0
  %1423 = vmatpush2.msra.mxu0 0.0
  %1424 = vmatprep.subr.mxu0 0.0
  %1425 = vmatpush2.msra.mxu0 0.0
  %1426 = vmatprep.subr.mxu0 0.0
  %1427 = vmatpush2.msra.mxu0 0.0
  %1428 = vmatprep.subr.mxu0 0.0
  %1429 = vmatpush2.msra.mxu0 0.0
  %1430 = vmatprep.subr.mxu0 0.0
  %1431 = vmatpush2.msra.mxu0 0.0
  %1432 = vmatprep.subr.mxu0 0.0
  %1433 = vmatpush2.msra.mxu0 0.0
  %1434 = vmatprep.subr.mxu0 0.0
  %1435 = vmatpush2.msra.mxu0 0.0
  %1436 = vmatprep.subr.mxu0 0.0
  %1437 = vmatpush2.msra.mxu0 0.0
  %1438 = vmatprep.subr.mxu0 0.0
  %1439 = vmatpush2.msra.mxu0 0.0
  %1440 = vmatprep.subr.mxu0 0.0
  %1441 = vmatpush2.msra.mxu0 0.0
  %1442 = vmatprep.subr.mxu0 0.0
  %1443 = vmatpush2.msra.mxu0 0.0
  %1444 = vmatprep.mubr.f32.mxu0 0.0
  %1445 = vmatmul.mubr.f32.gmra.mxu0 %v1195
  %v1446 = vpop.f32.mrf.mxu0
  %v1447 = vadd.f32 0.0, %v1446
  %v1448 = vpop.f32.mrf.mxu0
  %1449 = vmatprep.mubr.f32.mxu0 0.0
  %1450 = vmatmul.mubr.f32.gmra.mxu0 %v1196
  %v1451 = vpop.f32.mrf.mxu0
  %v1452 = vadd.f32 0.0, %v1451
  %v1453 = vpop.f32.mrf.mxu0
  %1454 = vmatprep.mubr.f32.mxu0 0.0
  %1455 = vmatmul.mubr.f32.gmra.mxu0 %v1197
  %v1456 = vpop.f32.mrf.mxu0
  %v1457 = vadd.f32 0.0, %v1456
  %v1458 = vpop.f32.mrf.mxu0
  %1459 = vmatprep.mubr.f32.mxu0 0.0
  %1460 = vmatmul.mubr.f32.gmra.mxu0 %v1198
  %v1461 = vpop.f32.mrf.mxu0
  %v1462 = vadd.f32 0.0, %v1461
  %v1463 = vpop.f32.mrf.mxu0
  %1464 = vmatprep.mubr.f32.mxu0 0.0
  %1465 = vmatmul.mubr.f32.gmra.mxu0 %v1199
  %v1466 = vpop.f32.mrf.mxu0
  %v1467 = vadd.f32 0.0, %v1466
  %v1468 = vpop.f32.mrf.mxu0
  %1469 = vmatprep.mubr.f32.mxu0 0.0
  %1470 = vmatmul.mubr.f32.gmra.mxu0 %v1200
  %v1471 = vpop.f32.mrf.mxu0
  %v1472 = vadd.f32 0.0, %v1471
  %v1473 = vpop.f32.mrf.mxu0
  %1474 = vmatprep.mubr.f32.mxu0 0.0
  %1475 = vmatmul.mubr.f32.gmra.mxu0 %v1201
  %v1476 = vpop.f32.mrf.mxu0
  %v1477 = vadd.f32 0.0, %v1476
  %v1478 = vpop.f32.mrf.mxu0
  %1479 = vmatprep.mubr.f32.mxu0 0.0
  %1480 = vmatmul.mubr.f32.gmra.mxu0 %v1202
  %v1481 = vpop.f32.mrf.mxu0
  %v1482 = vadd.f32 0.0, %v1481
  %v1483 = vpop.f32.mrf.mxu0
  %1484 = vdwg.mxu0
  %v1485 = vadd.f32 %v1356, %v1447
  %v1486 = vadd.f32 %v1357, %v1452
  %v1487 = vadd.f32 %v1358, %v1457
  %v1488 = vadd.f32 %v1359, %v1462
  %v1489 = vadd.f32 %v1360, %v1467
  %v1490 = vadd.f32 %v1361, %v1472
  %v1491 = vadd.f32 %v1362, %v1477
  %v1492 = vadd.f32 %v1363, %v1482
  %v1493 = vtanh.pop %v1485
  %v1494 = vtanh.pop %v1486
  %v1495 = vtanh.pop %v1487
  %v1496 = vtanh.pop %v1488
  %v1497 = vtanh.pop %v1489
  %v1498 = vtanh.pop %v1490
  %v1499 = vtanh.pop %v1491
  %v1500 = vtanh.pop %v1492
  %v1501 = vld [vmem:[%s4] sm:$0xff]
  %v1502 = vld [vmem:[%s4 + $0x8] sm:$0xff]
  %v1503 = vld [vmem:[%s4 + $0x10] sm:$0xff]
  %v1504 = vld [vmem:[%s4 + $0x18] sm:$0xff]
  %v1505 = vld [vmem:[%s4 + $0x20] sm:$0xff]
  %v1506 = vld [vmem:[%s4 + $0x28] sm:$0xff]
  %v1507 = vld [vmem:[%s4 + $0x30] sm:$0xff]
  %v1508 = vld [vmem:[%s4 + $0x38] sm:$0xff]
  %v1509 = vld [vmem:[%s4 + $0x40] sm:$0xff]
  %v1510 = vld [vmem:[%s4 + $0x48] sm:$0xff]
  %v1511 = vld [vmem:[%s4 + $0x50] sm:$0xff]
  %v1512 = vld [vmem:[%s4 + $0x58] sm:$0xff]
  %v1513 = vld [vmem:[%s4 + $0x60] sm:$0xff]
  %v1514 = vld [vmem:[%s4 + $0x68] sm:$0xff]
  %v1515 = vld [vmem:[%s4 + $0x70] sm:$0xff]
  %v1516 = vld [vmem:[%s4 + $0x78] sm:$0xff]
  %v1517 = vld [vmem:[%s4 + $0x80] sm:$0xff]
  %v1518 = vld [vmem:[%s4 + $0x88] sm:$0xff]
  %v1519 = vld [vmem:[%s4 + $0x90] sm:$0xff]
  %v1520 = vld [vmem:[%s4 + $0x98] sm:$0xff]
  %v1521 = vld [vmem:[%s4 + $0xa0] sm:$0xff]
  %v1522 = vld [vmem:[%s4 + $0xa8] sm:$0xff]
  %v1523 = vld [vmem:[%s4 + $0xb0] sm:$0xff]
  %v1524 = vld [vmem:[%s4 + $0xb8] sm:$0xff]
  %v1525 = vld [vmem:[%s4 + $0xc0] sm:$0xff]
  %v1526 = vld [vmem:[%s4 + $0xc8] sm:$0xff]
  %v1527 = vld [vmem:[%s4 + $0xd0] sm:$0xff]
  %v1528 = vld [vmem:[%s4 + $0xd8] sm:$0xff]
  %v1529 = vld [vmem:[%s4 + $0xe0] sm:$0xff]
  %v1530 = vld [vmem:[%s4 + $0xe8] sm:$0xff]
  %v1531 = vld [vmem:[%s4 + $0xf0] sm:$0xff]
  %v1532 = vld [vmem:[%s4 + $0xf8] sm:$0xff]
  %1533 = vmatprep.subr.mxu0 0.0
  %1534 = vmatpush1.msra.mxu0 %v1516
  %1535 = vmatprep.subr.mxu0 0.0
  %1536 = vmatpush1.msra.mxu0 %v1515
  %1537 = vmatprep.subr.mxu0 0.0
  %1538 = vmatpush1.msra.mxu0 %v1514
  %1539 = vmatprep.subr.mxu0 0.0
  %1540 = vmatpush1.msra.mxu0 %v1513
  %1541 = vmatprep.subr.mxu0 0.0
  %1542 = vmatpush1.msra.mxu0 %v1512
  %1543 = vmatprep.subr.mxu0 0.0
  %1544 = vmatpush1.msra.mxu0 %v1511
  %1545 = vmatprep.subr.mxu0 0.0
  %1546 = vmatpush1.msra.mxu0 %v1510
  %1547 = vmatprep.subr.mxu0 0.0
  %1548 = vmatpush1.msra.mxu0 %v1509
  %1549 = vmatprep.subr.mxu0 0.0
  %1550 = vmatpush1.msra.mxu0 %v1508
  %1551 = vmatprep.subr.mxu0 0.0
  %1552 = vmatpush1.msra.mxu0 %v1507
  %1553 = vmatprep.subr.mxu0 0.0
  %1554 = vmatpush1.msra.mxu0 %v1506
  %1555 = vmatprep.subr.mxu0 0.0
  %1556 = vmatpush1.msra.mxu0 %v1505
  %1557 = vmatprep.subr.mxu0 0.0
  %1558 = vmatpush1.msra.mxu0 %v1504
  %1559 = vmatprep.subr.mxu0 0.0
  %1560 = vmatpush1.msra.mxu0 %v1503
  %1561 = vmatprep.subr.mxu0 0.0
  %1562 = vmatpush1.msra.mxu0 %v1502
  %1563 = vmatprep.subr.mxu0 0.0
  %1564 = vmatpush1.msra.mxu0 %v1501
  %1565 = vmatprep.subr.mxu0 0.0
  %1566 = vmatpush2.msra.mxu0 %v1532
  %1567 = vmatprep.subr.mxu0 0.0
  %1568 = vmatpush2.msra.mxu0 %v1531
  %1569 = vmatprep.subr.mxu0 0.0
  %1570 = vmatpush2.msra.mxu0 %v1530
  %1571 = vmatprep.subr.mxu0 0.0
  %1572 = vmatpush2.msra.mxu0 %v1529
  %1573 = vmatprep.subr.mxu0 0.0
  %1574 = vmatpush2.msra.mxu0 %v1528
  %1575 = vmatprep.subr.mxu0 0.0
  %1576 = vmatpush2.msra.mxu0 %v1527
  %1577 = vmatprep.subr.mxu0 0.0
  %1578 = vmatpush2.msra.mxu0 %v1526
  %1579 = vmatprep.subr.mxu0 0.0
  %1580 = vmatpush2.msra.mxu0 %v1525
  %1581 = vmatprep.subr.mxu0 0.0
  %1582 = vmatpush2.msra.mxu0 %v1524
  %1583 = vmatprep.subr.mxu0 0.0
  %1584 = vmatpush2.msra.mxu0 %v1523
  %1585 = vmatprep.subr.mxu0 0.0
  %1586 = vmatpush2.msra.mxu0 %v1522
  %1587 = vmatprep.subr.mxu0 0.0
  %1588 = vmatpush2.msra.mxu0 %v1521
  %1589 = vmatprep.subr.mxu0 0.0
  %1590 = vmatpush2.msra.mxu0 %v1520
  %1591 = vmatprep.subr.mxu0 0.0
  %1592 = vmatpush2.msra.mxu0 %v1519
  %1593 = vmatprep.subr.mxu0 0.0
  %1594 = vmatpush2.msra.mxu0 %v1518
  %1595 = vmatprep.subr.mxu0 0.0
  %1596 = vmatpush2.msra.mxu0 %v1517
  %1597 = vmatprep.mubr.f32.mxu0 %v1340
  %1598 = vmatmul.mubr.f32.gmra.mxu0 %v1493
  %v1599 = vpop.f32.mrf.mxu0
  %v1600 = vadd.f32 %v1056, %v1599
  %v1601 = vpop.f32.mrf.mxu0
  %1602 = vmatprep.mubr.f32.mxu0 %v1341
  %1603 = vmatmul.mubr.f32.gmra.mxu0 %v1494
  %v1604 = vpop.f32.mrf.mxu0
  %v1605 = vadd.f32 %v1056, %v1604
  %v1606 = vpop.f32.mrf.mxu0
  %1607 = vmatprep.mubr.f32.mxu0 %v1342
  %1608 = vmatmul.mubr.f32.gmra.mxu0 %v1495
  %v1609 = vpop.f32.mrf.mxu0
  %v1610 = vadd.f32 %v1056, %v1609
  %v1611 = vpop.f32.mrf.mxu0
  %1612 = vmatprep.mubr.f32.mxu0 %v1343
  %1613 = vmatmul.mubr.f32.gmra.mxu0 %v1496
  %v1614 = vpop.f32.mrf.mxu0
  %v1615 = vadd.f32 %v1056, %v1614
  %v1616 = vpop.f32.mrf.mxu0
  %1617 = vmatprep.mubr.f32.mxu0 %v1344
  %1618 = vmatmul.mubr.f32.gmra.mxu0 %v1497
  %v1619 = vpop.f32.mrf.mxu0
  %v1620 = vadd.f32 %v1056, %v1619
  %v1621 = vpop.f32.mrf.mxu0
  %1622 = vmatprep.mubr.f32.mxu0 %v1345
  %1623 = vmatmul.mubr.f32.gmra.mxu0 %v1498
  %v1624 = vpop.f32.mrf.mxu0
  %v1625 = vadd.f32 %v1056, %v1624
  %v1626 = vpop.f32.mrf.mxu0
  %1627 = vmatprep.mubr.f32.mxu0 %v1346
  %1628 = vmatmul.mubr.f32.gmra.mxu0 %v1499
  %v1629 = vpop.f32.mrf.mxu0
  %v1630 = vadd.f32 %v1056, %v1629
  %v1631 = vpop.f32.mrf.mxu0
  %1632 = vmatprep.mubr.f32.mxu0 %v1347
  %1633 = vmatmul.mubr.f32.gmra.mxu0 %v1500
  %v1634 = vpop.f32.mrf.mxu0
  %v1635 = vadd.f32 %v1056, %v1634
  %v1636 = vpop.f32.mrf.mxu0
  %1637 = vdwg.mxu0
  %v1638 = vtanh.pop %v1600
  %v1639 = vtanh.pop %v1605
  %v1640 = vtanh.pop %v1610
  %v1641 = vtanh.pop %v1615
  %v1642 = vtanh.pop %v1620
  %v1643 = vtanh.pop %v1625
  %v1644 = vtanh.pop %v1630
  %v1645 = vtanh.pop %v1635
  %1646 = vst [vmem:[#allocation3 + $0x8] sm:$0xff] %v1638
  %1647 = vst [vmem:[#allocation3 + $0x48] sm:$0xff] %v1639
  %1648 = vst [vmem:[#allocation3 + $0x88] sm:$0xff] %v1640
  %1649 = vst [vmem:[#allocation3 + $0xc8] sm:$0xff] %v1641
  %1650 = vst [vmem:[#allocation3 + $0x108] sm:$0xff] %v1642
  %1651 = vst [vmem:[#allocation3 + $0x148] sm:$0xff] %v1643
  %1652 = vst [vmem:[#allocation3 + $0x188] sm:$0xff] %v1644
  %1653 = vst [vmem:[#allocation3 + $0x1c8] sm:$0xff] %v1645
  %v1654 = vld [vmem:[#allocation2 + $0x80] sm:$0xff]
  %v1655 = vld [vmem:[#allocation2 + $0x88] sm:$0xff]
  %v1656 = vld [vmem:[#allocation2 + $0x90] sm:$0xff]
  %v1657 = vld [vmem:[#allocation2 + $0x98] sm:$0xff]
  %v1658 = vld [vmem:[#allocation2 + $0xa0] sm:$0xff]
  %v1659 = vld [vmem:[#allocation2 + $0xa8] sm:$0xff]
  %v1660 = vld [vmem:[#allocation2 + $0xb0] sm:$0xff]
  %v1661 = vld [vmem:[#allocation2 + $0xb8] sm:$0xff]
  %v1662 = vld [vmem:[%s3] sm:$0xff]
  %v1663 = vld [vmem:[%s3 + $0x8] sm:$0xff]
  %v1664 = vld [vmem:[%s3 + $0x10] sm:$0xff]
  %v1665 = vld [vmem:[%s3 + $0x18] sm:$0xff]
  %v1666 = vld [vmem:[%s3 + $0x20] sm:$0xff]
  %v1667 = vld [vmem:[%s3 + $0x28] sm:$0xff]
  %v1668 = vld [vmem:[%s3 + $0x30] sm:$0xff]
  %v1669 = vld [vmem:[%s3 + $0x38] sm:$0xff]
  %v1670 = vld [vmem:[%s3 + $0x40] sm:$0xff]
  %v1671 = vld [vmem:[%s3 + $0x48] sm:$0xff]
  %v1672 = vld [vmem:[%s3 + $0x50] sm:$0xff]
  %v1673 = vld [vmem:[%s3 + $0x58] sm:$0xff]
  %v1674 = vld [vmem:[%s3 + $0x60] sm:$0xff]
  %v1675 = vld [vmem:[%s3 + $0x68] sm:$0xff]
  %v1676 = vld [vmem:[%s3 + $0x70] sm:$0xff]
  %v1677 = vld [vmem:[%s3 + $0x78] sm:$0xff]
  %1678 = vmatprep.subr.mxu0 0.0
  %1679 = vmatpush1.msra.mxu0 %v1677
  %1680 = vmatprep.subr.mxu0 0.0
  %1681 = vmatpush1.msra.mxu0 %v1676
  %1682 = vmatprep.subr.mxu0 0.0
  %1683 = vmatpush1.msra.mxu0 %v1675
  %1684 = vmatprep.subr.mxu0 0.0
  %1685 = vmatpush1.msra.mxu0 %v1674
  %1686 = vmatprep.subr.mxu0 0.0
  %1687 = vmatpush1.msra.mxu0 %v1673
  %1688 = vmatprep.subr.mxu0 0.0
  %1689 = vmatpush1.msra.mxu0 %v1672
  %1690 = vmatprep.subr.mxu0 0.0
  %1691 = vmatpush1.msra.mxu0 %v1671
  %1692 = vmatprep.subr.mxu0 0.0
  %1693 = vmatpush1.msra.mxu0 %v1670
  %1694 = vmatprep.subr.mxu0 0.0
  %1695 = vmatpush1.msra.mxu0 %v1669
  %1696 = vmatprep.subr.mxu0 0.0
  %1697 = vmatpush1.msra.mxu0 %v1668
  %1698 = vmatprep.subr.mxu0 0.0
  %1699 = vmatpush1.msra.mxu0 %v1667
  %1700 = vmatprep.subr.mxu0 0.0
  %1701 = vmatpush1.msra.mxu0 %v1666
  %1702 = vmatprep.subr.mxu0 0.0
  %1703 = vmatpush1.msra.mxu0 %v1665
  %1704 = vmatprep.subr.mxu0 0.0
  %1705 = vmatpush1.msra.mxu0 %v1664
  %1706 = vmatprep.subr.mxu0 0.0
  %1707 = vmatpush1.msra.mxu0 %v1663
  %1708 = vmatprep.subr.mxu0 0.0
  %1709 = vmatpush1.msra.mxu0 %v1662
  %1710 = vmatprep.subr.mxu0 0.0
  %1711 = vmatpush2.msra.mxu0 0.0
  %1712 = vmatprep.subr.mxu0 0.0
  %1713 = vmatpush2.msra.mxu0 0.0
  %1714 = vmatprep.subr.mxu0 0.0
  %1715 = vmatpush2.msra.mxu0 0.0
  %1716 = vmatprep.subr.mxu0 0.0
  %1717 = vmatpush2.msra.mxu0 0.0
  %1718 = vmatprep.subr.mxu0 0.0
  %1719 = vmatpush2.msra.mxu0 0.0
  %1720 = vmatprep.subr.mxu0 0.0
  %1721 = vmatpush2.msra.mxu0 0.0
  %1722 = vmatprep.subr.mxu0 0.0
  %1723 = vmatpush2.msra.mxu0 0.0
  %1724 = vmatprep.subr.mxu0 0.0
  %1725 = vmatpush2.msra.mxu0 0.0
  %1726 = vmatprep.subr.mxu0 0.0
  %1727 = vmatpush2.msra.mxu0 0.0
  %1728 = vmatprep.subr.mxu0 0.0
  %1729 = vmatpush2.msra.mxu0 0.0
  %1730 = vmatprep.subr.mxu0 0.0
  %1731 = vmatpush2.msra.mxu0 0.0
  %1732 = vmatprep.subr.mxu0 0.0
  %1733 = vmatpush2.msra.mxu0 0.0
  %1734 = vmatprep.subr.mxu0 0.0
  %1735 = vmatpush2.msra.mxu0 0.0
  %1736 = vmatprep.subr.mxu0 0.0
  %1737 = vmatpush2.msra.mxu0 0.0
  %1738 = vmatprep.subr.mxu0 0.0
  %1739 = vmatpush2.msra.mxu0 0.0
  %1740 = vmatprep.subr.mxu0 0.0
  %1741 = vmatpush2.msra.mxu0 0.0
  %1742 = vmatprep.mubr.f32.mxu0 0.0
  %1743 = vmatmul.mubr.f32.gmra.mxu0 %v1493
  %v1744 = vpop.f32.mrf.mxu0
  %v1745 = vadd.f32 0.0, %v1744
  %v1746 = vpop.f32.mrf.mxu0
  %1747 = vmatprep.mubr.f32.mxu0 0.0
  %1748 = vmatmul.mubr.f32.gmra.mxu0 %v1494
  %v1749 = vpop.f32.mrf.mxu0
  %v1750 = vadd.f32 0.0, %v1749
  %v1751 = vpop.f32.mrf.mxu0
  %1752 = vmatprep.mubr.f32.mxu0 0.0
  %1753 = vmatmul.mubr.f32.gmra.mxu0 %v1495
  %v1754 = vpop.f32.mrf.mxu0
  %v1755 = vadd.f32 0.0, %v1754
  %v1756 = vpop.f32.mrf.mxu0
  %1757 = vmatprep.mubr.f32.mxu0 0.0
  %1758 = vmatmul.mubr.f32.gmra.mxu0 %v1496
  %v1759 = vpop.f32.mrf.mxu0
  %v1760 = vadd.f32 0.0, %v1759
  %v1761 = vpop.f32.mrf.mxu0
  %1762 = vmatprep.mubr.f32.mxu0 0.0
  %1763 = vmatmul.mubr.f32.gmra.mxu0 %v1497
  %v1764 = vpop.f32.mrf.mxu0
  %v1765 = vadd.f32 0.0, %v1764
  %v1766 = vpop.f32.mrf.mxu0
  %1767 = vmatprep.mubr.f32.mxu0 0.0
  %1768 = vmatmul.mubr.f32.gmra.mxu0 %v1498
  %v1769 = vpop.f32.mrf.mxu0
  %v1770 = vadd.f32 0.0, %v1769
  %v1771 = vpop.f32.mrf.mxu0
  %1772 = vmatprep.mubr.f32.mxu0 0.0
  %1773 = vmatmul.mubr.f32.gmra.mxu0 %v1499
  %v1774 = vpop.f32.mrf.mxu0
  %v1775 = vadd.f32 0.0, %v1774
  %v1776 = vpop.f32.mrf.mxu0
  %1777 = vmatprep.mubr.f32.mxu0 0.0
  %1778 = vmatmul.mubr.f32.gmra.mxu0 %v1500
  %v1779 = vpop.f32.mrf.mxu0
  %v1780 = vadd.f32 0.0, %v1779
  %v1781 = vpop.f32.mrf.mxu0
  %1782 = vdwg.mxu0
  %v1783 = vadd.f32 %v1654, %v1745
  %v1784 = vadd.f32 %v1655, %v1750
  %v1785 = vadd.f32 %v1656, %v1755
  %v1786 = vadd.f32 %v1657, %v1760
  %v1787 = vadd.f32 %v1658, %v1765
  %v1788 = vadd.f32 %v1659, %v1770
  %v1789 = vadd.f32 %v1660, %v1775
  %v1790 = vadd.f32 %v1661, %v1780
  %v1791 = vtanh.pop %v1783
  %v1792 = vtanh.pop %v1784
  %v1793 = vtanh.pop %v1785
  %v1794 = vtanh.pop %v1786
  %v1795 = vtanh.pop %v1787
  %v1796 = vtanh.pop %v1788
  %v1797 = vtanh.pop %v1789
  %v1798 = vtanh.pop %v1790
  %v1799 = vld [vmem:[%s4] sm:$0xff]
  %v1800 = vld [vmem:[%s4 + $0x8] sm:$0xff]
  %v1801 = vld [vmem:[%s4 + $0x10] sm:$0xff]
  %v1802 = vld [vmem:[%s4 + $0x18] sm:$0xff]
  %v1803 = vld [vmem:[%s4 + $0x20] sm:$0xff]
  %v1804 = vld [vmem:[%s4 + $0x28] sm:$0xff]
  %v1805 = vld [vmem:[%s4 + $0x30] sm:$0xff]
  %v1806 = vld [vmem:[%s4 + $0x38] sm:$0xff]
  %v1807 = vld [vmem:[%s4 + $0x40] sm:$0xff]
  %v1808 = vld [vmem:[%s4 + $0x48] sm:$0xff]
  %v1809 = vld [vmem:[%s4 + $0x50] sm:$0xff]
  %v1810 = vld [vmem:[%s4 + $0x58] sm:$0xff]
  %v1811 = vld [vmem:[%s4 + $0x60] sm:$0xff]
  %v1812 = vld [vmem:[%s4 + $0x68] sm:$0xff]
  %v1813 = vld [vmem:[%s4 + $0x70] sm:$0xff]
  %v1814 = vld [vmem:[%s4 + $0x78] sm:$0xff]
  %v1815 = vld [vmem:[%s4 + $0x80] sm:$0xff]
  %v1816 = vld [vmem:[%s4 + $0x88] sm:$0xff]
  %v1817 = vld [vmem:[%s4 + $0x90] sm:$0xff]
  %v1818 = vld [vmem:[%s4 + $0x98] sm:$0xff]
  %v1819 = vld [vmem:[%s4 + $0xa0] sm:$0xff]
  %v1820 = vld [vmem:[%s4 + $0xa8] sm:$0xff]
  %v1821 = vld [vmem:[%s4 + $0xb0] sm:$0xff]
  %v1822 = vld [vmem:[%s4 + $0xb8] sm:$0xff]
  %v1823 = vld [vmem:[%s4 + $0xc0] sm:$0xff]
  %v1824 = vld [vmem:[%s4 + $0xc8] sm:$0xff]
  %v1825 = vld [vmem:[%s4 + $0xd0] sm:$0xff]
  %v1826 = vld [vmem:[%s4 + $0xd8] sm:$0xff]
  %v1827 = vld [vmem:[%s4 + $0xe0] sm:$0xff]
  %v1828 = vld [vmem:[%s4 + $0xe8] sm:$0xff]
  %v1829 = vld [vmem:[%s4 + $0xf0] sm:$0xff]
  %v1830 = vld [vmem:[%s4 + $0xf8] sm:$0xff]
  %1831 = vmatprep.subr.mxu0 0.0
  %1832 = vmatpush1.msra.mxu0 %v1814
  %1833 = vmatprep.subr.mxu0 0.0
  %1834 = vmatpush1.msra.mxu0 %v1813
  %1835 = vmatprep.subr.mxu0 0.0
  %1836 = vmatpush1.msra.mxu0 %v1812
  %1837 = vmatprep.subr.mxu0 0.0
  %1838 = vmatpush1.msra.mxu0 %v1811
  %1839 = vmatprep.subr.mxu0 0.0
  %1840 = vmatpush1.msra.mxu0 %v1810
  %1841 = vmatprep.subr.mxu0 0.0
  %1842 = vmatpush1.msra.mxu0 %v1809
  %1843 = vmatprep.subr.mxu0 0.0
  %1844 = vmatpush1.msra.mxu0 %v1808
  %1845 = vmatprep.subr.mxu0 0.0
  %1846 = vmatpush1.msra.mxu0 %v1807
  %1847 = vmatprep.subr.mxu0 0.0
  %1848 = vmatpush1.msra.mxu0 %v1806
  %1849 = vmatprep.subr.mxu0 0.0
  %1850 = vmatpush1.msra.mxu0 %v1805
  %1851 = vmatprep.subr.mxu0 0.0
  %1852 = vmatpush1.msra.mxu0 %v1804
  %1853 = vmatprep.subr.mxu0 0.0
  %1854 = vmatpush1.msra.mxu0 %v1803
  %1855 = vmatprep.subr.mxu0 0.0
  %1856 = vmatpush1.msra.mxu0 %v1802
  %1857 = vmatprep.subr.mxu0 0.0
  %1858 = vmatpush1.msra.mxu0 %v1801
  %1859 = vmatprep.subr.mxu0 0.0
  %1860 = vmatpush1.msra.mxu0 %v1800
  %1861 = vmatprep.subr.mxu0 0.0
  %1862 = vmatpush1.msra.mxu0 %v1799
  %1863 = vmatprep.subr.mxu0 0.0
  %1864 = vmatpush2.msra.mxu0 %v1830
  %1865 = vmatprep.subr.mxu0 0.0
  %1866 = vmatpush2.msra.mxu0 %v1829
  %1867 = vmatprep.subr.mxu0 0.0
  %1868 = vmatpush2.msra.mxu0 %v1828
  %1869 = vmatprep.subr.mxu0 0.0
  %1870 = vmatpush2.msra.mxu0 %v1827
  %1871 = vmatprep.subr.mxu0 0.0
  %1872 = vmatpush2.msra.mxu0 %v1826
  %1873 = vmatprep.subr.mxu0 0.0
  %1874 = vmatpush2.msra.mxu0 %v1825
  %1875 = vmatprep.subr.mxu0 0.0
  %1876 = vmatpush2.msra.mxu0 %v1824
  %1877 = vmatprep.subr.mxu0 0.0
  %1878 = vmatpush2.msra.mxu0 %v1823
  %1879 = vmatprep.subr.mxu0 0.0
  %1880 = vmatpush2.msra.mxu0 %v1822
  %1881 = vmatprep.subr.mxu0 0.0
  %1882 = vmatpush2.msra.mxu0 %v1821
  %1883 = vmatprep.subr.mxu0 0.0
  %1884 = vmatpush2.msra.mxu0 %v1820
  %1885 = vmatprep.subr.mxu0 0.0
  %1886 = vmatpush2.msra.mxu0 %v1819
  %1887 = vmatprep.subr.mxu0 0.0
  %1888 = vmatpush2.msra.mxu0 %v1818
  %1889 = vmatprep.subr.mxu0 0.0
  %1890 = vmatpush2.msra.mxu0 %v1817
  %1891 = vmatprep.subr.mxu0 0.0
  %1892 = vmatpush2.msra.mxu0 %v1816
  %1893 = vmatprep.subr.mxu0 0.0
  %1894 = vmatpush2.msra.mxu0 %v1815
  %1895 = vmatprep.mubr.f32.mxu0 %v1638
  %1896 = vmatmul.mubr.f32.gmra.mxu0 %v1791
  %v1897 = vpop.f32.mrf.mxu0
  %v1898 = vadd.f32 %v1056, %v1897
  %v1899 = vpop.f32.mrf.mxu0
  %1900 = vmatprep.mubr.f32.mxu0 %v1639
  %1901 = vmatmul.mubr.f32.gmra.mxu0 %v1792
  %v1902 = vpop.f32.mrf.mxu0
  %v1903 = vadd.f32 %v1056, %v1902
  %v1904 = vpop.f32.mrf.mxu0
  %1905 = vmatprep.mubr.f32.mxu0 %v1640
  %1906 = vmatmul.mubr.f32.gmra.mxu0 %v1793
  %v1907 = vpop.f32.mrf.mxu0
  %v1908 = vadd.f32 %v1056, %v1907
  %v1909 = vpop.f32.mrf.mxu0
  %1910 = vmatprep.mubr.f32.mxu0 %v1641
  %1911 = vmatmul.mubr.f32.gmra.mxu0 %v1794
  %v1912 = vpop.f32.mrf.mxu0
  %v1913 = vadd.f32 %v1056, %v1912
  %v1914 = vpop.f32.mrf.mxu0
  %1915 = vmatprep.mubr.f32.mxu0 %v1642
  %1916 = vmatmul.mubr.f32.gmra.mxu0 %v1795
  %v1917 = vpop.f32.mrf.mxu0
  %v1918 = vadd.f32 %v1056, %v1917
  %v1919 = vpop.f32.mrf.mxu0
  %1920 = vmatprep.mubr.f32.mxu0 %v1643
  %1921 = vmatmul.mubr.f32.gmra.mxu0 %v1796
  %v1922 = vpop.f32.mrf.mxu0
  %v1923 = vadd.f32 %v1056, %v1922
  %v1924 = vpop.f32.mrf.mxu0
  %1925 = vmatprep.mubr.f32.mxu0 %v1644
  %1926 = vmatmul.mubr.f32.gmra.mxu0 %v1797
  %v1927 = vpop.f32.mrf.mxu0
  %v1928 = vadd.f32 %v1056, %v1927
  %v1929 = vpop.f32.mrf.mxu0
  %1930 = vmatprep.mubr.f32.mxu0 %v1645
  %1931 = vmatmul.mubr.f32.gmra.mxu0 %v1798
  %v1932 = vpop.f32.mrf.mxu0
  %v1933 = vadd.f32 %v1056, %v1932
  %v1934 = vpop.f32.mrf.mxu0
  %1935 = vdwg.mxu0
  %v1936 = vtanh.pop %v1898
  %v1937 = vtanh.pop %v1903
  %v1938 = vtanh.pop %v1908
  %v1939 = vtanh.pop %v1913
  %v1940 = vtanh.pop %v1918
  %v1941 = vtanh.pop %v1923
  %v1942 = vtanh.pop %v1928
  %v1943 = vtanh.pop %v1933
  %1944 = vst [vmem:[#allocation3 + $0x10] sm:$0xff] %v1936
  %1945 = vst [vmem:[#allocation3 + $0x50] sm:$0xff] %v1937
  %1946 = vst [vmem:[#allocation3 + $0x90] sm:$0xff] %v1938
  %1947 = vst [vmem:[#allocation3 + $0xd0] sm:$0xff] %v1939
  %1948 = vst [vmem:[#allocation3 + $0x110] sm:$0xff] %v1940
  %1949 = vst [vmem:[#allocation3 + $0x150] sm:$0xff] %v1941
  %1950 = vst [vmem:[#allocation3 + $0x190] sm:$0xff] %v1942
  %1951 = vst [vmem:[#allocation3 + $0x1d0] sm:$0xff] %v1943
  %v1952 = vld [vmem:[#allocation2 + $0xc0] sm:$0xff]
  %v1953 = vld [vmem:[#allocation2 + $0xc8] sm:$0xff]
  %v1954 = vld [vmem:[#allocation2 + $0xd0] sm:$0xff]
  %v1955 = vld [vmem:[#allocation2 + $0xd8] sm:$0xff]
  %v1956 = vld [vmem:[#allocation2 + $0xe0] sm:$0xff]
  %v1957 = vld [vmem:[#allocation2 + $0xe8] sm:$0xff]
  %v1958 = vld [vmem:[#allocation2 + $0xf0] sm:$0xff]
  %v1959 = vld [vmem:[#allocation2 + $0xf8] sm:$0xff]
  %v1960 = vld [vmem:[%s3] sm:$0xff]
  %v1961 = vld [vmem:[%s3 + $0x8] sm:$0xff]
  %v1962 = vld [vmem:[%s3 + $0x10] sm:$0xff]
  %v1963 = vld [vmem:[%s3 + $0x18] sm:$0xff]
  %v1964 = vld [vmem:[%s3 + $0x20] sm:$0xff]
  %v1965 = vld [vmem:[%s3 + $0x28] sm:$0xff]
  %v1966 = vld [vmem:[%s3 + $0x30] sm:$0xff]
  %v1967 = vld [vmem:[%s3 + $0x38] sm:$0xff]
  %v1968 = vld [vmem:[%s3 + $0x40] sm:$0xff]
  %v1969 = vld [vmem:[%s3 + $0x48] sm:$0xff]
  %v1970 = vld [vmem:[%s3 + $0x50] sm:$0xff]
  %v1971 = vld [vmem:[%s3 + $0x58] sm:$0xff]
  %v1972 = vld [vmem:[%s3 + $0x60] sm:$0xff]
  %v1973 = vld [vmem:[%s3 + $0x68] sm:$0xff]
  %v1974 = vld [vmem:[%s3 + $0x70] sm:$0xff]
  %v1975 = vld [vmem:[%s3 + $0x78] sm:$0xff]
  %1976 = vmatprep.subr.mxu0 0.0
  %1977 = vmatpush1.msra.mxu0 %v1975
  %1978 = vmatprep.subr.mxu0 0.0
  %1979 = vmatpush1.msra.mxu0 %v1974
  %1980 = vmatprep.subr.mxu0 0.0
  %1981 = vmatpush1.msra.mxu0 %v1973
  %1982 = vmatprep.subr.mxu0 0.0
  %1983 = vmatpush1.msra.mxu0 %v1972
  %1984 = vmatprep.subr.mxu0 0.0
  %1985 = vmatpush1.msra.mxu0 %v1971
  %1986 = vmatprep.subr.mxu0 0.0
  %1987 = vmatpush1.msra.mxu0 %v1970
  %1988 = vmatprep.subr.mxu0 0.0
  %1989 = vmatpush1.msra.mxu0 %v1969
  %1990 = vmatprep.subr.mxu0 0.0
  %1991 = vmatpush1.msra.mxu0 %v1968
  %1992 = vmatprep.subr.mxu0 0.0
  %1993 = vmatpush1.msra.mxu0 %v1967
  %1994 = vmatprep.subr.mxu0 0.0
  %1995 = vmatpush1.msra.mxu0 %v1966
  %1996 = vmatprep.subr.mxu0 0.0
  %1997 = vmatpush1.msra.mxu0 %v1965
  %1998 = vmatprep.subr.mxu0 0.0
  %1999 = vmatpush1.msra.mxu0 %v1964
  %2000 = vmatprep.subr.mxu0 0.0
  %2001 = vmatpush1.msra.mxu0 %v1963
  %2002 = vmatprep.subr.mxu0 0.0
  %2003 = vmatpush1.msra.mxu0 %v1962
  %2004 = vmatprep.subr.mxu0 0.0
  %2005 = vmatpush1.msra.mxu0 %v1961
  %2006 = vmatprep.subr.mxu0 0.0
  %2007 = vmatpush1.msra.mxu0 %v1960
  %2008 = vmatprep.subr.mxu0 0.0
  %2009 = vmatpush2.msra.mxu0 0.0
  %2010 = vmatprep.subr.mxu0 0.0
  %2011 = vmatpush2.msra.mxu0 0.0
  %2012 = vmatprep.subr.mxu0 0.0
  %2013 = vmatpush2.msra.mxu0 0.0
  %2014 = vmatprep.subr.mxu0 0.0
  %2015 = vmatpush2.msra.mxu0 0.0
  %2016 = vmatprep.subr.mxu0 0.0
  %2017 = vmatpush2.msra.mxu0 0.0
  %2018 = vmatprep.subr.mxu0 0.0
  %2019 = vmatpush2.msra.mxu0 0.0
  %2020 = vmatprep.subr.mxu0 0.0
  %2021 = vmatpush2.msra.mxu0 0.0
  %2022 = vmatprep.subr.mxu0 0.0
  %2023 = vmatpush2.msra.mxu0 0.0
  %2024 = vmatprep.subr.mxu0 0.0
  %2025 = vmatpush2.msra.mxu0 0.0
  %2026 = vmatprep.subr.mxu0 0.0
  %2027 = vmatpush2.msra.mxu0 0.0
  %2028 = vmatprep.subr.mxu0 0.0
  %2029 = vmatpush2.msra.mxu0 0.0
  %2030 = vmatprep.subr.mxu0 0.0
  %2031 = vmatpush2.msra.mxu0 0.0
  %2032 = vmatprep.subr.mxu0 0.0
  %2033 = vmatpush2.msra.mxu0 0.0
  %2034 = vmatprep.subr.mxu0 0.0
  %2035 = vmatpush2.msra.mxu0 0.0
  %2036 = vmatprep.subr.mxu0 0.0
  %2037 = vmatpush2.msra.mxu0 0.0
  %2038 = vmatprep.subr.mxu0 0.0
  %2039 = vmatpush2.msra.mxu0 0.0
  %2040 = vmatprep.mubr.f32.mxu0 0.0
  %2041 = vmatmul.mubr.f32.gmra.mxu0 %v1791
  %v2042 = vpop.f32.mrf.mxu0
  %v2043 = vadd.f32 0.0, %v2042
  %v2044 = vpop.f32.mrf.mxu0
  %2045 = vmatprep.mubr.f32.mxu0 0.0
  %2046 = vmatmul.mubr.f32.gmra.mxu0 %v1792
  %v2047 = vpop.f32.mrf.mxu0
  %v2048 = vadd.f32 0.0, %v2047
  %v2049 = vpop.f32.mrf.mxu0
  %2050 = vmatprep.mubr.f32.mxu0 0.0
  %2051 = vmatmul.mubr.f32.gmra.mxu0 %v1793
  %v2052 = vpop.f32.mrf.mxu0
  %v2053 = vadd.f32 0.0, %v2052
  %v2054 = vpop.f32.mrf.mxu0
  %2055 = vmatprep.mubr.f32.mxu0 0.0
  %2056 = vmatmul.mubr.f32.gmra.mxu0 %v1794
  %v2057 = vpop.f32.mrf.mxu0
  %v2058 = vadd.f32 0.0, %v2057
  %v2059 = vpop.f32.mrf.mxu0
  %2060 = vmatprep.mubr.f32.mxu0 0.0
  %2061 = vmatmul.mubr.f32.gmra.mxu0 %v1795
  %v2062 = vpop.f32.mrf.mxu0
  %v2063 = vadd.f32 0.0, %v2062
  %v2064 = vpop.f32.mrf.mxu0
  %2065 = vmatprep.mubr.f32.mxu0 0.0
  %2066 = vmatmul.mubr.f32.gmra.mxu0 %v1796
  %v2067 = vpop.f32.mrf.mxu0
  %v2068 = vadd.f32 0.0, %v2067
  %v2069 = vpop.f32.mrf.mxu0
  %2070 = vmatprep.mubr.f32.mxu0 0.0
  %2071 = vmatmul.mubr.f32.gmra.mxu0 %v1797
  %v2072 = vpop.f32.mrf.mxu0
  %v2073 = vadd.f32 0.0, %v2072
  %v2074 = vpop.f32.mrf.mxu0
  %2075 = vmatprep.mubr.f32.mxu0 0.0
  %2076 = vmatmul.mubr.f32.gmra.mxu0 %v1798
  %v2077 = vpop.f32.mrf.mxu0
  %v2078 = vadd.f32 0.0, %v2077
  %v2079 = vpop.f32.mrf.mxu0
  %2080 = vdwg.mxu0
  %v2081 = vadd.f32 %v1952, %v2043
  %v2082 = vadd.f32 %v1953, %v2048
  %v2083 = vadd.f32 %v1954, %v2053
  %v2084 = vadd.f32 %v1955, %v2058
  %v2085 = vadd.f32 %v1956, %v2063
  %v2086 = vadd.f32 %v1957, %v2068
  %v2087 = vadd.f32 %v1958, %v2073
  %v2088 = vadd.f32 %v1959, %v2078
  %v2089 = vtanh.pop %v2081
  %v2090 = vtanh.pop %v2082
  %v2091 = vtanh.pop %v2083
  %v2092 = vtanh.pop %v2084
  %v2093 = vtanh.pop %v2085
  %v2094 = vtanh.pop %v2086
  %v2095 = vtanh.pop %v2087
  %v2096 = vtanh.pop %v2088
  %v2097 = vld [vmem:[%s4] sm:$0xff]
  %v2098 = vld [vmem:[%s4 + $0x8] sm:$0xff]
  %v2099 = vld [vmem:[%s4 + $0x10] sm:$0xff]
  %v2100 = vld [vmem:[%s4 + $0x18] sm:$0xff]
  %v2101 = vld [vmem:[%s4 + $0x20] sm:$0xff]
  %v2102 = vld [vmem:[%s4 + $0x28] sm:$0xff]
  %v2103 = vld [vmem:[%s4 + $0x30] sm:$0xff]
  %v2104 = vld [vmem:[%s4 + $0x38] sm:$0xff]
  %v2105 = vld [vmem:[%s4 + $0x40] sm:$0xff]
  %v2106 = vld [vmem:[%s4 + $0x48] sm:$0xff]
  %v2107 = vld [vmem:[%s4 + $0x50] sm:$0xff]
  %v2108 = vld [vmem:[%s4 + $0x58] sm:$0xff]
  %v2109 = vld [vmem:[%s4 + $0x60] sm:$0xff]
  %v2110 = vld [vmem:[%s4 + $0x68] sm:$0xff]
  %v2111 = vld [vmem:[%s4 + $0x70] sm:$0xff]
  %v2112 = vld [vmem:[%s4 + $0x78] sm:$0xff]
  %v2113 = vld [vmem:[%s4 + $0x80] sm:$0xff]
  %v2114 = vld [vmem:[%s4 + $0x88] sm:$0xff]
  %v2115 = vld [vmem:[%s4 + $0x90] sm:$0xff]
  %v2116 = vld [vmem:[%s4 + $0x98] sm:$0xff]
  %v2117 = vld [vmem:[%s4 + $0xa0] sm:$0xff]
  %v2118 = vld [vmem:[%s4 + $0xa8] sm:$0xff]
  %v2119 = vld [vmem:[%s4 + $0xb0] sm:$0xff]
  %v2120 = vld [vmem:[%s4 + $0xb8] sm:$0xff]
  %v2121 = vld [vmem:[%s4 + $0xc0] sm:$0xff]
  %v2122 = vld [vmem:[%s4 + $0xc8] sm:$0xff]
  %v2123 = vld [vmem:[%s4 + $0xd0] sm:$0xff]
  %v2124 = vld [vmem:[%s4 + $0xd8] sm:$0xff]
  %v2125 = vld [vmem:[%s4 + $0xe0] sm:$0xff]
  %v2126 = vld [vmem:[%s4 + $0xe8] sm:$0xff]
  %v2127 = vld [vmem:[%s4 + $0xf0] sm:$0xff]
  %v2128 = vld [vmem:[%s4 + $0xf8] sm:$0xff]
  %2129 = vmatprep.subr.mxu0 0.0
  %2130 = vmatpush1.msra.mxu0 %v2112
  %2131 = vmatprep.subr.mxu0 0.0
  %2132 = vmatpush1.msra.mxu0 %v2111
  %2133 = vmatprep.subr.mxu0 0.0
  %2134 = vmatpush1.msra.mxu0 %v2110
  %2135 = vmatprep.subr.mxu0 0.0
  %2136 = vmatpush1.msra.mxu0 %v2109
  %2137 = vmatprep.subr.mxu0 0.0
  %2138 = vmatpush1.msra.mxu0 %v2108
  %2139 = vmatprep.subr.mxu0 0.0
  %2140 = vmatpush1.msra.mxu0 %v2107
  %2141 = vmatprep.subr.mxu0 0.0
  %2142 = vmatpush1.msra.mxu0 %v2106
  %2143 = vmatprep.subr.mxu0 0.0
  %2144 = vmatpush1.msra.mxu0 %v2105
  %2145 = vmatprep.subr.mxu0 0.0
  %2146 = vmatpush1.msra.mxu0 %v2104
  %2147 = vmatprep.subr.mxu0 0.0
  %2148 = vmatpush1.msra.mxu0 %v2103
  %2149 = vmatprep.subr.mxu0 0.0
  %2150 = vmatpush1.msra.mxu0 %v2102
  %2151 = vmatprep.subr.mxu0 0.0
  %2152 = vmatpush1.msra.mxu0 %v2101
  %2153 = vmatprep.subr.mxu0 0.0
  %2154 = vmatpush1.msra.mxu0 %v2100
  %2155 = vmatprep.subr.mxu0 0.0
  %2156 = vmatpush1.msra.mxu0 %v2099
  %2157 = vmatprep.subr.mxu0 0.0
  %2158 = vmatpush1.msra.mxu0 %v2098
  %2159 = vmatprep.subr.mxu0 0.0
  %2160 = vmatpush1.msra.mxu0 %v2097
  %2161 = vmatprep.subr.mxu0 0.0
  %2162 = vmatpush2.msra.mxu0 %v2128
  %2163 = vmatprep.subr.mxu0 0.0
  %2164 = vmatpush2.msra.mxu0 %v2127
  %2165 = vmatprep.subr.mxu0 0.0
  %2166 = vmatpush2.msra.mxu0 %v2126
  %2167 = vmatprep.subr.mxu0 0.0
  %2168 = vmatpush2.msra.mxu0 %v2125
  %2169 = vmatprep.subr.mxu0 0.0
  %2170 = vmatpush2.msra.mxu0 %v2124
  %2171 = vmatprep.subr.mxu0 0.0
  %2172 = vmatpush2.msra.mxu0 %v2123
  %2173 = vmatprep.subr.mxu0 0.0
  %2174 = vmatpush2.msra.mxu0 %v2122
  %2175 = vmatprep.subr.mxu0 0.0
  %2176 = vmatpush2.msra.mxu0 %v2121
  %2177 = vmatprep.subr.mxu0 0.0
  %2178 = vmatpush2.msra.mxu0 %v2120
  %2179 = vmatprep.subr.mxu0 0.0
  %2180 = vmatpush2.msra.mxu0 %v2119
  %2181 = vmatprep.subr.mxu0 0.0
  %2182 = vmatpush2.msra.mxu0 %v2118
  %2183 = vmatprep.subr.mxu0 0.0
  %2184 = vmatpush2.msra.mxu0 %v2117
  %2185 = vmatprep.subr.mxu0 0.0
  %2186 = vmatpush2.msra.mxu0 %v2116
  %2187 = vmatprep.subr.mxu0 0.0
  %2188 = vmatpush2.msra.mxu0 %v2115
  %2189 = vmatprep.subr.mxu0 0.0
  %2190 = vmatpush2.msra.mxu0 %v2114
  %2191 = vmatprep.subr.mxu0 0.0
  %2192 = vmatpush2.msra.mxu0 %v2113
  %2193 = vmatprep.mubr.f32.mxu0 %v1936
  %2194 = vmatmul.mubr.f32.gmra.mxu0 %v2089
  %v2195 = vpop.f32.mrf.mxu0
  %v2196 = vadd.f32 %v1056, %v2195
  %v2197 = vpop.f32.mrf.mxu0
  %2198 = vmatprep.mubr.f32.mxu0 %v1937
  %2199 = vmatmul.mubr.f32.gmra.mxu0 %v2090
  %v2200 = vpop.f32.mrf.mxu0
  %v2201 = vadd.f32 %v1056, %v2200
  %v2202 = vpop.f32.mrf.mxu0
  %2203 = vmatprep.mubr.f32.mxu0 %v1938
  %2204 = vmatmul.mubr.f32.gmra.mxu0 %v2091
  %v2205 = vpop.f32.mrf.mxu0
  %v2206 = vadd.f32 %v1056, %v2205
  %v2207 = vpop.f32.mrf.mxu0
  %2208 = vmatprep.mubr.f32.mxu0 %v1939
  %2209 = vmatmul.mubr.f32.gmra.mxu0 %v2092
  %v2210 = vpop.f32.mrf.mxu0
  %v2211 = vadd.f32 %v1056, %v2210
  %v2212 = vpop.f32.mrf.mxu0
  %2213 = vmatprep.mubr.f32.mxu0 %v1940
  %2214 = vmatmul.mubr.f32.gmra.mxu0 %v2093
  %v2215 = vpop.f32.mrf.mxu0
  %v2216 = vadd.f32 %v1056, %v2215
  %v2217 = vpop.f32.mrf.mxu0
  %2218 = vmatprep.mubr.f32.mxu0 %v1941
  %2219 = vmatmul.mubr.f32.gmra.mxu0 %v2094
  %v2220 = vpop.f32.mrf.mxu0
  %v2221 = vadd.f32 %v1056, %v2220
  %v2222 = vpop.f32.mrf.mxu0
  %2223 = vmatprep.mubr.f32.mxu0 %v1942
  %2224 = vmatmul.mubr.f32.gmra.mxu0 %v2095
  %v2225 = vpop.f32.mrf.mxu0
  %v2226 = vadd.f32 %v1056, %v2225
  %v2227 = vpop.f32.mrf.mxu0
  %2228 = vmatprep.mubr.f32.mxu0 %v1943
  %2229 = vmatmul.mubr.f32.gmra.mxu0 %v2096
  %v2230 = vpop.f32.mrf.mxu0
  %v2231 = vadd.f32 %v1056, %v2230
  %v2232 = vpop.f32.mrf.mxu0
  %2233 = vdwg.mxu0
  %v2234 = vtanh.pop %v2196
  %v2235 = vtanh.pop %v2201
  %v2236 = vtanh.pop %v2206
  %v2237 = vtanh.pop %v2211
  %v2238 = vtanh.pop %v2216
  %v2239 = vtanh.pop %v2221
  %v2240 = vtanh.pop %v2226
  %v2241 = vtanh.pop %v2231
  %2242 = vst [vmem:[#allocation3 + $0x18] sm:$0xff] %v2234
  %2243 = vst [vmem:[#allocation3 + $0x58] sm:$0xff] %v2235
  %2244 = vst [vmem:[#allocation3 + $0x98] sm:$0xff] %v2236
  %2245 = vst [vmem:[#allocation3 + $0xd8] sm:$0xff] %v2237
  %2246 = vst [vmem:[#allocation3 + $0x118] sm:$0xff] %v2238
  %2247 = vst [vmem:[#allocation3 + $0x158] sm:$0xff] %v2239
  %2248 = vst [vmem:[#allocation3 + $0x198] sm:$0xff] %v2240
  %2249 = vst [vmem:[#allocation3 + $0x1d8] sm:$0xff] %v2241
  %v2250 = vld [vmem:[#allocation2 + $0x100] sm:$0xff]
  %v2251 = vld [vmem:[#allocation2 + $0x108] sm:$0xff]
  %v2252 = vld [vmem:[#allocation2 + $0x110] sm:$0xff]
  %v2253 = vld [vmem:[#allocation2 + $0x118] sm:$0xff]
  %v2254 = vld [vmem:[#allocation2 + $0x120] sm:$0xff]
  %v2255 = vld [vmem:[#allocation2 + $0x128] sm:$0xff]
  %v2256 = vld [vmem:[#allocation2 + $0x130] sm:$0xff]
  %v2257 = vld [vmem:[#allocation2 + $0x138] sm:$0xff]
  %v2258 = vld [vmem:[%s3] sm:$0xff]
  %v2259 = vld [vmem:[%s3 + $0x8] sm:$0xff]
  %v2260 = vld [vmem:[%s3 + $0x10] sm:$0xff]
  %v2261 = vld [vmem:[%s3 + $0x18] sm:$0xff]
  %v2262 = vld [vmem:[%s3 + $0x20] sm:$0xff]
  %v2263 = vld [vmem:[%s3 + $0x28] sm:$0xff]
  %v2264 = vld [vmem:[%s3 + $0x30] sm:$0xff]
  %v2265 = vld [vmem:[%s3 + $0x38] sm:$0xff]
  %v2266 = vld [vmem:[%s3 + $0x40] sm:$0xff]
  %v2267 = vld [vmem:[%s3 + $0x48] sm:$0xff]
  %v2268 = vld [vmem:[%s3 + $0x50] sm:$0xff]
  %v2269 = vld [vmem:[%s3 + $0x58] sm:$0xff]
  %v2270 = vld [vmem:[%s3 + $0x60] sm:$0xff]
  %v2271 = vld [vmem:[%s3 + $0x68] sm:$0xff]
  %v2272 = vld [vmem:[%s3 + $0x70] sm:$0xff]
  %v2273 = vld [vmem:[%s3 + $0x78] sm:$0xff]
  %2274 = vmatprep.subr.mxu0 0.0
  %2275 = vmatpush1.msra.mxu0 %v2273
  %2276 = vmatprep.subr.mxu0 0.0
  %2277 = vmatpush1.msra.mxu0 %v2272
  %2278 = vmatprep.subr.mxu0 0.0
  %2279 = vmatpush1.msra.mxu0 %v2271
  %2280 = vmatprep.subr.mxu0 0.0
  %2281 = vmatpush1.msra.mxu0 %v2270
  %2282 = vmatprep.subr.mxu0 0.0
  %2283 = vmatpush1.msra.mxu0 %v2269
  %2284 = vmatprep.subr.mxu0 0.0
  %2285 = vmatpush1.msra.mxu0 %v2268
  %2286 = vmatprep.subr.mxu0 0.0
  %2287 = vmatpush1.msra.mxu0 %v2267
  %2288 = vmatprep.subr.mxu0 0.0
  %2289 = vmatpush1.msra.mxu0 %v2266
  %2290 = vmatprep.subr.mxu0 0.0
  %2291 = vmatpush1.msra.mxu0 %v2265
  %2292 = vmatprep.subr.mxu0 0.0
  %2293 = vmatpush1.msra.mxu0 %v2264
  %2294 = vmatprep.subr.mxu0 0.0
  %2295 = vmatpush1.msra.mxu0 %v2263
  %2296 = vmatprep.subr.mxu0 0.0
  %2297 = vmatpush1.msra.mxu0 %v2262
  %2298 = vmatprep.subr.mxu0 0.0
  %2299 = vmatpush1.msra.mxu0 %v2261
  %2300 = vmatprep.subr.mxu0 0.0
  %2301 = vmatpush1.msra.mxu0 %v2260
  %2302 = vmatprep.subr.mxu0 0.0
  %2303 = vmatpush1.msra.mxu0 %v2259
  %2304 = vmatprep.subr.mxu0 0.0
  %2305 = vmatpush1.msra.mxu0 %v2258
  %2306 = vmatprep.subr.mxu0 0.0
  %2307 = vmatpush2.msra.mxu0 0.0
  %2308 = vmatprep.subr.mxu0 0.0
  %2309 = vmatpush2.msra.mxu0 0.0
  %2310 = vmatprep.subr.mxu0 0.0
  %2311 = vmatpush2.msra.mxu0 0.0
  %2312 = vmatprep.subr.mxu0 0.0
  %2313 = vmatpush2.msra.mxu0 0.0
  %2314 = vmatprep.subr.mxu0 0.0
  %2315 = vmatpush2.msra.mxu0 0.0
  %2316 = vmatprep.subr.mxu0 0.0
  %2317 = vmatpush2.msra.mxu0 0.0
  %2318 = vmatprep.subr.mxu0 0.0
  %2319 = vmatpush2.msra.mxu0 0.0
  %2320 = vmatprep.subr.mxu0 0.0
  %2321 = vmatpush2.msra.mxu0 0.0
  %2322 = vmatprep.subr.mxu0 0.0
  %2323 = vmatpush2.msra.mxu0 0.0
  %2324 = vmatprep.subr.mxu0 0.0
  %2325 = vmatpush2.msra.mxu0 0.0
  %2326 = vmatprep.subr.mxu0 0.0
  %2327 = vmatpush2.msra.mxu0 0.0
  %2328 = vmatprep.subr.mxu0 0.0
  %2329 = vmatpush2.msra.mxu0 0.0
  %2330 = vmatprep.subr.mxu0 0.0
  %2331 = vmatpush2.msra.mxu0 0.0
  %2332 = vmatprep.subr.mxu0 0.0
  %2333 = vmatpush2.msra.mxu0 0.0
  %2334 = vmatprep.subr.mxu0 0.0
  %2335 = vmatpush2.msra.mxu0 0.0
  %2336 = vmatprep.subr.mxu0 0.0
  %2337 = vmatpush2.msra.mxu0 0.0
  %2338 = vmatprep.mubr.f32.mxu0 0.0
  %2339 = vmatmul.mubr.f32.gmra.mxu0 %v2089
  %v2340 = vpop.f32.mrf.mxu0
  %v2341 = vadd.f32 0.0, %v2340
  %v2342 = vpop.f32.mrf.mxu0
  %2343 = vmatprep.mubr.f32.mxu0 0.0
  %2344 = vmatmul.mubr.f32.gmra.mxu0 %v2090
  %v2345 = vpop.f32.mrf.mxu0
  %v2346 = vadd.f32 0.0, %v2345
  %v2347 = vpop.f32.mrf.mxu0
  %2348 = vmatprep.mubr.f32.mxu0 0.0
  %2349 = vmatmul.mubr.f32.gmra.mxu0 %v2091
  %v2350 = vpop.f32.mrf.mxu0
  %v2351 = vadd.f32 0.0, %v2350
  %v2352 = vpop.f32.mrf.mxu0
  %2353 = vmatprep.mubr.f32.mxu0 0.0
  %2354 = vmatmul.mubr.f32.gmra.mxu0 %v2092
  %v2355 = vpop.f32.mrf.mxu0
  %v2356 = vadd.f32 0.0, %v2355
  %v2357 = vpop.f32.mrf.mxu0
  %2358 = vmatprep.mubr.f32.mxu0 0.0
  %2359 = vmatmul.mubr.f32.gmra.mxu0 %v2093
  %v2360 = vpop.f32.mrf.mxu0
  %v2361 = vadd.f32 0.0, %v2360
  %v2362 = vpop.f32.mrf.mxu0
  %2363 = vmatprep.mubr.f32.mxu0 0.0
  %2364 = vmatmul.mubr.f32.gmra.mxu0 %v2094
  %v2365 = vpop.f32.mrf.mxu0
  %v2366 = vadd.f32 0.0, %v2365
  %v2367 = vpop.f32.mrf.mxu0
  %2368 = vmatprep.mubr.f32.mxu0 0.0
  %2369 = vmatmul.mubr.f32.gmra.mxu0 %v2095
  %v2370 = vpop.f32.mrf.mxu0
  %v2371 = vadd.f32 0.0, %v2370
  %v2372 = vpop.f32.mrf.mxu0
  %2373 = vmatprep.mubr.f32.mxu0 0.0
  %2374 = vmatmul.mubr.f32.gmra.mxu0 %v2096
  %v2375 = vpop.f32.mrf.mxu0
  %v2376 = vadd.f32 0.0, %v2375
  %v2377 = vpop.f32.mrf.mxu0
  %2378 = vdwg.mxu0
  %v2379 = vadd.f32 %v2250, %v2341
  %v2380 = vadd.f32 %v2251, %v2346
  %v2381 = vadd.f32 %v2252, %v2351
  %v2382 = vadd.f32 %v2253, %v2356
  %v2383 = vadd.f32 %v2254, %v2361
  %v2384 = vadd.f32 %v2255, %v2366
  %v2385 = vadd.f32 %v2256, %v2371
  %v2386 = vadd.f32 %v2257, %v2376
  %v2387 = vtanh.pop %v2379
  %v2388 = vtanh.pop %v2380
  %v2389 = vtanh.pop %v2381
  %v2390 = vtanh.pop %v2382
  %v2391 = vtanh.pop %v2383
  %v2392 = vtanh.pop %v2384
  %v2393 = vtanh.pop %v2385
  %v2394 = vtanh.pop %v2386
  %v2395 = vld [vmem:[%s4] sm:$0xff]
  %v2396 = vld [vmem:[%s4 + $0x8] sm:$0xff]
  %v2397 = vld [vmem:[%s4 + $0x10] sm:$0xff]
  %v2398 = vld [vmem:[%s4 + $0x18] sm:$0xff]
  %v2399 = vld [vmem:[%s4 + $0x20] sm:$0xff]
  %v2400 = vld [vmem:[%s4 + $0x28] sm:$0xff]
  %v2401 = vld [vmem:[%s4 + $0x30] sm:$0xff]
  %v2402 = vld [vmem:[%s4 + $0x38] sm:$0xff]
  %v2403 = vld [vmem:[%s4 + $0x40] sm:$0xff]
  %v2404 = vld [vmem:[%s4 + $0x48] sm:$0xff]
  %v2405 = vld [vmem:[%s4 + $0x50] sm:$0xff]
  %v2406 = vld [vmem:[%s4 + $0x58] sm:$0xff]
  %v2407 = vld [vmem:[%s4 + $0x60] sm:$0xff]
  %v2408 = vld [vmem:[%s4 + $0x68] sm:$0xff]
  %v2409 = vld [vmem:[%s4 + $0x70] sm:$0xff]
  %v2410 = vld [vmem:[%s4 + $0x78] sm:$0xff]
  %v2411 = vld [vmem:[%s4 + $0x80] sm:$0xff]
  %v2412 = vld [vmem:[%s4 + $0x88] sm:$0xff]
  %v2413 = vld [vmem:[%s4 + $0x90] sm:$0xff]
  %v2414 = vld [vmem:[%s4 + $0x98] sm:$0xff]
  %v2415 = vld [vmem:[%s4 + $0xa0] sm:$0xff]
  %v2416 = vld [vmem:[%s4 + $0xa8] sm:$0xff]
  %v2417 = vld [vmem:[%s4 + $0xb0] sm:$0xff]
  %v2418 = vld [vmem:[%s4 + $0xb8] sm:$0xff]
  %v2419 = vld [vmem:[%s4 + $0xc0] sm:$0xff]
  %v2420 = vld [vmem:[%s4 + $0xc8] sm:$0xff]
  %v2421 = vld [vmem:[%s4 + $0xd0] sm:$0xff]
  %v2422 = vld [vmem:[%s4 + $0xd8] sm:$0xff]
  %v2423 = vld [vmem:[%s4 + $0xe0] sm:$0xff]
  %v2424 = vld [vmem:[%s4 + $0xe8] sm:$0xff]
  %v2425 = vld [vmem:[%s4 + $0xf0] sm:$0xff]
  %v2426 = vld [vmem:[%s4 + $0xf8] sm:$0xff]
  %2427 = vmatprep.subr.mxu0 0.0
  %2428 = vmatpush1.msra.mxu0 %v2410
  %2429 = vmatprep.subr.mxu0 0.0
  %2430 = vmatpush1.msra.mxu0 %v2409
  %2431 = vmatprep.subr.mxu0 0.0
  %2432 = vmatpush1.msra.mxu0 %v2408
  %2433 = vmatprep.subr.mxu0 0.0
  %2434 = vmatpush1.msra.mxu0 %v2407
  %2435 = vmatprep.subr.mxu0 0.0
  %2436 = vmatpush1.msra.mxu0 %v2406
  %2437 = vmatprep.subr.mxu0 0.0
  %2438 = vmatpush1.msra.mxu0 %v2405
  %2439 = vmatprep.subr.mxu0 0.0
  %2440 = vmatpush1.msra.mxu0 %v2404
  %2441 = vmatprep.subr.mxu0 0.0
  %2442 = vmatpush1.msra.mxu0 %v2403
  %2443 = vmatprep.subr.mxu0 0.0
  %2444 = vmatpush1.msra.mxu0 %v2402
  %2445 = vmatprep.subr.mxu0 0.0
  %2446 = vmatpush1.msra.mxu0 %v2401
  %2447 = vmatprep.subr.mxu0 0.0
  %2448 = vmatpush1.msra.mxu0 %v2400
  %2449 = vmatprep.subr.mxu0 0.0
  %2450 = vmatpush1.msra.mxu0 %v2399
  %2451 = vmatprep.subr.mxu0 0.0
  %2452 = vmatpush1.msra.mxu0 %v2398
  %2453 = vmatprep.subr.mxu0 0.0
  %2454 = vmatpush1.msra.mxu0 %v2397
  %2455 = vmatprep.subr.mxu0 0.0
  %2456 = vmatpush1.msra.mxu0 %v2396
  %2457 = vmatprep.subr.mxu0 0.0
  %2458 = vmatpush1.msra.mxu0 %v2395
  %2459 = vmatprep.subr.mxu0 0.0
  %2460 = vmatpush2.msra.mxu0 %v2426
  %2461 = vmatprep.subr.mxu0 0.0
  %2462 = vmatpush2.msra.mxu0 %v2425
  %2463 = vmatprep.subr.mxu0 0.0
  %2464 = vmatpush2.msra.mxu0 %v2424
  %2465 = vmatprep.subr.mxu0 0.0
  %2466 = vmatpush2.msra.mxu0 %v2423
  %2467 = vmatprep.subr.mxu0 0.0
  %2468 = vmatpush2.msra.mxu0 %v2422
  %2469 = vmatprep.subr.mxu0 0.0
  %2470 = vmatpush2.msra.mxu0 %v2421
  %2471 = vmatprep.subr.mxu0 0.0
  %2472 = vmatpush2.msra.mxu0 %v2420
  %2473 = vmatprep.subr.mxu0 0.0
  %2474 = vmatpush2.msra.mxu0 %v2419
  %2475 = vmatprep.subr.mxu0 0.0
  %2476 = vmatpush2.msra.mxu0 %v2418
  %2477 = vmatprep.subr.mxu0 0.0
  %2478 = vmatpush2.msra.mxu0 %v2417
  %2479 = vmatprep.subr.mxu0 0.0
  %2480 = vmatpush2.msra.mxu0 %v2416
  %2481 = vmatprep.subr.mxu0 0.0
  %2482 = vmatpush2.msra.mxu0 %v2415
  %2483 = vmatprep.subr.mxu0 0.0
  %2484 = vmatpush2.msra.mxu0 %v2414
  %2485 = vmatprep.subr.mxu0 0.0
  %2486 = vmatpush2.msra.mxu0 %v2413
  %2487 = vmatprep.subr.mxu0 0.0
  %2488 = vmatpush2.msra.mxu0 %v2412
  %2489 = vmatprep.subr.mxu0 0.0
  %2490 = vmatpush2.msra.mxu0 %v2411
  %2491 = vmatprep.mubr.f32.mxu0 %v2234
  %2492 = vmatmul.mubr.f32.gmra.mxu0 %v2387
  %v2493 = vpop.f32.mrf.mxu0
  %v2494 = vadd.f32 %v1056, %v2493
  %v2495 = vpop.f32.mrf.mxu0
  %2496 = vmatprep.mubr.f32.mxu0 %v2235
  %2497 = vmatmul.mubr.f32.gmra.mxu0 %v2388
  %v2498 = vpop.f32.mrf.mxu0
  %v2499 = vadd.f32 %v1056, %v2498
  %v2500 = vpop.f32.mrf.mxu0
  %2501 = vmatprep.mubr.f32.mxu0 %v2236
  %2502 = vmatmul.mubr.f32.gmra.mxu0 %v2389
  %v2503 = vpop.f32.mrf.mxu0
  %v2504 = vadd.f32 %v1056, %v2503
  %v2505 = vpop.f32.mrf.mxu0
  %2506 = vmatprep.mubr.f32.mxu0 %v2237
  %2507 = vmatmul.mubr.f32.gmra.mxu0 %v2390
  %v2508 = vpop.f32.mrf.mxu0
  %v2509 = vadd.f32 %v1056, %v2508
  %v2510 = vpop.f32.mrf.mxu0
  %2511 = vmatprep.mubr.f32.mxu0 %v2238
  %2512 = vmatmul.mubr.f32.gmra.mxu0 %v2391
  %v2513 = vpop.f32.mrf.mxu0
  %v2514 = vadd.f32 %v1056, %v2513
  %v2515 = vpop.f32.mrf.mxu0
  %2516 = vmatprep.mubr.f32.mxu0 %v2239
  %2517 = vmatmul.mubr.f32.gmra.mxu0 %v2392
  %v2518 = vpop.f32.mrf.mxu0
  %v2519 = vadd.f32 %v1056, %v2518
  %v2520 = vpop.f32.mrf.mxu0
  %2521 = vmatprep.mubr.f32.mxu0 %v2240
  %2522 = vmatmul.mubr.f32.gmra.mxu0 %v2393
  %v2523 = vpop.f32.mrf.mxu0
  %v2524 = vadd.f32 %v1056, %v2523
  %v2525 = vpop.f32.mrf.mxu0
  %2526 = vmatprep.mubr.f32.mxu0 %v2241
  %2527 = vmatmul.mubr.f32.gmra.mxu0 %v2394
  %v2528 = vpop.f32.mrf.mxu0
  %v2529 = vadd.f32 %v1056, %v2528
  %v2530 = vpop.f32.mrf.mxu0
  %2531 = vdwg.mxu0
  %v2532 = vtanh.pop %v2494
  %v2533 = vtanh.pop %v2499
  %v2534 = vtanh.pop %v2504
  %v2535 = vtanh.pop %v2509
  %v2536 = vtanh.pop %v2514
  %v2537 = vtanh.pop %v2519
  %v2538 = vtanh.pop %v2524
  %v2539 = vtanh.pop %v2529
  %2540 = vst [vmem:[#allocation3 + $0x20] sm:$0xff] %v2532
  %2541 = vst [vmem:[#allocation3 + $0x60] sm:$0xff] %v2533
  %2542 = vst [vmem:[#allocation3 + $0xa0] sm:$0xff] %v2534
  %2543 = vst [vmem:[#allocation3 + $0xe0] sm:$0xff] %v2535
  %2544 = vst [vmem:[#allocation3 + $0x120] sm:$0xff] %v2536
  %2545 = vst [vmem:[#allocation3 + $0x160] sm:$0xff] %v2537
  %2546 = vst [vmem:[#allocation3 + $0x1a0] sm:$0xff] %v2538
  %2547 = vst [vmem:[#allocation3 + $0x1e0] sm:$0xff] %v2539
  %v2548 = vld [vmem:[#allocation2 + $0x140] sm:$0xff]
  %v2549 = vld [vmem:[#allocation2 + $0x148] sm:$0xff]
  %v2550 = vld [vmem:[#allocation2 + $0x150] sm:$0xff]
  %v2551 = vld [vmem:[#allocation2 + $0x158] sm:$0xff]
  %v2552 = vld [vmem:[#allocation2 + $0x160] sm:$0xff]
  %v2553 = vld [vmem:[#allocation2 + $0x168] sm:$0xff]
  %v2554 = vld [vmem:[#allocation2 + $0x170] sm:$0xff]
  %v2555 = vld [vmem:[#allocation2 + $0x178] sm:$0xff]
  %v2556 = vld [vmem:[%s3] sm:$0xff]
  %v2557 = vld [vmem:[%s3 + $0x8] sm:$0xff]
  %v2558 = vld [vmem:[%s3 + $0x10] sm:$0xff]
  %v2559 = vld [vmem:[%s3 + $0x18] sm:$0xff]
  %v2560 = vld [vmem:[%s3 + $0x20] sm:$0xff]
  %v2561 = vld [vmem:[%s3 + $0x28] sm:$0xff]
  %v2562 = vld [vmem:[%s3 + $0x30] sm:$0xff]
  %v2563 = vld [vmem:[%s3 + $0x38] sm:$0xff]
  %v2564 = vld [vmem:[%s3 + $0x40] sm:$0xff]
  %v2565 = vld [vmem:[%s3 + $0x48] sm:$0xff]
  %v2566 = vld [vmem:[%s3 + $0x50] sm:$0xff]
  %v2567 = vld [vmem:[%s3 + $0x58] sm:$0xff]
  %v2568 = vld [vmem:[%s3 + $0x60] sm:$0xff]
  %v2569 = vld [vmem:[%s3 + $0x68] sm:$0xff]
  %v2570 = vld [vmem:[%s3 + $0x70] sm:$0xff]
  %v2571 = vld [vmem:[%s3 + $0x78] sm:$0xff]
  %2572 = vmatprep.subr.mxu0 0.0
  %2573 = vmatpush1.msra.mxu0 %v2571
  %2574 = vmatprep.subr.mxu0 0.0
  %2575 = vmatpush1.msra.mxu0 %v2570
  %2576 = vmatprep.subr.mxu0 0.0
  %2577 = vmatpush1.msra.mxu0 %v2569
  %2578 = vmatprep.subr.mxu0 0.0
  %2579 = vmatpush1.msra.mxu0 %v2568
  %2580 = vmatprep.subr.mxu0 0.0
  %2581 = vmatpush1.msra.mxu0 %v2567
  %2582 = vmatprep.subr.mxu0 0.0
  %2583 = vmatpush1.msra.mxu0 %v2566
  %2584 = vmatprep.subr.mxu0 0.0
  %2585 = vmatpush1.msra.mxu0 %v2565
  %2586 = vmatprep.subr.mxu0 0.0
  %2587 = vmatpush1.msra.mxu0 %v2564
  %2588 = vmatprep.subr.mxu0 0.0
  %2589 = vmatpush1.msra.mxu0 %v2563
  %2590 = vmatprep.subr.mxu0 0.0
  %2591 = vmatpush1.msra.mxu0 %v2562
  %2592 = vmatprep.subr.mxu0 0.0
  %2593 = vmatpush1.msra.mxu0 %v2561
  %2594 = vmatprep.subr.mxu0 0.0
  %2595 = vmatpush1.msra.mxu0 %v2560
  %2596 = vmatprep.subr.mxu0 0.0
  %2597 = vmatpush1.msra.mxu0 %v2559
  %2598 = vmatprep.subr.mxu0 0.0
  %2599 = vmatpush1.msra.mxu0 %v2558
  %2600 = vmatprep.subr.mxu0 0.0
  %2601 = vmatpush1.msra.mxu0 %v2557
  %2602 = vmatprep.subr.mxu0 0.0
  %2603 = vmatpush1.msra.mxu0 %v2556
  %2604 = vmatprep.subr.mxu0 0.0
  %2605 = vmatpush2.msra.mxu0 0.0
  %2606 = vmatprep.subr.mxu0 0.0
  %2607 = vmatpush2.msra.mxu0 0.0
  %2608 = vmatprep.subr.mxu0 0.0
  %2609 = vmatpush2.msra.mxu0 0.0
  %2610 = vmatprep.subr.mxu0 0.0
  %2611 = vmatpush2.msra.mxu0 0.0
  %2612 = vmatprep.subr.mxu0 0.0
  %2613 = vmatpush2.msra.mxu0 0.0
  %2614 = vmatprep.subr.mxu0 0.0
  %2615 = vmatpush2.msra.mxu0 0.0
  %2616 = vmatprep.subr.mxu0 0.0
  %2617 = vmatpush2.msra.mxu0 0.0
  %2618 = vmatprep.subr.mxu0 0.0
  %2619 = vmatpush2.msra.mxu0 0.0
  %2620 = vmatprep.subr.mxu0 0.0
  %2621 = vmatpush2.msra.mxu0 0.0
  %2622 = vmatprep.subr.mxu0 0.0
  %2623 = vmatpush2.msra.mxu0 0.0
  %2624 = vmatprep.subr.mxu0 0.0
  %2625 = vmatpush2.msra.mxu0 0.0
  %2626 = vmatprep.subr.mxu0 0.0
  %2627 = vmatpush2.msra.mxu0 0.0
  %2628 = vmatprep.subr.mxu0 0.0
  %2629 = vmatpush2.msra.mxu0 0.0
  %2630 = vmatprep.subr.mxu0 0.0
  %2631 = vmatpush2.msra.mxu0 0.0
  %2632 = vmatprep.subr.mxu0 0.0
  %2633 = vmatpush2.msra.mxu0 0.0
  %2634 = vmatprep.subr.mxu0 0.0
  %2635 = vmatpush2.msra.mxu0 0.0
  %2636 = vmatprep.mubr.f32.mxu0 0.0
  %2637 = vmatmul.mubr.f32.gmra.mxu0 %v2387
  %v2638 = vpop.f32.mrf.mxu0
  %v2639 = vadd.f32 0.0, %v2638
  %v2640 = vpop.f32.mrf.mxu0
  %2641 = vmatprep.mubr.f32.mxu0 0.0
  %2642 = vmatmul.mubr.f32.gmra.mxu0 %v2388
  %v2643 = vpop.f32.mrf.mxu0
  %v2644 = vadd.f32 0.0, %v2643
  %v2645 = vpop.f32.mrf.mxu0
  %2646 = vmatprep.mubr.f32.mxu0 0.0
  %2647 = vmatmul.mubr.f32.gmra.mxu0 %v2389
  %v2648 = vpop.f32.mrf.mxu0
  %v2649 = vadd.f32 0.0, %v2648
  %v2650 = vpop.f32.mrf.mxu0
  %2651 = vmatprep.mubr.f32.mxu0 0.0
  %2652 = vmatmul.mubr.f32.gmra.mxu0 %v2390
  %v2653 = vpop.f32.mrf.mxu0
  %v2654 = vadd.f32 0.0, %v2653
  %v2655 = vpop.f32.mrf.mxu0
  %2656 = vmatprep.mubr.f32.mxu0 0.0
  %2657 = vmatmul.mubr.f32.gmra.mxu0 %v2391
  %v2658 = vpop.f32.mrf.mxu0
  %v2659 = vadd.f32 0.0, %v2658
  %v2660 = vpop.f32.mrf.mxu0
  %2661 = vmatprep.mubr.f32.mxu0 0.0
  %2662 = vmatmul.mubr.f32.gmra.mxu0 %v2392
  %v2663 = vpop.f32.mrf.mxu0
  %v2664 = vadd.f32 0.0, %v2663
  %v2665 = vpop.f32.mrf.mxu0
  %2666 = vmatprep.mubr.f32.mxu0 0.0
  %2667 = vmatmul.mubr.f32.gmra.mxu0 %v2393
  %v2668 = vpop.f32.mrf.mxu0
  %v2669 = vadd.f32 0.0, %v2668
  %v2670 = vpop.f32.mrf.mxu0
  %2671 = vmatprep.mubr.f32.mxu0 0.0
  %2672 = vmatmul.mubr.f32.gmra.mxu0 %v2394
  %v2673 = vpop.f32.mrf.mxu0
  %v2674 = vadd.f32 0.0, %v2673
  %v2675 = vpop.f32.mrf.mxu0
  %2676 = vdwg.mxu0
  %v2677 = vadd.f32 %v2548, %v2639
  %v2678 = vadd.f32 %v2549, %v2644
  %v2679 = vadd.f32 %v2550, %v2649
  %v2680 = vadd.f32 %v2551, %v2654
  %v2681 = vadd.f32 %v2552, %v2659
  %v2682 = vadd.f32 %v2553, %v2664
  %v2683 = vadd.f32 %v2554, %v2669
  %v2684 = vadd.f32 %v2555, %v2674
  %v2685 = vtanh.pop %v2677
  %v2686 = vtanh.pop %v2678
  %v2687 = vtanh.pop %v2679
  %v2688 = vtanh.pop %v2680
  %v2689 = vtanh.pop %v2681
  %v2690 = vtanh.pop %v2682
  %v2691 = vtanh.pop %v2683
  %v2692 = vtanh.pop %v2684
  %v2693 = vld [vmem:[%s4] sm:$0xff]
  %v2694 = vld [vmem:[%s4 + $0x8] sm:$0xff]
  %v2695 = vld [vmem:[%s4 + $0x10] sm:$0xff]
  %v2696 = vld [vmem:[%s4 + $0x18] sm:$0xff]
  %v2697 = vld [vmem:[%s4 + $0x20] sm:$0xff]
  %v2698 = vld [vmem:[%s4 + $0x28] sm:$0xff]
  %v2699 = vld [vmem:[%s4 + $0x30] sm:$0xff]
  %v2700 = vld [vmem:[%s4 + $0x38] sm:$0xff]
  %v2701 = vld [vmem:[%s4 + $0x40] sm:$0xff]
  %v2702 = vld [vmem:[%s4 + $0x48] sm:$0xff]
  %v2703 = vld [vmem:[%s4 + $0x50] sm:$0xff]
  %v2704 = vld [vmem:[%s4 + $0x58] sm:$0xff]
  %v2705 = vld [vmem:[%s4 + $0x60] sm:$0xff]
  %v2706 = vld [vmem:[%s4 + $0x68] sm:$0xff]
  %v2707 = vld [vmem:[%s4 + $0x70] sm:$0xff]
  %v2708 = vld [vmem:[%s4 + $0x78] sm:$0xff]
  %v2709 = vld [vmem:[%s4 + $0x80] sm:$0xff]
  %v2710 = vld [vmem:[%s4 + $0x88] sm:$0xff]
  %v2711 = vld [vmem:[%s4 + $0x90] sm:$0xff]
  %v2712 = vld [vmem:[%s4 + $0x98] sm:$0xff]
  %v2713 = vld [vmem:[%s4 + $0xa0] sm:$0xff]
  %v2714 = vld [vmem:[%s4 + $0xa8] sm:$0xff]
  %v2715 = vld [vmem:[%s4 + $0xb0] sm:$0xff]
  %v2716 = vld [vmem:[%s4 + $0xb8] sm:$0xff]
  %v2717 = vld [vmem:[%s4 + $0xc0] sm:$0xff]
  %v2718 = vld [vmem:[%s4 + $0xc8] sm:$0xff]
  %v2719 = vld [vmem:[%s4 + $0xd0] sm:$0xff]
  %v2720 = vld [vmem:[%s4 + $0xd8] sm:$0xff]
  %v2721 = vld [vmem:[%s4 + $0xe0] sm:$0xff]
  %v2722 = vld [vmem:[%s4 + $0xe8] sm:$0xff]
  %v2723 = vld [vmem:[%s4 + $0xf0] sm:$0xff]
  %v2724 = vld [vmem:[%s4 + $0xf8] sm:$0xff]
  %2725 = vmatprep.subr.mxu0 0.0
  %2726 = vmatpush1.msra.mxu0 %v2708
  %2727 = vmatprep.subr.mxu0 0.0
  %2728 = vmatpush1.msra.mxu0 %v2707
  %2729 = vmatprep.subr.mxu0 0.0
  %2730 = vmatpush1.msra.mxu0 %v2706
  %2731 = vmatprep.subr.mxu0 0.0
  %2732 = vmatpush1.msra.mxu0 %v2705
  %2733 = vmatprep.subr.mxu0 0.0
  %2734 = vmatpush1.msra.mxu0 %v2704
  %2735 = vmatprep.subr.mxu0 0.0
  %2736 = vmatpush1.msra.mxu0 %v2703
  %2737 = vmatprep.subr.mxu0 0.0
  %2738 = vmatpush1.msra.mxu0 %v2702
  %2739 = vmatprep.subr.mxu0 0.0
  %2740 = vmatpush1.msra.mxu0 %v2701
  %2741 = vmatprep.subr.mxu0 0.0
  %2742 = vmatpush1.msra.mxu0 %v2700
  %2743 = vmatprep.subr.mxu0 0.0
  %2744 = vmatpush1.msra.mxu0 %v2699
  %2745 = vmatprep.subr.mxu0 0.0
  %2746 = vmatpush1.msra.mxu0 %v2698
  %2747 = vmatprep.subr.mxu0 0.0
  %2748 = vmatpush1.msra.mxu0 %v2697
  %2749 = vmatprep.subr.mxu0 0.0
  %2750 = vmatpush1.msra.mxu0 %v2696
  %2751 = vmatprep.subr.mxu0 0.0
  %2752 = vmatpush1.msra.mxu0 %v2695
  %2753 = vmatprep.subr.mxu0 0.0
  %2754 = vmatpush1.msra.mxu0 %v2694
  %2755 = vmatprep.subr.mxu0 0.0
  %2756 = vmatpush1.msra.mxu0 %v2693
  %2757 = vmatprep.subr.mxu0 0.0
  %2758 = vmatpush2.msra.mxu0 %v2724
  %2759 = vmatprep.subr.mxu0 0.0
  %2760 = vmatpush2.msra.mxu0 %v2723
  %2761 = vmatprep.subr.mxu0 0.0
  %2762 = vmatpush2.msra.mxu0 %v2722
  %2763 = vmatprep.subr.mxu0 0.0
  %2764 = vmatpush2.msra.mxu0 %v2721
  %2765 = vmatprep.subr.mxu0 0.0
  %2766 = vmatpush2.msra.mxu0 %v2720
  %2767 = vmatprep.subr.mxu0 0.0
  %2768 = vmatpush2.msra.mxu0 %v2719
  %2769 = vmatprep.subr.mxu0 0.0
  %2770 = vmatpush2.msra.mxu0 %v2718
  %2771 = vmatprep.subr.mxu0 0.0
  %2772 = vmatpush2.msra.mxu0 %v2717
  %2773 = vmatprep.subr.mxu0 0.0
  %2774 = vmatpush2.msra.mxu0 %v2716
  %2775 = vmatprep.subr.mxu0 0.0
  %2776 = vmatpush2.msra.mxu0 %v2715
  %2777 = vmatprep.subr.mxu0 0.0
  %2778 = vmatpush2.msra.mxu0 %v2714
  %2779 = vmatprep.subr.mxu0 0.0
  %2780 = vmatpush2.msra.mxu0 %v2713
  %2781 = vmatprep.subr.mxu0 0.0
  %2782 = vmatpush2.msra.mxu0 %v2712
  %2783 = vmatprep.subr.mxu0 0.0
  %2784 = vmatpush2.msra.mxu0 %v2711
  %2785 = vmatprep.subr.mxu0 0.0
  %2786 = vmatpush2.msra.mxu0 %v2710
  %2787 = vmatprep.subr.mxu0 0.0
  %2788 = vmatpush2.msra.mxu0 %v2709
  %2789 = vmatprep.mubr.f32.mxu0 %v2532
  %2790 = vmatmul.mubr.f32.gmra.mxu0 %v2685
  %v2791 = vpop.f32.mrf.mxu0
  %v2792 = vadd.f32 %v1056, %v2791
  %v2793 = vpop.f32.mrf.mxu0
  %2794 = vmatprep.mubr.f32.mxu0 %v2533
  %2795 = vmatmul.mubr.f32.gmra.mxu0 %v2686
  %v2796 = vpop.f32.mrf.mxu0
  %v2797 = vadd.f32 %v1056, %v2796
  %v2798 = vpop.f32.mrf.mxu0
  %2799 = vmatprep.mubr.f32.mxu0 %v2534
  %2800 = vmatmul.mubr.f32.gmra.mxu0 %v2687
  %v2801 = vpop.f32.mrf.mxu0
  %v2802 = vadd.f32 %v1056, %v2801
  %v2803 = vpop.f32.mrf.mxu0
  %2804 = vmatprep.mubr.f32.mxu0 %v2535
  %2805 = vmatmul.mubr.f32.gmra.mxu0 %v2688
  %v2806 = vpop.f32.mrf.mxu0
  %v2807 = vadd.f32 %v1056, %v2806
  %v2808 = vpop.f32.mrf.mxu0
  %2809 = vmatprep.mubr.f32.mxu0 %v2536
  %2810 = vmatmul.mubr.f32.gmra.mxu0 %v2689
  %v2811 = vpop.f32.mrf.mxu0
  %v2812 = vadd.f32 %v1056, %v2811
  %v2813 = vpop.f32.mrf.mxu0
  %2814 = vmatprep.mubr.f32.mxu0 %v2537
  %2815 = vmatmul.mubr.f32.gmra.mxu0 %v2690
  %v2816 = vpop.f32.mrf.mxu0
  %v2817 = vadd.f32 %v1056, %v2816
  %v2818 = vpop.f32.mrf.mxu0
  %2819 = vmatprep.mubr.f32.mxu0 %v2538
  %2820 = vmatmul.mubr.f32.gmra.mxu0 %v2691
  %v2821 = vpop.f32.mrf.mxu0
  %v2822 = vadd.f32 %v1056, %v2821
  %v2823 = vpop.f32.mrf.mxu0
  %2824 = vmatprep.mubr.f32.mxu0 %v2539
  %2825 = vmatmul.mubr.f32.gmra.mxu0 %v2692
  %v2826 = vpop.f32.mrf.mxu0
  %v2827 = vadd.f32 %v1056, %v2826
  %v2828 = vpop.f32.mrf.mxu0
  %2829 = vdwg.mxu0
  %v2830 = vtanh.pop %v2792
  %v2831 = vtanh.pop %v2797
  %v2832 = vtanh.pop %v2802
  %v2833 = vtanh.pop %v2807
  %v2834 = vtanh.pop %v2812
  %v2835 = vtanh.pop %v2817
  %v2836 = vtanh.pop %v2822
  %v2837 = vtanh.pop %v2827
  %2838 = vst [vmem:[#allocation3 + $0x28] sm:$0xff] %v2830
  %2839 = vst [vmem:[#allocation3 + $0x68] sm:$0xff] %v2831
  %2840 = vst [vmem:[#allocation3 + $0xa8] sm:$0xff] %v2832
  %2841 = vst [vmem:[#allocation3 + $0xe8] sm:$0xff] %v2833
  %2842 = vst [vmem:[#allocation3 + $0x128] sm:$0xff] %v2834
  %2843 = vst [vmem:[#allocation3 + $0x168] sm:$0xff] %v2835
  %2844 = vst [vmem:[#allocation3 + $0x1a8] sm:$0xff] %v2836
  %2845 = vst [vmem:[#allocation3 + $0x1e8] sm:$0xff] %v2837
  %v2846 = vld [vmem:[#allocation2 + $0x180] sm:$0xff]
  %v2847 = vld [vmem:[#allocation2 + $0x188] sm:$0xff]
  %v2848 = vld [vmem:[#allocation2 + $0x190] sm:$0xff]
  %v2849 = vld [vmem:[#allocation2 + $0x198] sm:$0xff]
  %v2850 = vld [vmem:[#allocation2 + $0x1a0] sm:$0xff]
  %v2851 = vld [vmem:[#allocation2 + $0x1a8] sm:$0xff]
  %v2852 = vld [vmem:[#allocation2 + $0x1b0] sm:$0xff]
  %v2853 = vld [vmem:[#allocation2 + $0x1b8] sm:$0xff]
  %v2854 = vld [vmem:[%s3] sm:$0xff]
  %v2855 = vld [vmem:[%s3 + $0x8] sm:$0xff]
  %v2856 = vld [vmem:[%s3 + $0x10] sm:$0xff]
  %v2857 = vld [vmem:[%s3 + $0x18] sm:$0xff]
  %v2858 = vld [vmem:[%s3 + $0x20] sm:$0xff]
  %v2859 = vld [vmem:[%s3 + $0x28] sm:$0xff]
  %v2860 = vld [vmem:[%s3 + $0x30] sm:$0xff]
  %v2861 = vld [vmem:[%s3 + $0x38] sm:$0xff]
  %v2862 = vld [vmem:[%s3 + $0x40] sm:$0xff]
  %v2863 = vld [vmem:[%s3 + $0x48] sm:$0xff]
  %v2864 = vld [vmem:[%s3 + $0x50] sm:$0xff]
  %v2865 = vld [vmem:[%s3 + $0x58] sm:$0xff]
  %v2866 = vld [vmem:[%s3 + $0x60] sm:$0xff]
  %v2867 = vld [vmem:[%s3 + $0x68] sm:$0xff]
  %v2868 = vld [vmem:[%s3 + $0x70] sm:$0xff]
  %v2869 = vld [vmem:[%s3 + $0x78] sm:$0xff]
  %2870 = vmatprep.subr.mxu0 0.0
  %2871 = vmatpush1.msra.mxu0 %v2869
  %2872 = vmatprep.subr.mxu0 0.0
  %2873 = vmatpush1.msra.mxu0 %v2868
  %2874 = vmatprep.subr.mxu0 0.0
  %2875 = vmatpush1.msra.mxu0 %v2867
  %2876 = vmatprep.subr.mxu0 0.0
  %2877 = vmatpush1.msra.mxu0 %v2866
  %2878 = vmatprep.subr.mxu0 0.0
  %2879 = vmatpush1.msra.mxu0 %v2865
  %2880 = vmatprep.subr.mxu0 0.0
  %2881 = vmatpush1.msra.mxu0 %v2864
  %2882 = vmatprep.subr.mxu0 0.0
  %2883 = vmatpush1.msra.mxu0 %v2863
  %2884 = vmatprep.subr.mxu0 0.0
  %2885 = vmatpush1.msra.mxu0 %v2862
  %2886 = vmatprep.subr.mxu0 0.0
  %2887 = vmatpush1.msra.mxu0 %v2861
  %2888 = vmatprep.subr.mxu0 0.0
  %2889 = vmatpush1.msra.mxu0 %v2860
  %2890 = vmatprep.subr.mxu0 0.0
  %2891 = vmatpush1.msra.mxu0 %v2859
  %2892 = vmatprep.subr.mxu0 0.0
  %2893 = vmatpush1.msra.mxu0 %v2858
  %2894 = vmatprep.subr.mxu0 0.0
  %2895 = vmatpush1.msra.mxu0 %v2857
  %2896 = vmatprep.subr.mxu0 0.0
  %2897 = vmatpush1.msra.mxu0 %v2856
  %2898 = vmatprep.subr.mxu0 0.0
  %2899 = vmatpush1.msra.mxu0 %v2855
  %2900 = vmatprep.subr.mxu0 0.0
  %2901 = vmatpush1.msra.mxu0 %v2854
  %2902 = vmatprep.subr.mxu0 0.0
  %2903 = vmatpush2.msra.mxu0 0.0
  %2904 = vmatprep.subr.mxu0 0.0
  %2905 = vmatpush2.msra.mxu0 0.0
  %2906 = vmatprep.subr.mxu0 0.0
  %2907 = vmatpush2.msra.mxu0 0.0
  %2908 = vmatprep.subr.mxu0 0.0
  %2909 = vmatpush2.msra.mxu0 0.0
  %2910 = vmatprep.subr.mxu0 0.0
  %2911 = vmatpush2.msra.mxu0 0.0
  %2912 = vmatprep.subr.mxu0 0.0
  %2913 = vmatpush2.msra.mxu0 0.0
  %2914 = vmatprep.subr.mxu0 0.0
  %2915 = vmatpush2.msra.mxu0 0.0
  %2916 = vmatprep.subr.mxu0 0.0
  %2917 = vmatpush2.msra.mxu0 0.0
  %2918 = vmatprep.subr.mxu0 0.0
  %2919 = vmatpush2.msra.mxu0 0.0
  %2920 = vmatprep.subr.mxu0 0.0
  %2921 = vmatpush2.msra.mxu0 0.0
  %2922 = vmatprep.subr.mxu0 0.0
  %2923 = vmatpush2.msra.mxu0 0.0
  %2924 = vmatprep.subr.mxu0 0.0
  %2925 = vmatpush2.msra.mxu0 0.0
  %2926 = vmatprep.subr.mxu0 0.0
  %2927 = vmatpush2.msra.mxu0 0.0
  %2928 = vmatprep.subr.mxu0 0.0
  %2929 = vmatpush2.msra.mxu0 0.0
  %2930 = vmatprep.subr.mxu0 0.0
  %2931 = vmatpush2.msra.mxu0 0.0
  %2932 = vmatprep.subr.mxu0 0.0
  %2933 = vmatpush2.msra.mxu0 0.0
  %2934 = vmatprep.mubr.f32.mxu0 0.0
  %2935 = vmatmul.mubr.f32.gmra.mxu0 %v2685
  %v2936 = vpop.f32.mrf.mxu0
  %v2937 = vadd.f32 0.0, %v2936
  %v2938 = vpop.f32.mrf.mxu0
  %2939 = vmatprep.mubr.f32.mxu0 0.0
  %2940 = vmatmul.mubr.f32.gmra.mxu0 %v2686
  %v2941 = vpop.f32.mrf.mxu0
  %v2942 = vadd.f32 0.0, %v2941
  %v2943 = vpop.f32.mrf.mxu0
  %2944 = vmatprep.mubr.f32.mxu0 0.0
  %2945 = vmatmul.mubr.f32.gmra.mxu0 %v2687
  %v2946 = vpop.f32.mrf.mxu0
  %v2947 = vadd.f32 0.0, %v2946
  %v2948 = vpop.f32.mrf.mxu0
  %2949 = vmatprep.mubr.f32.mxu0 0.0
  %2950 = vmatmul.mubr.f32.gmra.mxu0 %v2688
  %v2951 = vpop.f32.mrf.mxu0
  %v2952 = vadd.f32 0.0, %v2951
  %v2953 = vpop.f32.mrf.mxu0
  %2954 = vmatprep.mubr.f32.mxu0 0.0
  %2955 = vmatmul.mubr.f32.gmra.mxu0 %v2689
  %v2956 = vpop.f32.mrf.mxu0
  %v2957 = vadd.f32 0.0, %v2956
  %v2958 = vpop.f32.mrf.mxu0
  %2959 = vmatprep.mubr.f32.mxu0 0.0
  %2960 = vmatmul.mubr.f32.gmra.mxu0 %v2690
  %v2961 = vpop.f32.mrf.mxu0
  %v2962 = vadd.f32 0.0, %v2961
  %v2963 = vpop.f32.mrf.mxu0
  %2964 = vmatprep.mubr.f32.mxu0 0.0
  %2965 = vmatmul.mubr.f32.gmra.mxu0 %v2691
  %v2966 = vpop.f32.mrf.mxu0
  %v2967 = vadd.f32 0.0, %v2966
  %v2968 = vpop.f32.mrf.mxu0
  %2969 = vmatprep.mubr.f32.mxu0 0.0
  %2970 = vmatmul.mubr.f32.gmra.mxu0 %v2692
  %v2971 = vpop.f32.mrf.mxu0
  %v2972 = vadd.f32 0.0, %v2971
  %v2973 = vpop.f32.mrf.mxu0
  %2974 = vdwg.mxu0
  %v2975 = vadd.f32 %v2846, %v2937
  %v2976 = vadd.f32 %v2847, %v2942
  %v2977 = vadd.f32 %v2848, %v2947
  %v2978 = vadd.f32 %v2849, %v2952
  %v2979 = vadd.f32 %v2850, %v2957
  %v2980 = vadd.f32 %v2851, %v2962
  %v2981 = vadd.f32 %v2852, %v2967
  %v2982 = vadd.f32 %v2853, %v2972
  %v2983 = vtanh.pop %v2975
  %v2984 = vtanh.pop %v2976
  %v2985 = vtanh.pop %v2977
  %v2986 = vtanh.pop %v2978
  %v2987 = vtanh.pop %v2979
  %v2988 = vtanh.pop %v2980
  %v2989 = vtanh.pop %v2981
  %v2990 = vtanh.pop %v2982
  %v2991 = vld [vmem:[%s4] sm:$0xff]
  %v2992 = vld [vmem:[%s4 + $0x8] sm:$0xff]
  %v2993 = vld [vmem:[%s4 + $0x10] sm:$0xff]
  %v2994 = vld [vmem:[%s4 + $0x18] sm:$0xff]
  %v2995 = vld [vmem:[%s4 + $0x20] sm:$0xff]
  %v2996 = vld [vmem:[%s4 + $0x28] sm:$0xff]
  %v2997 = vld [vmem:[%s4 + $0x30] sm:$0xff]
  %v2998 = vld [vmem:[%s4 + $0x38] sm:$0xff]
  %v2999 = vld [vmem:[%s4 + $0x40] sm:$0xff]
  %v3000 = vld [vmem:[%s4 + $0x48] sm:$0xff]
  %v3001 = vld [vmem:[%s4 + $0x50] sm:$0xff]
  %v3002 = vld [vmem:[%s4 + $0x58] sm:$0xff]
  %v3003 = vld [vmem:[%s4 + $0x60] sm:$0xff]
  %v3004 = vld [vmem:[%s4 + $0x68] sm:$0xff]
  %v3005 = vld [vmem:[%s4 + $0x70] sm:$0xff]
  %v3006 = vld [vmem:[%s4 + $0x78] sm:$0xff]
  %v3007 = vld [vmem:[%s4 + $0x80] sm:$0xff]
  %v3008 = vld [vmem:[%s4 + $0x88] sm:$0xff]
  %v3009 = vld [vmem:[%s4 + $0x90] sm:$0xff]
  %v3010 = vld [vmem:[%s4 + $0x98] sm:$0xff]
  %v3011 = vld [vmem:[%s4 + $0xa0] sm:$0xff]
  %v3012 = vld [vmem:[%s4 + $0xa8] sm:$0xff]
  %v3013 = vld [vmem:[%s4 + $0xb0] sm:$0xff]
  %v3014 = vld [vmem:[%s4 + $0xb8] sm:$0xff]
  %v3015 = vld [vmem:[%s4 + $0xc0] sm:$0xff]
  %v3016 = vld [vmem:[%s4 + $0xc8] sm:$0xff]
  %v3017 = vld [vmem:[%s4 + $0xd0] sm:$0xff]
  %v3018 = vld [vmem:[%s4 + $0xd8] sm:$0xff]
  %v3019 = vld [vmem:[%s4 + $0xe0] sm:$0xff]
  %v3020 = vld [vmem:[%s4 + $0xe8] sm:$0xff]
  %v3021 = vld [vmem:[%s4 + $0xf0] sm:$0xff]
  %v3022 = vld [vmem:[%s4 + $0xf8] sm:$0xff]
  %3023 = vmatprep.subr.mxu0 0.0
  %3024 = vmatpush1.msra.mxu0 %v3006
  %3025 = vmatprep.subr.mxu0 0.0
  %3026 = vmatpush1.msra.mxu0 %v3005
  %3027 = vmatprep.subr.mxu0 0.0
  %3028 = vmatpush1.msra.mxu0 %v3004
  %3029 = vmatprep.subr.mxu0 0.0
  %3030 = vmatpush1.msra.mxu0 %v3003
  %3031 = vmatprep.subr.mxu0 0.0
  %3032 = vmatpush1.msra.mxu0 %v3002
  %3033 = vmatprep.subr.mxu0 0.0
  %3034 = vmatpush1.msra.mxu0 %v3001
  %3035 = vmatprep.subr.mxu0 0.0
  %3036 = vmatpush1.msra.mxu0 %v3000
  %3037 = vmatprep.subr.mxu0 0.0
  %3038 = vmatpush1.msra.mxu0 %v2999
  %3039 = vmatprep.subr.mxu0 0.0
  %3040 = vmatpush1.msra.mxu0 %v2998
  %3041 = vmatprep.subr.mxu0 0.0
  %3042 = vmatpush1.msra.mxu0 %v2997
  %3043 = vmatprep.subr.mxu0 0.0
  %3044 = vmatpush1.msra.mxu0 %v2996
  %3045 = vmatprep.subr.mxu0 0.0
  %3046 = vmatpush1.msra.mxu0 %v2995
  %3047 = vmatprep.subr.mxu0 0.0
  %3048 = vmatpush1.msra.mxu0 %v2994
  %3049 = vmatprep.subr.mxu0 0.0
  %3050 = vmatpush1.msra.mxu0 %v2993
  %3051 = vmatprep.subr.mxu0 0.0
  %3052 = vmatpush1.msra.mxu0 %v2992
  %3053 = vmatprep.subr.mxu0 0.0
  %3054 = vmatpush1.msra.mxu0 %v2991
  %3055 = vmatprep.subr.mxu0 0.0
  %3056 = vmatpush2.msra.mxu0 %v3022
  %3057 = vmatprep.subr.mxu0 0.0
  %3058 = vmatpush2.msra.mxu0 %v3021
  %3059 = vmatprep.subr.mxu0 0.0
  %3060 = vmatpush2.msra.mxu0 %v3020
  %3061 = vmatprep.subr.mxu0 0.0
  %3062 = vmatpush2.msra.mxu0 %v3019
  %3063 = vmatprep.subr.mxu0 0.0
  %3064 = vmatpush2.msra.mxu0 %v3018
  %3065 = vmatprep.subr.mxu0 0.0
  %3066 = vmatpush2.msra.mxu0 %v3017
  %3067 = vmatprep.subr.mxu0 0.0
  %3068 = vmatpush2.msra.mxu0 %v3016
  %3069 = vmatprep.subr.mxu0 0.0
  %3070 = vmatpush2.msra.mxu0 %v3015
  %3071 = vmatprep.subr.mxu0 0.0
  %3072 = vmatpush2.msra.mxu0 %v3014
  %3073 = vmatprep.subr.mxu0 0.0
  %3074 = vmatpush2.msra.mxu0 %v3013
  %3075 = vmatprep.subr.mxu0 0.0
  %3076 = vmatpush2.msra.mxu0 %v3012
  %3077 = vmatprep.subr.mxu0 0.0
  %3078 = vmatpush2.msra.mxu0 %v3011
  %3079 = vmatprep.subr.mxu0 0.0
  %3080 = vmatpush2.msra.mxu0 %v3010
  %3081 = vmatprep.subr.mxu0 0.0
  %3082 = vmatpush2.msra.mxu0 %v3009
  %3083 = vmatprep.subr.mxu0 0.0
  %3084 = vmatpush2.msra.mxu0 %v3008
  %3085 = vmatprep.subr.mxu0 0.0
  %3086 = vmatpush2.msra.mxu0 %v3007
  %3087 = vmatprep.mubr.f32.mxu0 %v2830
  %3088 = vmatmul.mubr.f32.gmra.mxu0 %v2983
  %v3089 = vpop.f32.mrf.mxu0
  %v3090 = vadd.f32 %v1056, %v3089
  %v3091 = vpop.f32.mrf.mxu0
  %3092 = vmatprep.mubr.f32.mxu0 %v2831
  %3093 = vmatmul.mubr.f32.gmra.mxu0 %v2984
  %v3094 = vpop.f32.mrf.mxu0
  %v3095 = vadd.f32 %v1056, %v3094
  %v3096 = vpop.f32.mrf.mxu0
  %3097 = vmatprep.mubr.f32.mxu0 %v2832
  %3098 = vmatmul.mubr.f32.gmra.mxu0 %v2985
  %v3099 = vpop.f32.mrf.mxu0
  %v3100 = vadd.f32 %v1056, %v3099
  %v3101 = vpop.f32.mrf.mxu0
  %3102 = vmatprep.mubr.f32.mxu0 %v2833
  %3103 = vmatmul.mubr.f32.gmra.mxu0 %v2986
  %v3104 = vpop.f32.mrf.mxu0
  %v3105 = vadd.f32 %v1056, %v3104
  %v3106 = vpop.f32.mrf.mxu0
  %3107 = vmatprep.mubr.f32.mxu0 %v2834
  %3108 = vmatmul.mubr.f32.gmra.mxu0 %v2987
  %v3109 = vpop.f32.mrf.mxu0
  %v3110 = vadd.f32 %v1056, %v3109
  %v3111 = vpop.f32.mrf.mxu0
  %3112 = vmatprep.mubr.f32.mxu0 %v2835
  %3113 = vmatmul.mubr.f32.gmra.mxu0 %v2988
  %v3114 = vpop.f32.mrf.mxu0
  %v3115 = vadd.f32 %v1056, %v3114
  %v3116 = vpop.f32.mrf.mxu0
  %3117 = vmatprep.mubr.f32.mxu0 %v2836
  %3118 = vmatmul.mubr.f32.gmra.mxu0 %v2989
  %v3119 = vpop.f32.mrf.mxu0
  %v3120 = vadd.f32 %v1056, %v3119
  %v3121 = vpop.f32.mrf.mxu0
  %3122 = vmatprep.mubr.f32.mxu0 %v2837
  %3123 = vmatmul.mubr.f32.gmra.mxu0 %v2990
  %v3124 = vpop.f32.mrf.mxu0
  %v3125 = vadd.f32 %v1056, %v3124
  %v3126 = vpop.f32.mrf.mxu0
  %3127 = vdwg.mxu0
  %v3128 = vtanh.pop %v3090
  %v3129 = vtanh.pop %v3095
  %v3130 = vtanh.pop %v3100
  %v3131 = vtanh.pop %v3105
  %v3132 = vtanh.pop %v3110
  %v3133 = vtanh.pop %v3115
  %v3134 = vtanh.pop %v3120
  %v3135 = vtanh.pop %v3125
  %3136 = vst [vmem:[#allocation3 + $0x30] sm:$0xff] %v3128
  %3137 = vst [vmem:[#allocation3 + $0x70] sm:$0xff] %v3129
  %3138 = vst [vmem:[#allocation3 + $0xb0] sm:$0xff] %v3130
  %3139 = vst [vmem:[#allocation3 + $0xf0] sm:$0xff] %v3131
  %3140 = vst [vmem:[#allocation3 + $0x130] sm:$0xff] %v3132
  %3141 = vst [vmem:[#allocation3 + $0x170] sm:$0xff] %v3133
  %3142 = vst [vmem:[#allocation3 + $0x1b0] sm:$0xff] %v3134
  %3143 = vst [vmem:[#allocation3 + $0x1f0] sm:$0xff] %v3135
  %v3144 = vld [vmem:[#allocation2 + $0x1c0] sm:$0xff]
  %v3145 = vld [vmem:[#allocation2 + $0x1c8] sm:$0xff]
  %v3146 = vld [vmem:[#allocation2 + $0x1d0] sm:$0xff]
  %v3147 = vld [vmem:[#allocation2 + $0x1d8] sm:$0xff]
  %v3148 = vld [vmem:[#allocation2 + $0x1e0] sm:$0xff]
  %v3149 = vld [vmem:[#allocation2 + $0x1e8] sm:$0xff]
  %v3150 = vld [vmem:[#allocation2 + $0x1f0] sm:$0xff]
  %v3151 = vld [vmem:[#allocation2 + $0x1f8] sm:$0xff]
  %v3152 = vld [vmem:[%s3] sm:$0xff]
  %v3153 = vld [vmem:[%s3 + $0x8] sm:$0xff]
  %v3154 = vld [vmem:[%s3 + $0x10] sm:$0xff]
  %v3155 = vld [vmem:[%s3 + $0x18] sm:$0xff]
  %v3156 = vld [vmem:[%s3 + $0x20] sm:$0xff]
  %v3157 = vld [vmem:[%s3 + $0x28] sm:$0xff]
  %v3158 = vld [vmem:[%s3 + $0x30] sm:$0xff]
  %v3159 = vld [vmem:[%s3 + $0x38] sm:$0xff]
  %v3160 = vld [vmem:[%s3 + $0x40] sm:$0xff]
  %v3161 = vld [vmem:[%s3 + $0x48] sm:$0xff]
  %v3162 = vld [vmem:[%s3 + $0x50] sm:$0xff]
  %v3163 = vld [vmem:[%s3 + $0x58] sm:$0xff]
  %v3164 = vld [vmem:[%s3 + $0x60] sm:$0xff]
  %v3165 = vld [vmem:[%s3 + $0x68] sm:$0xff]
  %v3166 = vld [vmem:[%s3 + $0x70] sm:$0xff]
  %v3167 = vld [vmem:[%s3 + $0x78] sm:$0xff]
  %3168 = vmatprep.subr.mxu0 0.0
  %3169 = vmatpush1.msra.mxu0 %v3167
  %3170 = vmatprep.subr.mxu0 0.0
  %3171 = vmatpush1.msra.mxu0 %v3166
  %3172 = vmatprep.subr.mxu0 0.0
  %3173 = vmatpush1.msra.mxu0 %v3165
  %3174 = vmatprep.subr.mxu0 0.0
  %3175 = vmatpush1.msra.mxu0 %v3164
  %3176 = vmatprep.subr.mxu0 0.0
  %3177 = vmatpush1.msra.mxu0 %v3163
  %3178 = vmatprep.subr.mxu0 0.0
  %3179 = vmatpush1.msra.mxu0 %v3162
  %3180 = vmatprep.subr.mxu0 0.0
  %3181 = vmatpush1.msra.mxu0 %v3161
  %3182 = vmatprep.subr.mxu0 0.0
  %3183 = vmatpush1.msra.mxu0 %v3160
  %3184 = vmatprep.subr.mxu0 0.0
  %3185 = vmatpush1.msra.mxu0 %v3159
  %3186 = vmatprep.subr.mxu0 0.0
  %3187 = vmatpush1.msra.mxu0 %v3158
  %3188 = vmatprep.subr.mxu0 0.0
  %3189 = vmatpush1.msra.mxu0 %v3157
  %3190 = vmatprep.subr.mxu0 0.0
  %3191 = vmatpush1.msra.mxu0 %v3156
  %3192 = vmatprep.subr.mxu0 0.0
  %3193 = vmatpush1.msra.mxu0 %v3155
  %3194 = vmatprep.subr.mxu0 0.0
  %3195 = vmatpush1.msra.mxu0 %v3154
  %3196 = vmatprep.subr.mxu0 0.0
  %3197 = vmatpush1.msra.mxu0 %v3153
  %3198 = vmatprep.subr.mxu0 0.0
  %3199 = vmatpush1.msra.mxu0 %v3152
  %3200 = vmatprep.subr.mxu0 0.0
  %3201 = vmatpush2.msra.mxu0 0.0
  %3202 = vmatprep.subr.mxu0 0.0
  %3203 = vmatpush2.msra.mxu0 0.0
  %3204 = vmatprep.subr.mxu0 0.0
  %3205 = vmatpush2.msra.mxu0 0.0
  %3206 = vmatprep.subr.mxu0 0.0
  %3207 = vmatpush2.msra.mxu0 0.0
  %3208 = vmatprep.subr.mxu0 0.0
  %3209 = vmatpush2.msra.mxu0 0.0
  %3210 = vmatprep.subr.mxu0 0.0
  %3211 = vmatpush2.msra.mxu0 0.0
  %3212 = vmatprep.subr.mxu0 0.0
  %3213 = vmatpush2.msra.mxu0 0.0
  %3214 = vmatprep.subr.mxu0 0.0
  %3215 = vmatpush2.msra.mxu0 0.0
  %3216 = vmatprep.subr.mxu0 0.0
  %3217 = vmatpush2.msra.mxu0 0.0
  %3218 = vmatprep.subr.mxu0 0.0
  %3219 = vmatpush2.msra.mxu0 0.0
  %3220 = vmatprep.subr.mxu0 0.0
  %3221 = vmatpush2.msra.mxu0 0.0
  %3222 = vmatprep.subr.mxu0 0.0
  %3223 = vmatpush2.msra.mxu0 0.0
  %3224 = vmatprep.subr.mxu0 0.0
  %3225 = vmatpush2.msra.mxu0 0.0
  %3226 = vmatprep.subr.mxu0 0.0
  %3227 = vmatpush2.msra.mxu0 0.0
  %3228 = vmatprep.subr.mxu0 0.0
  %3229 = vmatpush2.msra.mxu0 0.0
  %3230 = vmatprep.subr.mxu0 0.0
  %3231 = vmatpush2.msra.mxu0 0.0
  %3232 = vmatprep.mubr.f32.mxu0 0.0
  %3233 = vmatmul.mubr.f32.gmra.mxu0 %v2983
  %v3234 = vpop.f32.mrf.mxu0
  %v3235 = vadd.f32 0.0, %v3234
  %v3236 = vpop.f32.mrf.mxu0
  %3237 = vmatprep.mubr.f32.mxu0 0.0
  %3238 = vmatmul.mubr.f32.gmra.mxu0 %v2984
  %v3239 = vpop.f32.mrf.mxu0
  %v3240 = vadd.f32 0.0, %v3239
  %v3241 = vpop.f32.mrf.mxu0
  %3242 = vmatprep.mubr.f32.mxu0 0.0
  %3243 = vmatmul.mubr.f32.gmra.mxu0 %v2985
  %v3244 = vpop.f32.mrf.mxu0
  %v3245 = vadd.f32 0.0, %v3244
  %v3246 = vpop.f32.mrf.mxu0
  %3247 = vmatprep.mubr.f32.mxu0 0.0
  %3248 = vmatmul.mubr.f32.gmra.mxu0 %v2986
  %v3249 = vpop.f32.mrf.mxu0
  %v3250 = vadd.f32 0.0, %v3249
  %v3251 = vpop.f32.mrf.mxu0
  %3252 = vmatprep.mubr.f32.mxu0 0.0
  %3253 = vmatmul.mubr.f32.gmra.mxu0 %v2987
  %v3254 = vpop.f32.mrf.mxu0
  %v3255 = vadd.f32 0.0, %v3254
  %v3256 = vpop.f32.mrf.mxu0
  %3257 = vmatprep.mubr.f32.mxu0 0.0
  %3258 = vmatmul.mubr.f32.gmra.mxu0 %v2988
  %v3259 = vpop.f32.mrf.mxu0
  %v3260 = vadd.f32 0.0, %v3259
  %v3261 = vpop.f32.mrf.mxu0
  %3262 = vmatprep.mubr.f32.mxu0 0.0
  %3263 = vmatmul.mubr.f32.gmra.mxu0 %v2989
  %v3264 = vpop.f32.mrf.mxu0
  %v3265 = vadd.f32 0.0, %v3264
  %v3266 = vpop.f32.mrf.mxu0
  %3267 = vmatprep.mubr.f32.mxu0 0.0
  %3268 = vmatmul.mubr.f32.gmra.mxu0 %v2990
  %v3269 = vpop.f32.mrf.mxu0
  %v3270 = vadd.f32 0.0, %v3269
  %v3271 = vpop.f32.mrf.mxu0
  %3272 = vdwg.mxu0
  %v3273 = vadd.f32 %v3144, %v3235
  %v3274 = vadd.f32 %v3145, %v3240
  %v3275 = vadd.f32 %v3146, %v3245
  %v3276 = vadd.f32 %v3147, %v3250
  %v3277 = vadd.f32 %v3148, %v3255
  %v3278 = vadd.f32 %v3149, %v3260
  %v3279 = vadd.f32 %v3150, %v3265
  %v3280 = vadd.f32 %v3151, %v3270
  %v3281 = vtanh.pop %v3273
  %v3282 = vtanh.pop %v3274
  %v3283 = vtanh.pop %v3275
  %v3284 = vtanh.pop %v3276
  %v3285 = vtanh.pop %v3277
  %v3286 = vtanh.pop %v3278
  %v3287 = vtanh.pop %v3279
  %v3288 = vtanh.pop %v3280
  %v3289 = vld [vmem:[%s4] sm:$0xff]
  %v3290 = vld [vmem:[%s4 + $0x8] sm:$0xff]
  %v3291 = vld [vmem:[%s4 + $0x10] sm:$0xff]
  %v3292 = vld [vmem:[%s4 + $0x18] sm:$0xff]
  %v3293 = vld [vmem:[%s4 + $0x20] sm:$0xff]
  %v3294 = vld [vmem:[%s4 + $0x28] sm:$0xff]
  %v3295 = vld [vmem:[%s4 + $0x30] sm:$0xff]
  %v3296 = vld [vmem:[%s4 + $0x38] sm:$0xff]
  %v3297 = vld [vmem:[%s4 + $0x40] sm:$0xff]
  %v3298 = vld [vmem:[%s4 + $0x48] sm:$0xff]
  %v3299 = vld [vmem:[%s4 + $0x50] sm:$0xff]
  %v3300 = vld [vmem:[%s4 + $0x58] sm:$0xff]
  %v3301 = vld [vmem:[%s4 + $0x60] sm:$0xff]
  %v3302 = vld [vmem:[%s4 + $0x68] sm:$0xff]
  %v3303 = vld [vmem:[%s4 + $0x70] sm:$0xff]
  %v3304 = vld [vmem:[%s4 + $0x78] sm:$0xff]
  %v3305 = vld [vmem:[%s4 + $0x80] sm:$0xff]
  %v3306 = vld [vmem:[%s4 + $0x88] sm:$0xff]
  %v3307 = vld [vmem:[%s4 + $0x90] sm:$0xff]
  %v3308 = vld [vmem:[%s4 + $0x98] sm:$0xff]
  %v3309 = vld [vmem:[%s4 + $0xa0] sm:$0xff]
  %v3310 = vld [vmem:[%s4 + $0xa8] sm:$0xff]
  %v3311 = vld [vmem:[%s4 + $0xb0] sm:$0xff]
  %v3312 = vld [vmem:[%s4 + $0xb8] sm:$0xff]
  %v3313 = vld [vmem:[%s4 + $0xc0] sm:$0xff]
  %v3314 = vld [vmem:[%s4 + $0xc8] sm:$0xff]
  %v3315 = vld [vmem:[%s4 + $0xd0] sm:$0xff]
  %v3316 = vld [vmem:[%s4 + $0xd8] sm:$0xff]
  %v3317 = vld [vmem:[%s4 + $0xe0] sm:$0xff]
  %v3318 = vld [vmem:[%s4 + $0xe8] sm:$0xff]
  %v3319 = vld [vmem:[%s4 + $0xf0] sm:$0xff]
  %v3320 = vld [vmem:[%s4 + $0xf8] sm:$0xff]
  %3321 = vmatprep.subr.mxu0 0.0
  %3322 = vmatpush1.msra.mxu0 %v3304
  %3323 = vmatprep.subr.mxu0 0.0
  %3324 = vmatpush1.msra.mxu0 %v3303
  %3325 = vmatprep.subr.mxu0 0.0
  %3326 = vmatpush1.msra.mxu0 %v3302
  %3327 = vmatprep.subr.mxu0 0.0
  %3328 = vmatpush1.msra.mxu0 %v3301
  %3329 = vmatprep.subr.mxu0 0.0
  %3330 = vmatpush1.msra.mxu0 %v3300
  %3331 = vmatprep.subr.mxu0 0.0
  %3332 = vmatpush1.msra.mxu0 %v3299
  %3333 = vmatprep.subr.mxu0 0.0
  %3334 = vmatpush1.msra.mxu0 %v3298
  %3335 = vmatprep.subr.mxu0 0.0
  %3336 = vmatpush1.msra.mxu0 %v3297
  %3337 = vmatprep.subr.mxu0 0.0
  %3338 = vmatpush1.msra.mxu0 %v3296
  %3339 = vmatprep.subr.mxu0 0.0
  %3340 = vmatpush1.msra.mxu0 %v3295
  %3341 = vmatprep.subr.mxu0 0.0
  %3342 = vmatpush1.msra.mxu0 %v3294
  %3343 = vmatprep.subr.mxu0 0.0
  %3344 = vmatpush1.msra.mxu0 %v3293
  %3345 = vmatprep.subr.mxu0 0.0
  %3346 = vmatpush1.msra.mxu0 %v3292
  %3347 = vmatprep.subr.mxu0 0.0
  %3348 = vmatpush1.msra.mxu0 %v3291
  %3349 = vmatprep.subr.mxu0 0.0
  %3350 = vmatpush1.msra.mxu0 %v3290
  %3351 = vmatprep.subr.mxu0 0.0
  %3352 = vmatpush1.msra.mxu0 %v3289
  %3353 = vmatprep.subr.mxu0 0.0
  %3354 = vmatpush2.msra.mxu0 %v3320
  %3355 = vmatprep.subr.mxu0 0.0
  %3356 = vmatpush2.msra.mxu0 %v3319
  %3357 = vmatprep.subr.mxu0 0.0
  %3358 = vmatpush2.msra.mxu0 %v3318
  %3359 = vmatprep.subr.mxu0 0.0
  %3360 = vmatpush2.msra.mxu0 %v3317
  %3361 = vmatprep.subr.mxu0 0.0
  %3362 = vmatpush2.msra.mxu0 %v3316
  %3363 = vmatprep.subr.mxu0 0.0
  %3364 = vmatpush2.msra.mxu0 %v3315
  %3365 = vmatprep.subr.mxu0 0.0
  %3366 = vmatpush2.msra.mxu0 %v3314
  %3367 = vmatprep.subr.mxu0 0.0
  %3368 = vmatpush2.msra.mxu0 %v3313
  %3369 = vmatprep.subr.mxu0 0.0
  %3370 = vmatpush2.msra.mxu0 %v3312
  %3371 = vmatprep.subr.mxu0 0.0
  %3372 = vmatpush2.msra.mxu0 %v3311
  %3373 = vmatprep.subr.mxu0 0.0
  %3374 = vmatpush2.msra.mxu0 %v3310
  %3375 = vmatprep.subr.mxu0 0.0
  %3376 = vmatpush2.msra.mxu0 %v3309
  %3377 = vmatprep.subr.mxu0 0.0
  %3378 = vmatpush2.msra.mxu0 %v3308
  %3379 = vmatprep.subr.mxu0 0.0
  %3380 = vmatpush2.msra.mxu0 %v3307
  %3381 = vmatprep.subr.mxu0 0.0
  %3382 = vmatpush2.msra.mxu0 %v3306
  %3383 = vmatprep.subr.mxu0 0.0
  %3384 = vmatpush2.msra.mxu0 %v3305
  %3385 = vmatprep.mubr.f32.mxu0 %v3128
  %3386 = vmatmul.mubr.f32.gmra.mxu0 %v3281
  %v3387 = vpop.f32.mrf.mxu0
  %v3388 = vadd.f32 %v1056, %v3387
  %v3389 = vpop.f32.mrf.mxu0
  %3390 = vmatprep.mubr.f32.mxu0 %v3129
  %3391 = vmatmul.mubr.f32.gmra.mxu0 %v3282
  %v3392 = vpop.f32.mrf.mxu0
  %v3393 = vadd.f32 %v1056, %v3392
  %v3394 = vpop.f32.mrf.mxu0
  %3395 = vmatprep.mubr.f32.mxu0 %v3130
  %3396 = vmatmul.mubr.f32.gmra.mxu0 %v3283
  %v3397 = vpop.f32.mrf.mxu0
  %v3398 = vadd.f32 %v1056, %v3397
  %v3399 = vpop.f32.mrf.mxu0
  %3400 = vmatprep.mubr.f32.mxu0 %v3131
  %3401 = vmatmul.mubr.f32.gmra.mxu0 %v3284
  %v3402 = vpop.f32.mrf.mxu0
  %v3403 = vadd.f32 %v1056, %v3402
  %v3404 = vpop.f32.mrf.mxu0
  %3405 = vmatprep.mubr.f32.mxu0 %v3132
  %3406 = vmatmul.mubr.f32.gmra.mxu0 %v3285
  %v3407 = vpop.f32.mrf.mxu0
  %v3408 = vadd.f32 %v1056, %v3407
  %v3409 = vpop.f32.mrf.mxu0
  %3410 = vmatprep.mubr.f32.mxu0 %v3133
  %3411 = vmatmul.mubr.f32.gmra.mxu0 %v3286
  %v3412 = vpop.f32.mrf.mxu0
  %v3413 = vadd.f32 %v1056, %v3412
  %v3414 = vpop.f32.mrf.mxu0
  %3415 = vmatprep.mubr.f32.mxu0 %v3134
  %3416 = vmatmul.mubr.f32.gmra.mxu0 %v3287
  %v3417 = vpop.f32.mrf.mxu0
  %v3418 = vadd.f32 %v1056, %v3417
  %v3419 = vpop.f32.mrf.mxu0
  %3420 = vmatprep.mubr.f32.mxu0 %v3135
  %3421 = vmatmul.mubr.f32.gmra.mxu0 %v3288
  %v3422 = vpop.f32.mrf.mxu0
  %v3423 = vadd.f32 %v1056, %v3422
  %v3424 = vpop.f32.mrf.mxu0
  %3425 = vdwg.mxu0
  %v3426 = vtanh.pop %v3388
  %v3427 = vtanh.pop %v3393
  %v3428 = vtanh.pop %v3398
  %v3429 = vtanh.pop %v3403
  %v3430 = vtanh.pop %v3408
  %v3431 = vtanh.pop %v3413
  %v3432 = vtanh.pop %v3418
  %v3433 = vtanh.pop %v3423
  %3434 = vst [vmem:[#allocation3 + $0x38] sm:$0xff] %v3426
  %3435 = vst [vmem:[#allocation3 + $0x78] sm:$0xff] %v3427
  %3436 = vst [vmem:[#allocation3 + $0xb8] sm:$0xff] %v3428
  %3437 = vst [vmem:[#allocation3 + $0xf8] sm:$0xff] %v3429
  %3438 = vst [vmem:[#allocation3 + $0x138] sm:$0xff] %v3430
  %3439 = vst [vmem:[#allocation3 + $0x178] sm:$0xff] %v3431
  %3440 = vst [vmem:[#allocation3 + $0x1b8] sm:$0xff] %v3432
  %3441 = vst [vmem:[#allocation3 + $0x1f8] sm:$0xff] %v3433
  %s3442 = smul.u32 1024, 1
  %s3443 = sshll.u32 %s3442, 4
  %3444 = dma.done [#allocation5], %s3443
  %v3445 = vld [vmem:[#allocation3] sm:$0xff]
  %v3446 = vld [vmem:[#allocation3 + $0x8] sm:$0xff]
  %v3447 = vld [vmem:[#allocation3 + $0x10] sm:$0xff]
  %v3448 = vld [vmem:[#allocation3 + $0x18] sm:$0xff]
  %v3449 = vld [vmem:[#allocation3 + $0x20] sm:$0xff]
  %v3450 = vld [vmem:[#allocation3 + $0x28] sm:$0xff]
  %v3451 = vld [vmem:[#allocation3 + $0x30] sm:$0xff]
  %v3452 = vld [vmem:[#allocation3 + $0x38] sm:$0xff]
  %v3453 = vld [vmem:[#allocation3 + $0x40] sm:$0xff]
  %v3454 = vld [vmem:[#allocation3 + $0x48] sm:$0xff]
  %v3455 = vld [vmem:[#allocation3 + $0x50] sm:$0xff]
  %v3456 = vld [vmem:[#allocation3 + $0x58] sm:$0xff]
  %v3457 = vld [vmem:[#allocation3 + $0x60] sm:$0xff]
  %v3458 = vld [vmem:[#allocation3 + $0x68] sm:$0xff]
  %v3459 = vld [vmem:[#allocation3 + $0x70] sm:$0xff]
  %v3460 = vld [vmem:[#allocation3 + $0x78] sm:$0xff]
  %v3461 = vld [vmem:[#allocation3 + $0x80] sm:$0xff]
  %v3462 = vld [vmem:[#allocation3 + $0x88] sm:$0xff]
  %v3463 = vld [vmem:[#allocation3 + $0x90] sm:$0xff]
  %v3464 = vld [vmem:[#allocation3 + $0x98] sm:$0xff]
  %v3465 = vld [vmem:[#allocation3 + $0xa0] sm:$0xff]
  %v3466 = vld [vmem:[#allocation3 + $0xa8] sm:$0xff]
  %v3467 = vld [vmem:[#allocation3 + $0xb0] sm:$0xff]
  %v3468 = vld [vmem:[#allocation3 + $0xb8] sm:$0xff]
  %v3469 = vld [vmem:[#allocation3 + $0xc0] sm:$0xff]
  %v3470 = vld [vmem:[#allocation3 + $0xc8] sm:$0xff]
  %v3471 = vld [vmem:[#allocation3 + $0xd0] sm:$0xff]
  %v3472 = vld [vmem:[#allocation3 + $0xd8] sm:$0xff]
  %v3473 = vld [vmem:[#allocation3 + $0xe0] sm:$0xff]
  %v3474 = vld [vmem:[#allocation3 + $0xe8] sm:$0xff]
  %v3475 = vld [vmem:[#allocation3 + $0xf0] sm:$0xff]
  %v3476 = vld [vmem:[#allocation3 + $0xf8] sm:$0xff]
  %v3477 = vld [vmem:[#allocation3 + $0x100] sm:$0xff]
  %v3478 = vld [vmem:[#allocation3 + $0x108] sm:$0xff]
  %v3479 = vld [vmem:[#allocation3 + $0x110] sm:$0xff]
  %v3480 = vld [vmem:[#allocation3 + $0x118] sm:$0xff]
  %v3481 = vld [vmem:[#allocation3 + $0x120] sm:$0xff]
  %v3482 = vld [vmem:[#allocation3 + $0x128] sm:$0xff]
  %v3483 = vld [vmem:[#allocation3 + $0x130] sm:$0xff]
  %v3484 = vld [vmem:[#allocation3 + $0x138] sm:$0xff]
  %v3485 = vld [vmem:[#allocation3 + $0x140] sm:$0xff]
  %v3486 = vld [vmem:[#allocation3 + $0x148] sm:$0xff]
  %v3487 = vld [vmem:[#allocation3 + $0x150] sm:$0xff]
  %v3488 = vld [vmem:[#allocation3 + $0x158] sm:$0xff]
  %v3489 = vld [vmem:[#allocation3 + $0x160] sm:$0xff]
  %v3490 = vld [vmem:[#allocation3 + $0x168] sm:$0xff]
  %v3491 = vld [vmem:[#allocation3 + $0x170] sm:$0xff]
  %v3492 = vld [vmem:[#allocation3 + $0x178] sm:$0xff]
  %v3493 = vld [vmem:[#allocation3 + $0x180] sm:$0xff]
  %v3494 = vld [vmem:[#allocation3 + $0x188] sm:$0xff]
  %v3495 = vld [vmem:[#allocation3 + $0x190] sm:$0xff]
  %v3496 = vld [vmem:[#allocation3 + $0x198] sm:$0xff]
  %v3497 = vld [vmem:[#allocation3 + $0x1a0] sm:$0xff]
  %v3498 = vld [vmem:[#allocation3 + $0x1a8] sm:$0xff]
  %v3499 = vld [vmem:[#allocation3 + $0x1b0] sm:$0xff]
  %v3500 = vld [vmem:[#allocation3 + $0x1b8] sm:$0xff]
  %v3501 = vld [vmem:[#allocation3 + $0x1c0] sm:$0xff]
  %v3502 = vld [vmem:[#allocation3 + $0x1c8] sm:$0xff]
  %v3503 = vld [vmem:[#allocation3 + $0x1d0] sm:$0xff]
  %v3504 = vld [vmem:[#allocation3 + $0x1d8] sm:$0xff]
  %v3505 = vld [vmem:[#allocation3 + $0x1e0] sm:$0xff]
  %v3506 = vld [vmem:[#allocation3 + $0x1e8] sm:$0xff]
  %v3507 = vld [vmem:[#allocation3 + $0x1f0] sm:$0xff]
  %v3508 = vld [vmem:[#allocation3 + $0x1f8] sm:$0xff]
  %v3509 = vld [vmem:[#allocation4] sm:$0xff]
  %v3510 = vld [vmem:[#allocation4 + $0x8] sm:$0xff]
  %v3511 = vld [vmem:[#allocation4 + $0x10] sm:$0xff]
  %v3512 = vld [vmem:[#allocation4 + $0x18] sm:$0xff]
  %v3513 = vld [vmem:[#allocation4 + $0x20] sm:$0xff]
  %v3514 = vld [vmem:[#allocation4 + $0x28] sm:$0xff]
  %v3515 = vld [vmem:[#allocation4 + $0x30] sm:$0xff]
  %v3516 = vld [vmem:[#allocation4 + $0x38] sm:$0xff]
  %v3517 = vld [vmem:[#allocation4 + $0x40] sm:$0xff]
  %v3518 = vld [vmem:[#allocation4 + $0x48] sm:$0xff]
  %v3519 = vld [vmem:[#allocation4 + $0x50] sm:$0xff]
  %v3520 = vld [vmem:[#allocation4 + $0x58] sm:$0xff]
  %v3521 = vld [vmem:[#allocation4 + $0x60] sm:$0xff]
  %v3522 = vld [vmem:[#allocation4 + $0x68] sm:$0xff]
  %v3523 = vld [vmem:[#allocation4 + $0x70] sm:$0xff]
  %v3524 = vld [vmem:[#allocation4 + $0x78] sm:$0xff]
  %v3525 = vld [vmem:[#allocation4 + $0x80] sm:$0xff]
  %v3526 = vld [vmem:[#allocation4 + $0x88] sm:$0xff]
  %v3527 = vld [vmem:[#allocation4 + $0x90] sm:$0xff]
  %v3528 = vld [vmem:[#allocation4 + $0x98] sm:$0xff]
  %v3529 = vld [vmem:[#allocation4 + $0xa0] sm:$0xff]
  %v3530 = vld [vmem:[#allocation4 + $0xa8] sm:$0xff]
  %v3531 = vld [vmem:[#allocation4 + $0xb0] sm:$0xff]
  %v3532 = vld [vmem:[#allocation4 + $0xb8] sm:$0xff]
  %v3533 = vld [vmem:[#allocation4 + $0xc0] sm:$0xff]
  %v3534 = vld [vmem:[#allocation4 + $0xc8] sm:$0xff]
  %v3535 = vld [vmem:[#allocation4 + $0xd0] sm:$0xff]
  %v3536 = vld [vmem:[#allocation4 + $0xd8] sm:$0xff]
  %v3537 = vld [vmem:[#allocation4 + $0xe0] sm:$0xff]
  %v3538 = vld [vmem:[#allocation4 + $0xe8] sm:$0xff]
  %v3539 = vld [vmem:[#allocation4 + $0xf0] sm:$0xff]
  %v3540 = vld [vmem:[#allocation4 + $0xf8] sm:$0xff]
  %v3541 = vld [vmem:[#allocation4 + $0x100] sm:$0xff]
  %v3542 = vld [vmem:[#allocation4 + $0x108] sm:$0xff]
  %v3543 = vld [vmem:[#allocation4 + $0x110] sm:$0xff]
  %v3544 = vld [vmem:[#allocation4 + $0x118] sm:$0xff]
  %v3545 = vld [vmem:[#allocation4 + $0x120] sm:$0xff]
  %v3546 = vld [vmem:[#allocation4 + $0x128] sm:$0xff]
  %v3547 = vld [vmem:[#allocation4 + $0x130] sm:$0xff]
  %v3548 = vld [vmem:[#allocation4 + $0x138] sm:$0xff]
  %v3549 = vld [vmem:[#allocation4 + $0x140] sm:$0xff]
  %v3550 = vld [vmem:[#allocation4 + $0x148] sm:$0xff]
  %v3551 = vld [vmem:[#allocation4 + $0x150] sm:$0xff]
  %v3552 = vld [vmem:[#allocation4 + $0x158] sm:$0xff]
  %v3553 = vld [vmem:[#allocation4 + $0x160] sm:$0xff]
  %v3554 = vld [vmem:[#allocation4 + $0x168] sm:$0xff]
  %v3555 = vld [vmem:[#allocation4 + $0x170] sm:$0xff]
  %v3556 = vld [vmem:[#allocation4 + $0x178] sm:$0xff]
  %v3557 = vld [vmem:[#allocation4 + $0x180] sm:$0xff]
  %v3558 = vld [vmem:[#allocation4 + $0x188] sm:$0xff]
  %v3559 = vld [vmem:[#allocation4 + $0x190] sm:$0xff]
  %v3560 = vld [vmem:[#allocation4 + $0x198] sm:$0xff]
  %v3561 = vld [vmem:[#allocation4 + $0x1a0] sm:$0xff]
  %v3562 = vld [vmem:[#allocation4 + $0x1a8] sm:$0xff]
  %v3563 = vld [vmem:[#allocation4 + $0x1b0] sm:$0xff]
  %v3564 = vld [vmem:[#allocation4 + $0x1b8] sm:$0xff]
  %v3565 = vld [vmem:[#allocation4 + $0x1c0] sm:$0xff]
  %v3566 = vld [vmem:[#allocation4 + $0x1c8] sm:$0xff]
  %v3567 = vld [vmem:[#allocation4 + $0x1d0] sm:$0xff]
  %v3568 = vld [vmem:[#allocation4 + $0x1d8] sm:$0xff]
  %v3569 = vld [vmem:[#allocation4 + $0x1e0] sm:$0xff]
  %v3570 = vld [vmem:[#allocation4 + $0x1e8] sm:$0xff]
  %v3571 = vld [vmem:[#allocation4 + $0x1f0] sm:$0xff]
  %v3572 = vld [vmem:[#allocation4 + $0x1f8] sm:$0xff]
  %v3573 = vld [vmem:[#allocation4 + $0x200] sm:$0xff]
  %v3574 = vld [vmem:[#allocation4 + $0x208] sm:$0xff]
  %v3575 = vld [vmem:[#allocation4 + $0x210] sm:$0xff]
  %v3576 = vld [vmem:[#allocation4 + $0x218] sm:$0xff]
  %v3577 = vld [vmem:[#allocation4 + $0x220] sm:$0xff]
  %v3578 = vld [vmem:[#allocation4 + $0x228] sm:$0xff]
  %v3579 = vld [vmem:[#allocation4 + $0x230] sm:$0xff]
  %v3580 = vld [vmem:[#allocation4 + $0x238] sm:$0xff]
  %v3581 = vld [vmem:[#allocation4 + $0x240] sm:$0xff]
  %v3582 = vld [vmem:[#allocation4 + $0x248] sm:$0xff]
  %v3583 = vld [vmem:[#allocation4 + $0x250] sm:$0xff]
  %v3584 = vld [vmem:[#allocation4 + $0x258] sm:$0xff]
  %v3585 = vld [vmem:[#allocation4 + $0x260] sm:$0xff]
  %v3586 = vld [vmem:[#allocation4 + $0x268] sm:$0xff]
  %v3587 = vld [vmem:[#allocation4 + $0x270] sm:$0xff]
  %v3588 = vld [vmem:[#allocation4 + $0x278] sm:$0xff]
  %v3589 = vld [vmem:[#allocation4 + $0x280] sm:$0xff]
  %v3590 = vld [vmem:[#allocation4 + $0x288] sm:$0xff]
  %v3591 = vld [vmem:[#allocation4 + $0x290] sm:$0xff]
  %v3592 = vld [vmem:[#allocation4 + $0x298] sm:$0xff]
  %v3593 = vld [vmem:[#allocation4 + $0x2a0] sm:$0xff]
  %v3594 = vld [vmem:[#allocation4 + $0x2a8] sm:$0xff]
  %v3595 = vld [vmem:[#allocation4 + $0x2b0] sm:$0xff]
  %v3596 = vld [vmem:[#allocation4 + $0x2b8] sm:$0xff]
  %v3597 = vld [vmem:[#allocation4 + $0x2c0] sm:$0xff]
  %v3598 = vld [vmem:[#allocation4 + $0x2c8] sm:$0xff]
  %v3599 = vld [vmem:[#allocation4 + $0x2d0] sm:$0xff]
  %v3600 = vld [vmem:[#allocation4 + $0x2d8] sm:$0xff]
  %v3601 = vld [vmem:[#allocation4 + $0x2e0] sm:$0xff]
  %v3602 = vld [vmem:[#allocation4 + $0x2e8] sm:$0xff]
  %v3603 = vld [vmem:[#allocation4 + $0x2f0] sm:$0xff]
  %v3604 = vld [vmem:[#allocation4 + $0x2f8] sm:$0xff]
  %v3605 = vld [vmem:[#allocation4 + $0x300] sm:$0xff]
  %v3606 = vld [vmem:[#allocation4 + $0x308] sm:$0xff]
  %v3607 = vld [vmem:[#allocation4 + $0x310] sm:$0xff]
  %v3608 = vld [vmem:[#allocation4 + $0x318] sm:$0xff]
  %v3609 = vld [vmem:[#allocation4 + $0x320] sm:$0xff]
  %v3610 = vld [vmem:[#allocation4 + $0x328] sm:$0xff]
  %v3611 = vld [vmem:[#allocation4 + $0x330] sm:$0xff]
  %v3612 = vld [vmem:[#allocation4 + $0x338] sm:$0xff]
  %v3613 = vld [vmem:[#allocation4 + $0x340] sm:$0xff]
  %v3614 = vld [vmem:[#allocation4 + $0x348] sm:$0xff]
  %v3615 = vld [vmem:[#allocation4 + $0x350] sm:$0xff]
  %v3616 = vld [vmem:[#allocation4 + $0x358] sm:$0xff]
  %v3617 = vld [vmem:[#allocation4 + $0x360] sm:$0xff]
  %v3618 = vld [vmem:[#allocation4 + $0x368] sm:$0xff]
  %v3619 = vld [vmem:[#allocation4 + $0x370] sm:$0xff]
  %v3620 = vld [vmem:[#allocation4 + $0x378] sm:$0xff]
  %v3621 = vld [vmem:[#allocation4 + $0x380] sm:$0xff]
  %v3622 = vld [vmem:[#allocation4 + $0x388] sm:$0xff]
  %v3623 = vld [vmem:[#allocation4 + $0x390] sm:$0xff]
  %v3624 = vld [vmem:[#allocation4 + $0x398] sm:$0xff]
  %v3625 = vld [vmem:[#allocation4 + $0x3a0] sm:$0xff]
  %v3626 = vld [vmem:[#allocation4 + $0x3a8] sm:$0xff]
  %v3627 = vld [vmem:[#allocation4 + $0x3b0] sm:$0xff]
  %v3628 = vld [vmem:[#allocation4 + $0x3b8] sm:$0xff]
  %v3629 = vld [vmem:[#allocation4 + $0x3c0] sm:$0xff]
  %v3630 = vld [vmem:[#allocation4 + $0x3c8] sm:$0xff]
  %v3631 = vld [vmem:[#allocation4 + $0x3d0] sm:$0xff]
  %v3632 = vld [vmem:[#allocation4 + $0x3d8] sm:$0xff]
  %v3633 = vld [vmem:[#allocation4 + $0x3e0] sm:$0xff]
  %v3634 = vld [vmem:[#allocation4 + $0x3e8] sm:$0xff]
  %v3635 = vld [vmem:[#allocation4 + $0x3f0] sm:$0xff]
  %v3636 = vld [vmem:[#allocation4 + $0x3f8] sm:$0xff]
  %v3637 = vld [vmem:[%s7] sm:$0x1]
  %v3639 = vlaneseq
  %v3640 = vshrl.u32 %v3639, 7
  %v3641 = vsub.s32 0, %v3640
  %v3642 = vrot.slane %v3637, %v3641
  %3644 = vmatprep.subr.mxu0 0.0
  %3645 = vmatpush1.msra.mxu0 %v3524
  %3646 = vmatprep.subr.mxu0 0.0
  %3647 = vmatpush1.msra.mxu0 %v3523
  %3648 = vmatprep.subr.mxu0 0.0
  %3649 = vmatpush1.msra.mxu0 %v3522
  %3650 = vmatprep.subr.mxu0 0.0
  %3651 = vmatpush1.msra.mxu0 %v3521
  %3652 = vmatprep.subr.mxu0 0.0
  %3653 = vmatpush1.msra.mxu0 %v3520
  %3654 = vmatprep.subr.mxu0 0.0
  %3655 = vmatpush1.msra.mxu0 %v3519
  %3656 = vmatprep.subr.mxu0 0.0
  %3657 = vmatpush1.msra.mxu0 %v3518
  %3658 = vmatprep.subr.mxu0 0.0
  %3659 = vmatpush1.msra.mxu0 %v3517
  %3660 = vmatprep.subr.mxu0 0.0
  %3661 = vmatpush1.msra.mxu0 %v3516
  %3662 = vmatprep.subr.mxu0 0.0
  %3663 = vmatpush1.msra.mxu0 %v3515
  %3664 = vmatprep.subr.mxu0 0.0
  %3665 = vmatpush1.msra.mxu0 %v3514
  %3666 = vmatprep.subr.mxu0 0.0
  %3667 = vmatpush1.msra.mxu0 %v3513
  %3668 = vmatprep.subr.mxu0 0.0
  %3669 = vmatpush1.msra.mxu0 %v3512
  %3670 = vmatprep.subr.mxu0 0.0
  %3671 = vmatpush1.msra.mxu0 %v3511
  %3672 = vmatprep.subr.mxu0 0.0
  %3673 = vmatpush1.msra.mxu0 %v3510
  %3674 = vmatprep.subr.mxu0 0.0
  %3675 = vmatpush1.msra.mxu0 %v3509
  %3676 = vmatprep.subr.mxu0 0.0
  %3677 = vmatpush2.msra.mxu0 %v3540
  %3678 = vmatprep.subr.mxu0 0.0
  %3679 = vmatpush2.msra.mxu0 %v3539
  %3680 = vmatprep.subr.mxu0 0.0
  %3681 = vmatpush2.msra.mxu0 %v3538
  %3682 = vmatprep.subr.mxu0 0.0
  %3683 = vmatpush2.msra.mxu0 %v3537
  %3684 = vmatprep.subr.mxu0 0.0
  %3685 = vmatpush2.msra.mxu0 %v3536
  %3686 = vmatprep.subr.mxu0 0.0
  %3687 = vmatpush2.msra.mxu0 %v3535
  %3688 = vmatprep.subr.mxu0 0.0
  %3689 = vmatpush2.msra.mxu0 %v3534
  %3690 = vmatprep.subr.mxu0 0.0
  %3691 = vmatpush2.msra.mxu0 %v3533
  %3692 = vmatprep.subr.mxu0 0.0
  %3693 = vmatpush2.msra.mxu0 %v3532
  %3694 = vmatprep.subr.mxu0 0.0
  %3695 = vmatpush2.msra.mxu0 %v3531
  %3696 = vmatprep.subr.mxu0 0.0
  %3697 = vmatpush2.msra.mxu0 %v3530
  %3698 = vmatprep.subr.mxu0 0.0
  %3699 = vmatpush2.msra.mxu0 %v3529
  %3700 = vmatprep.subr.mxu0 0.0
  %3701 = vmatpush2.msra.mxu0 %v3528
  %3702 = vmatprep.subr.mxu0 0.0
  %3703 = vmatpush2.msra.mxu0 %v3527
  %3704 = vmatprep.subr.mxu0 0.0
  %3705 = vmatpush2.msra.mxu0 %v3526
  %3706 = vmatprep.subr.mxu0 0.0
  %3707 = vmatpush2.msra.mxu0 %v3525
  %3708 = vmatprep.mubr.f32.mxu0 %v3446
  %3709 = vmatmul.mubr.f32.gmra.mxu0 %v3445
  %v3710 = vpop.f32.mrf.mxu0
  %v3711 = vadd.f32 %v3642, %v3710
  %v3712 = vpop.f32.mrf.mxu0
  %3713 = vmatprep.mubr.f32.mxu0 %v3454
  %3714 = vmatmul.mubr.f32.gmra.mxu0 %v3453
  %v3715 = vpop.f32.mrf.mxu0
  %v3716 = vadd.f32 %v3642, %v3715
  %v3717 = vpop.f32.mrf.mxu0
  %3718 = vmatprep.mubr.f32.mxu0 %v3462
  %3719 = vmatmul.mubr.f32.gmra.mxu0 %v3461
  %v3720 = vpop.f32.mrf.mxu0
  %v3721 = vadd.f32 %v3642, %v3720
  %v3722 = vpop.f32.mrf.mxu0
  %3723 = vmatprep.mubr.f32.mxu0 %v3470
  %3724 = vmatmul.mubr.f32.gmra.mxu0 %v3469
  %v3725 = vpop.f32.mrf.mxu0
  %v3726 = vadd.f32 %v3642, %v3725
  %v3727 = vpop.f32.mrf.mxu0
  %3728 = vmatprep.mubr.f32.mxu0 %v3478
  %3729 = vmatmul.mubr.f32.gmra.mxu0 %v3477
  %v3730 = vpop.f32.mrf.mxu0
  %v3731 = vadd.f32 %v3642, %v3730
  %v3732 = vpop.f32.mrf.mxu0
  %3733 = vmatprep.mubr.f32.mxu0 %v3486
  %3734 = vmatmul.mubr.f32.gmra.mxu0 %v3485
  %v3735 = vpop.f32.mrf.mxu0
  %v3736 = vadd.f32 %v3642, %v3735
  %v3737 = vpop.f32.mrf.mxu0
  %3738 = vmatprep.mubr.f32.mxu0 %v3494
  %3739 = vmatmul.mubr.f32.gmra.mxu0 %v3493
  %v3740 = vpop.f32.mrf.mxu0
  %v3741 = vadd.f32 %v3642, %v3740
  %v3742 = vpop.f32.mrf.mxu0
  %3743 = vmatprep.mubr.f32.mxu0 %v3502
  %3744 = vmatmul.mubr.f32.gmra.mxu0 %v3501
  %v3745 = vpop.f32.mrf.mxu0
  %v3746 = vadd.f32 %v3642, %v3745
  %v3747 = vpop.f32.mrf.mxu0
  %3748 = vdwg.mxu0
  %3749 = vmatprep.subr.mxu0 0.0
  %3750 = vmatpush1.msra.mxu0 %v3556
  %3751 = vmatprep.subr.mxu0 0.0
  %3752 = vmatpush1.msra.mxu0 %v3555
  %3753 = vmatprep.subr.mxu0 0.0
  %3754 = vmatpush1.msra.mxu0 %v3554
  %3755 = vmatprep.subr.mxu0 0.0
  %3756 = vmatpush1.msra.mxu0 %v3553
  %3757 = vmatprep.subr.mxu0 0.0
  %3758 = vmatpush1.msra.mxu0 %v3552
  %3759 = vmatprep.subr.mxu0 0.0
  %3760 = vmatpush1.msra.mxu0 %v3551
  %3761 = vmatprep.subr.mxu0 0.0
  %3762 = vmatpush1.msra.mxu0 %v3550
  %3763 = vmatprep.subr.mxu0 0.0
  %3764 = vmatpush1.msra.mxu0 %v3549
  %3765 = vmatprep.subr.mxu0 0.0
  %3766 = vmatpush1.msra.mxu0 %v3548
  %3767 = vmatprep.subr.mxu0 0.0
  %3768 = vmatpush1.msra.mxu0 %v3547
  %3769 = vmatprep.subr.mxu0 0.0
  %3770 = vmatpush1.msra.mxu0 %v3546
  %3771 = vmatprep.subr.mxu0 0.0
  %3772 = vmatpush1.msra.mxu0 %v3545
  %3773 = vmatprep.subr.mxu0 0.0
  %3774 = vmatpush1.msra.mxu0 %v3544
  %3775 = vmatprep.subr.mxu0 0.0
  %3776 = vmatpush1.msra.mxu0 %v3543
  %3777 = vmatprep.subr.mxu0 0.0
  %3778 = vmatpush1.msra.mxu0 %v3542
  %3779 = vmatprep.subr.mxu0 0.0
  %3780 = vmatpush1.msra.mxu0 %v3541
  %3781 = vmatprep.subr.mxu0 0.0
  %3782 = vmatpush2.msra.mxu0 %v3572
  %3783 = vmatprep.subr.mxu0 0.0
  %3784 = vmatpush2.msra.mxu0 %v3571
  %3785 = vmatprep.subr.mxu0 0.0
  %3786 = vmatpush2.msra.mxu0 %v3570
  %3787 = vmatprep.subr.mxu0 0.0
  %3788 = vmatpush2.msra.mxu0 %v3569
  %3789 = vmatprep.subr.mxu0 0.0
  %3790 = vmatpush2.msra.mxu0 %v3568
  %3791 = vmatprep.subr.mxu0 0.0
  %3792 = vmatpush2.msra.mxu0 %v3567
  %3793 = vmatprep.subr.mxu0 0.0
  %3794 = vmatpush2.msra.mxu0 %v3566
  %3795 = vmatprep.subr.mxu0 0.0
  %3796 = vmatpush2.msra.mxu0 %v3565
  %3797 = vmatprep.subr.mxu0 0.0
  %3798 = vmatpush2.msra.mxu0 %v3564
  %3799 = vmatprep.subr.mxu0 0.0
  %3800 = vmatpush2.msra.mxu0 %v3563
  %3801 = vmatprep.subr.mxu0 0.0
  %3802 = vmatpush2.msra.mxu0 %v3562
  %3803 = vmatprep.subr.mxu0 0.0
  %3804 = vmatpush2.msra.mxu0 %v3561
  %3805 = vmatprep.subr.mxu0 0.0
  %3806 = vmatpush2.msra.mxu0 %v3560
  %3807 = vmatprep.subr.mxu0 0.0
  %3808 = vmatpush2.msra.mxu0 %v3559
  %3809 = vmatprep.subr.mxu0 0.0
  %3810 = vmatpush2.msra.mxu0 %v3558
  %3811 = vmatprep.subr.mxu0 0.0
  %3812 = vmatpush2.msra.mxu0 %v3557
  %3813 = vmatprep.mubr.f32.mxu0 %v3448
  %3814 = vmatmul.mubr.f32.gmra.mxu0 %v3447
  %v3815 = vpop.f32.mrf.mxu0
  %v3816 = vadd.f32 %v3711, %v3815
  %v3817 = vpop.f32.mrf.mxu0
  %3818 = vmatprep.mubr.f32.mxu0 %v3456
  %3819 = vmatmul.mubr.f32.gmra.mxu0 %v3455
  %v3820 = vpop.f32.mrf.mxu0
  %v3821 = vadd.f32 %v3716, %v3820
  %v3822 = vpop.f32.mrf.mxu0
  %3823 = vmatprep.mubr.f32.mxu0 %v3464
  %3824 = vmatmul.mubr.f32.gmra.mxu0 %v3463
  %v3825 = vpop.f32.mrf.mxu0
  %v3826 = vadd.f32 %v3721, %v3825
  %v3827 = vpop.f32.mrf.mxu0
  %3828 = vmatprep.mubr.f32.mxu0 %v3472
  %3829 = vmatmul.mubr.f32.gmra.mxu0 %v3471
  %v3830 = vpop.f32.mrf.mxu0
  %v3831 = vadd.f32 %v3726, %v3830
  %v3832 = vpop.f32.mrf.mxu0
  %3833 = vmatprep.mubr.f32.mxu0 %v3480
  %3834 = vmatmul.mubr.f32.gmra.mxu0 %v3479
  %v3835 = vpop.f32.mrf.mxu0
  %v3836 = vadd.f32 %v3731, %v3835
  %v3837 = vpop.f32.mrf.mxu0
  %3838 = vmatprep.mubr.f32.mxu0 %v3488
  %3839 = vmatmul.mubr.f32.gmra.mxu0 %v3487
  %v3840 = vpop.f32.mrf.mxu0
  %v3841 = vadd.f32 %v3736, %v3840
  %v3842 = vpop.f32.mrf.mxu0
  %3843 = vmatprep.mubr.f32.mxu0 %v3496
  %3844 = vmatmul.mubr.f32.gmra.mxu0 %v3495
  %v3845 = vpop.f32.mrf.mxu0
  %v3846 = vadd.f32 %v3741, %v3845
  %v3847 = vpop.f32.mrf.mxu0
  %3848 = vmatprep.mubr.f32.mxu0 %v3504
  %3849 = vmatmul.mubr.f32.gmra.mxu0 %v3503
  %v3850 = vpop.f32.mrf.mxu0
  %v3851 = vadd.f32 %v3746, %v3850
  %v3852 = vpop.f32.mrf.mxu0
  %3853 = vdwg.mxu0
  %3854 = vmatprep.subr.mxu0 0.0
  %3855 = vmatpush1.msra.mxu0 %v3588
  %3856 = vmatprep.subr.mxu0 0.0
  %3857 = vmatpush1.msra.mxu0 %v3587
  %3858 = vmatprep.subr.mxu0 0.0
  %3859 = vmatpush1.msra.mxu0 %v3586
  %3860 = vmatprep.subr.mxu0 0.0
  %3861 = vmatpush1.msra.mxu0 %v3585
  %3862 = vmatprep.subr.mxu0 0.0
  %3863 = vmatpush1.msra.mxu0 %v3584
  %3864 = vmatprep.subr.mxu0 0.0
  %3865 = vmatpush1.msra.mxu0 %v3583
  %3866 = vmatprep.subr.mxu0 0.0
  %3867 = vmatpush1.msra.mxu0 %v3582
  %3868 = vmatprep.subr.mxu0 0.0
  %3869 = vmatpush1.msra.mxu0 %v3581
  %3870 = vmatprep.subr.mxu0 0.0
  %3871 = vmatpush1.msra.mxu0 %v3580
  %3872 = vmatprep.subr.mxu0 0.0
  %3873 = vmatpush1.msra.mxu0 %v3579
  %3874 = vmatprep.subr.mxu0 0.0
  %3875 = vmatpush1.msra.mxu0 %v3578
  %3876 = vmatprep.subr.mxu0 0.0
  %3877 = vmatpush1.msra.mxu0 %v3577
  %3878 = vmatprep.subr.mxu0 0.0
  %3879 = vmatpush1.msra.mxu0 %v3576
  %3880 = vmatprep.subr.mxu0 0.0
  %3881 = vmatpush1.msra.mxu0 %v3575
  %3882 = vmatprep.subr.mxu0 0.0
  %3883 = vmatpush1.msra.mxu0 %v3574
  %3884 = vmatprep.subr.mxu0 0.0
  %3885 = vmatpush1.msra.mxu0 %v3573
  %3886 = vmatprep.subr.mxu0 0.0
  %3887 = vmatpush2.msra.mxu0 %v3604
  %3888 = vmatprep.subr.mxu0 0.0
  %3889 = vmatpush2.msra.mxu0 %v3603
  %3890 = vmatprep.subr.mxu0 0.0
  %3891 = vmatpush2.msra.mxu0 %v3602
  %3892 = vmatprep.subr.mxu0 0.0
  %3893 = vmatpush2.msra.mxu0 %v3601
  %3894 = vmatprep.subr.mxu0 0.0
  %3895 = vmatpush2.msra.mxu0 %v3600
  %3896 = vmatprep.subr.mxu0 0.0
  %3897 = vmatpush2.msra.mxu0 %v3599
  %3898 = vmatprep.subr.mxu0 0.0
  %3899 = vmatpush2.msra.mxu0 %v3598
  %3900 = vmatprep.subr.mxu0 0.0
  %3901 = vmatpush2.msra.mxu0 %v3597
  %3902 = vmatprep.subr.mxu0 0.0
  %3903 = vmatpush2.msra.mxu0 %v3596
  %3904 = vmatprep.subr.mxu0 0.0
  %3905 = vmatpush2.msra.mxu0 %v3595
  %3906 = vmatprep.subr.mxu0 0.0
  %3907 = vmatpush2.msra.mxu0 %v3594
  %3908 = vmatprep.subr.mxu0 0.0
  %3909 = vmatpush2.msra.mxu0 %v3593
  %3910 = vmatprep.subr.mxu0 0.0
  %3911 = vmatpush2.msra.mxu0 %v3592
  %3912 = vmatprep.subr.mxu0 0.0
  %3913 = vmatpush2.msra.mxu0 %v3591
  %3914 = vmatprep.subr.mxu0 0.0
  %3915 = vmatpush2.msra.mxu0 %v3590
  %3916 = vmatprep.subr.mxu0 0.0
  %3917 = vmatpush2.msra.mxu0 %v3589
  %3918 = vmatprep.mubr.f32.mxu0 %v3450
  %3919 = vmatmul.mubr.f32.gmra.mxu0 %v3449
  %v3920 = vpop.f32.mrf.mxu0
  %v3921 = vadd.f32 %v3816, %v3920
  %v3922 = vpop.f32.mrf.mxu0
  %3923 = vmatprep.mubr.f32.mxu0 %v3458
  %3924 = vmatmul.mubr.f32.gmra.mxu0 %v3457
  %v3925 = vpop.f32.mrf.mxu0
  %v3926 = vadd.f32 %v3821, %v3925
  %v3927 = vpop.f32.mrf.mxu0
  %3928 = vmatprep.mubr.f32.mxu0 %v3466
  %3929 = vmatmul.mubr.f32.gmra.mxu0 %v3465
  %v3930 = vpop.f32.mrf.mxu0
  %v3931 = vadd.f32 %v3826, %v3930
  %v3932 = vpop.f32.mrf.mxu0
  %3933 = vmatprep.mubr.f32.mxu0 %v3474
  %3934 = vmatmul.mubr.f32.gmra.mxu0 %v3473
  %v3935 = vpop.f32.mrf.mxu0
  %v3936 = vadd.f32 %v3831, %v3935
  %v3937 = vpop.f32.mrf.mxu0
  %3938 = vmatprep.mubr.f32.mxu0 %v3482
  %3939 = vmatmul.mubr.f32.gmra.mxu0 %v3481
  %v3940 = vpop.f32.mrf.mxu0
  %v3941 = vadd.f32 %v3836, %v3940
  %v3942 = vpop.f32.mrf.mxu0
  %3943 = vmatprep.mubr.f32.mxu0 %v3490
  %3944 = vmatmul.mubr.f32.gmra.mxu0 %v3489
  %v3945 = vpop.f32.mrf.mxu0
  %v3946 = vadd.f32 %v3841, %v3945
  %v3947 = vpop.f32.mrf.mxu0
  %3948 = vmatprep.mubr.f32.mxu0 %v3498
  %3949 = vmatmul.mubr.f32.gmra.mxu0 %v3497
  %v3950 = vpop.f32.mrf.mxu0
  %v3951 = vadd.f32 %v3846, %v3950
  %v3952 = vpop.f32.mrf.mxu0
  %3953 = vmatprep.mubr.f32.mxu0 %v3506
  %3954 = vmatmul.mubr.f32.gmra.mxu0 %v3505
  %v3955 = vpop.f32.mrf.mxu0
  %v3956 = vadd.f32 %v3851, %v3955
  %v3957 = vpop.f32.mrf.mxu0
  %3958 = vdwg.mxu0
  %3959 = vmatprep.subr.mxu0 0.0
  %3960 = vmatpush1.msra.mxu0 %v3620
  %3961 = vmatprep.subr.mxu0 0.0
  %3962 = vmatpush1.msra.mxu0 %v3619
  %3963 = vmatprep.subr.mxu0 0.0
  %3964 = vmatpush1.msra.mxu0 %v3618
  %3965 = vmatprep.subr.mxu0 0.0
  %3966 = vmatpush1.msra.mxu0 %v3617
  %3967 = vmatprep.subr.mxu0 0.0
  %3968 = vmatpush1.msra.mxu0 %v3616
  %3969 = vmatprep.subr.mxu0 0.0
  %3970 = vmatpush1.msra.mxu0 %v3615
  %3971 = vmatprep.subr.mxu0 0.0
  %3972 = vmatpush1.msra.mxu0 %v3614
  %3973 = vmatprep.subr.mxu0 0.0
  %3974 = vmatpush1.msra.mxu0 %v3613
  %3975 = vmatprep.subr.mxu0 0.0
  %3976 = vmatpush1.msra.mxu0 %v3612
  %3977 = vmatprep.subr.mxu0 0.0
  %3978 = vmatpush1.msra.mxu0 %v3611
  %3979 = vmatprep.subr.mxu0 0.0
  %3980 = vmatpush1.msra.mxu0 %v3610
  %3981 = vmatprep.subr.mxu0 0.0
  %3982 = vmatpush1.msra.mxu0 %v3609
  %3983 = vmatprep.subr.mxu0 0.0
  %3984 = vmatpush1.msra.mxu0 %v3608
  %3985 = vmatprep.subr.mxu0 0.0
  %3986 = vmatpush1.msra.mxu0 %v3607
  %3987 = vmatprep.subr.mxu0 0.0
  %3988 = vmatpush1.msra.mxu0 %v3606
  %3989 = vmatprep.subr.mxu0 0.0
  %3990 = vmatpush1.msra.mxu0 %v3605
  %3991 = vmatprep.subr.mxu0 0.0
  %3992 = vmatpush2.msra.mxu0 %v3636
  %3993 = vmatprep.subr.mxu0 0.0
  %3994 = vmatpush2.msra.mxu0 %v3635
  %3995 = vmatprep.subr.mxu0 0.0
  %3996 = vmatpush2.msra.mxu0 %v3634
  %3997 = vmatprep.subr.mxu0 0.0
  %3998 = vmatpush2.msra.mxu0 %v3633
  %3999 = vmatprep.subr.mxu0 0.0
  %4000 = vmatpush2.msra.mxu0 %v3632
  %4001 = vmatprep.subr.mxu0 0.0
  %4002 = vmatpush2.msra.mxu0 %v3631
  %4003 = vmatprep.subr.mxu0 0.0
  %4004 = vmatpush2.msra.mxu0 %v3630
  %4005 = vmatprep.subr.mxu0 0.0
  %4006 = vmatpush2.msra.mxu0 %v3629
  %4007 = vmatprep.subr.mxu0 0.0
  %4008 = vmatpush2.msra.mxu0 %v3628
  %4009 = vmatprep.subr.mxu0 0.0
  %4010 = vmatpush2.msra.mxu0 %v3627
  %4011 = vmatprep.subr.mxu0 0.0
  %4012 = vmatpush2.msra.mxu0 %v3626
  %4013 = vmatprep.subr.mxu0 0.0
  %4014 = vmatpush2.msra.mxu0 %v3625
  %4015 = vmatprep.subr.mxu0 0.0
  %4016 = vmatpush2.msra.mxu0 %v3624
  %4017 = vmatprep.subr.mxu0 0.0
  %4018 = vmatpush2.msra.mxu0 %v3623
  %4019 = vmatprep.subr.mxu0 0.0
  %4020 = vmatpush2.msra.mxu0 %v3622
  %4021 = vmatprep.subr.mxu0 0.0
  %4022 = vmatpush2.msra.mxu0 %v3621
  %4023 = vmatprep.mubr.f32.mxu0 %v3452
  %4024 = vmatmul.mubr.f32.gmra.mxu0 %v3451
  %v4025 = vpop.f32.mrf.mxu0
  %v4026 = vadd.f32 %v3921, %v4025
  %v4027 = vpop.f32.mrf.mxu0
  %4028 = vmatprep.mubr.f32.mxu0 %v3460
  %4029 = vmatmul.mubr.f32.gmra.mxu0 %v3459
  %v4030 = vpop.f32.mrf.mxu0
  %v4031 = vadd.f32 %v3926, %v4030
  %v4032 = vpop.f32.mrf.mxu0
  %4033 = vmatprep.mubr.f32.mxu0 %v3468
  %4034 = vmatmul.mubr.f32.gmra.mxu0 %v3467
  %v4035 = vpop.f32.mrf.mxu0
  %v4036 = vadd.f32 %v3931, %v4035
  %v4037 = vpop.f32.mrf.mxu0
  %4038 = vmatprep.mubr.f32.mxu0 %v3476
  %4039 = vmatmul.mubr.f32.gmra.mxu0 %v3475
  %v4040 = vpop.f32.mrf.mxu0
  %v4041 = vadd.f32 %v3936, %v4040
  %v4042 = vpop.f32.mrf.mxu0
  %4043 = vmatprep.mubr.f32.mxu0 %v3484
  %4044 = vmatmul.mubr.f32.gmra.mxu0 %v3483
  %v4045 = vpop.f32.mrf.mxu0
  %v4046 = vadd.f32 %v3941, %v4045
  %v4047 = vpop.f32.mrf.mxu0
  %4048 = vmatprep.mubr.f32.mxu0 %v3492
  %4049 = vmatmul.mubr.f32.gmra.mxu0 %v3491
  %v4050 = vpop.f32.mrf.mxu0
  %v4051 = vadd.f32 %v3946, %v4050
  %v4052 = vpop.f32.mrf.mxu0
  %4053 = vmatprep.mubr.f32.mxu0 %v3500
  %4054 = vmatmul.mubr.f32.gmra.mxu0 %v3499
  %v4055 = vpop.f32.mrf.mxu0
  %v4056 = vadd.f32 %v3951, %v4055
  %v4057 = vpop.f32.mrf.mxu0
  %4058 = vmatprep.mubr.f32.mxu0 %v3508
  %4059 = vmatmul.mubr.f32.gmra.mxu0 %v3507
  %v4060 = vpop.f32.mrf.mxu0
  %v4061 = vadd.f32 %v3956, %v4060
  %v4062 = vpop.f32.mrf.mxu0
  %4063 = vdwg.mxu0
  %v4064 = vtanh.pop %v4026
  %v4065 = vtanh.pop %v4031
  %v4066 = vtanh.pop %v4036
  %v4067 = vtanh.pop %v4041
  %v4068 = vtanh.pop %v4046
  %v4069 = vtanh.pop %v4051
  %v4070 = vtanh.pop %v4056
  %v4071 = vtanh.pop %v4061
  %v4072 = vld [vmem:[%s8] sm:$0xff]
  %v4073 = vld [vmem:[%s8 + $0x8] sm:$0xff]
  %v4074 = vld [vmem:[%s8 + $0x10] sm:$0xff]
  %v4075 = vld [vmem:[%s8 + $0x18] sm:$0xff]
  %v4076 = vld [vmem:[%s8 + $0x20] sm:$0xff]
  %v4077 = vld [vmem:[%s8 + $0x28] sm:$0xff]
  %v4078 = vld [vmem:[%s8 + $0x30] sm:$0xff]
  %v4079 = vld [vmem:[%s8 + $0x38] sm:$0xff]
  %v4080 = vld [vmem:[%s9] sm:$0x1]
  %v4082 = vlaneseq
  %v4083 = vshrl.u32 %v4082, 7
  %v4084 = vsub.s32 0, %v4083
  %v4085 = vrot.slane %v4080, %v4084
  %vm4087 = vcmask 523264
  %v4089 = vsel %vm4087, %v4064, 0
  %v4092 = vsel %vm4087, %v4065, 0
  %v4095 = vsel %vm4087, %v4066, 0
  %v4098 = vsel %vm4087, %v4067, 0
  %v4101 = vsel %vm4087, %v4068, 0
  %v4104 = vsel %vm4087, %v4069, 0
  %v4107 = vsel %vm4087, %v4070, 0
  %v4110 = vsel %vm4087, %v4071, 0
  %4112 = vmatprep.subr.mxu0 0.0
  %4113 = vmatpush1.msra.mxu0 0.0
  %4114 = vmatprep.subr.mxu0 0.0
  %4115 = vmatpush1.msra.mxu0 0.0
  %4116 = vmatprep.subr.mxu0 0.0
  %4117 = vmatpush1.msra.mxu0 0.0
  %4118 = vmatprep.subr.mxu0 0.0
  %4119 = vmatpush1.msra.mxu0 0.0
  %4120 = vmatprep.subr.mxu0 0.0
  %4121 = vmatpush1.msra.mxu0 0.0
  %4122 = vmatprep.subr.mxu0 0.0
  %4123 = vmatpush1.msra.mxu0 0.0
  %4124 = vmatprep.subr.mxu0 0.0
  %4125 = vmatpush1.msra.mxu0 0.0
  %4126 = vmatprep.subr.mxu0 0.0
  %4127 = vmatpush1.msra.mxu0 0.0
  %4128 = vmatprep.subr.mxu0 0.0
  %4129 = vmatpush1.msra.mxu0 %v4079
  %4130 = vmatprep.subr.mxu0 0.0
  %4131 = vmatpush1.msra.mxu0 %v4078
  %4132 = vmatprep.subr.mxu0 0.0
  %4133 = vmatpush1.msra.mxu0 %v4077
  %4134 = vmatprep.subr.mxu0 0.0
  %4135 = vmatpush1.msra.mxu0 %v4076
  %4136 = vmatprep.subr.mxu0 0.0
  %4137 = vmatpush1.msra.mxu0 %v4075
  %4138 = vmatprep.subr.mxu0 0.0
  %4139 = vmatpush1.msra.mxu0 %v4074
  %4140 = vmatprep.subr.mxu0 0.0
  %4141 = vmatpush1.msra.mxu0 %v4073
  %4142 = vmatprep.subr.mxu0 0.0
  %4143 = vmatpush1.msra.mxu0 %v4072
  %4144 = vmatprep.subr.mxu0 0.0
  %4145 = vmatpush2.msra.mxu0 0.0
  %4146 = vmatprep.subr.mxu0 0.0
  %4147 = vmatpush2.msra.mxu0 0.0
  %4148 = vmatprep.subr.mxu0 0.0
  %4149 = vmatpush2.msra.mxu0 0.0
  %4150 = vmatprep.subr.mxu0 0.0
  %4151 = vmatpush2.msra.mxu0 0.0
  %4152 = vmatprep.subr.mxu0 0.0
  %4153 = vmatpush2.msra.mxu0 0.0
  %4154 = vmatprep.subr.mxu0 0.0
  %4155 = vmatpush2.msra.mxu0 0.0
  %4156 = vmatprep.subr.mxu0 0.0
  %4157 = vmatpush2.msra.mxu0 0.0
  %4158 = vmatprep.subr.mxu0 0.0
  %4159 = vmatpush2.msra.mxu0 0.0
  %4160 = vmatprep.subr.mxu0 0.0
  %4161 = vmatpush2.msra.mxu0 0.0
  %4162 = vmatprep.subr.mxu0 0.0
  %4163 = vmatpush2.msra.mxu0 0.0
  %4164 = vmatprep.subr.mxu0 0.0
  %4165 = vmatpush2.msra.mxu0 0.0
  %4166 = vmatprep.subr.mxu0 0.0
  %4167 = vmatpush2.msra.mxu0 0.0
  %4168 = vmatprep.subr.mxu0 0.0
  %4169 = vmatpush2.msra.mxu0 0.0
  %4170 = vmatprep.subr.mxu0 0.0
  %4171 = vmatpush2.msra.mxu0 0.0
  %4172 = vmatprep.subr.mxu0 0.0
  %4173 = vmatpush2.msra.mxu0 0.0
  %4174 = vmatprep.subr.mxu0 0.0
  %4175 = vmatpush2.msra.mxu0 0.0
  %4176 = vmatprep.mubr.f32.mxu0 0.0
  %4177 = vmatmul.mubr.f32.gmra.mxu0 %v4089
  %v4178 = vpop.f32.mrf.mxu0
  %v4179 = vadd.f32 %v4085, %v4178
  %v4180 = vpop.f32.mrf.mxu0
  %4181 = vmatprep.mubr.f32.mxu0 0.0
  %4182 = vmatmul.mubr.f32.gmra.mxu0 %v4092
  %v4183 = vpop.f32.mrf.mxu0
  %v4184 = vadd.f32 %v4085, %v4183
  %v4185 = vpop.f32.mrf.mxu0
  %4186 = vmatprep.mubr.f32.mxu0 0.0
  %4187 = vmatmul.mubr.f32.gmra.mxu0 %v4095
  %v4188 = vpop.f32.mrf.mxu0
  %v4189 = vadd.f32 %v4085, %v4188
  %v4190 = vpop.f32.mrf.mxu0
  %4191 = vmatprep.mubr.f32.mxu0 0.0
  %4192 = vmatmul.mubr.f32.gmra.mxu0 %v4098
  %v4193 = vpop.f32.mrf.mxu0
  %v4194 = vadd.f32 %v4085, %v4193
  %v4195 = vpop.f32.mrf.mxu0
  %4196 = vmatprep.mubr.f32.mxu0 0.0
  %4197 = vmatmul.mubr.f32.gmra.mxu0 %v4101
  %v4198 = vpop.f32.mrf.mxu0
  %v4199 = vadd.f32 %v4085, %v4198
  %v4200 = vpop.f32.mrf.mxu0
  %4201 = vmatprep.mubr.f32.mxu0 0.0
  %4202 = vmatmul.mubr.f32.gmra.mxu0 %v4104
  %v4203 = vpop.f32.mrf.mxu0
  %v4204 = vadd.f32 %v4085, %v4203
  %v4205 = vpop.f32.mrf.mxu0
  %4206 = vmatprep.mubr.f32.mxu0 0.0
  %4207 = vmatmul.mubr.f32.gmra.mxu0 %v4107
  %v4208 = vpop.f32.mrf.mxu0
  %v4209 = vadd.f32 %v4085, %v4208
  %v4210 = vpop.f32.mrf.mxu0
  %4211 = vmatprep.mubr.f32.mxu0 0.0
  %4212 = vmatmul.mubr.f32.gmra.mxu0 %v4110
  %v4213 = vpop.f32.mrf.mxu0
  %v4214 = vadd.f32 %v4085, %v4213
  %v4215 = vpop.f32.mrf.mxu0
  %4216 = vdwg.mxu0
  %v4217 = vtanh.pop %v4179
  %v4218 = vtanh.pop %v4184
  %v4219 = vtanh.pop %v4189
  %v4220 = vtanh.pop %v4194
  %v4221 = vtanh.pop %v4199
  %v4222 = vtanh.pop %v4204
  %v4223 = vtanh.pop %v4209
  %v4224 = vtanh.pop %v4214
  %v4225 = vld [vmem:[%s10] sm:$0xff]
  %v4226 = vld [vmem:[%s10 + $0x8] sm:$0xff]
  %v4227 = vld [vmem:[%s10 + $0x10] sm:$0xff]
  %v4228 = vld [vmem:[%s10 + $0x18] sm:$0xff]
  %v4229 = vld [vmem:[%s11] sm:$0x1]
  %v4231 = vlaneseq
  %v4232 = vshrl.u32 %v4231, 7
  %v4233 = vsub.s32 0, %v4232
  %v4234 = vrot.slane %v4229, %v4233
  %vm4236 = vcmask 261120
  %v4238 = vsel %vm4236, %v4217, 0
  %v4241 = vsel %vm4236, %v4218, 0
  %v4244 = vsel %vm4236, %v4219, 0
  %v4247 = vsel %vm4236, %v4220, 0
  %v4250 = vsel %vm4236, %v4221, 0
  %v4253 = vsel %vm4236, %v4222, 0
  %v4256 = vsel %vm4236, %v4223, 0
  %v4259 = vsel %vm4236, %v4224, 0
  %4261 = vmatprep.subr.mxu0 0.0
  %4262 = vmatpush1.msra.mxu0 0.0
  %4263 = vmatprep.subr.mxu0 0.0
  %4264 = vmatpush1.msra.mxu0 0.0
  %4265 = vmatprep.subr.mxu0 0.0
  %4266 = vmatpush1.msra.mxu0 0.0
  %4267 = vmatprep.subr.mxu0 0.0
  %4268 = vmatpush1.msra.mxu0 0.0
  %4269 = vmatprep.subr.mxu0 0.0
  %4270 = vmatpush1.msra.mxu0 0.0
  %4271 = vmatprep.subr.mxu0 0.0
  %4272 = vmatpush1.msra.mxu0 0.0
  %4273 = vmatprep.subr.mxu0 0.0
  %4274 = vmatpush1.msra.mxu0 0.0
  %4275 = vmatprep.subr.mxu0 0.0
  %4276 = vmatpush1.msra.mxu0 0.0
  %4277 = vmatprep.subr.mxu0 0.0
  %4278 = vmatpush1.msra.mxu0 0.0
  %4279 = vmatprep.subr.mxu0 0.0
  %4280 = vmatpush1.msra.mxu0 0.0
  %4281 = vmatprep.subr.mxu0 0.0
  %4282 = vmatpush1.msra.mxu0 0.0
  %4283 = vmatprep.subr.mxu0 0.0
  %4284 = vmatpush1.msra.mxu0 0.0
  %4285 = vmatprep.subr.mxu0 0.0
  %4286 = vmatpush1.msra.mxu0 %v4228
  %4287 = vmatprep.subr.mxu0 0.0
  %4288 = vmatpush1.msra.mxu0 %v4227
  %4289 = vmatprep.subr.mxu0 0.0
  %4290 = vmatpush1.msra.mxu0 %v4226
  %4291 = vmatprep.subr.mxu0 0.0
  %4292 = vmatpush1.msra.mxu0 %v4225
  %4293 = vmatprep.subr.mxu0 0.0
  %4294 = vmatpush2.msra.mxu0 0.0
  %4295 = vmatprep.subr.mxu0 0.0
  %4296 = vmatpush2.msra.mxu0 0.0
  %4297 = vmatprep.subr.mxu0 0.0
  %4298 = vmatpush2.msra.mxu0 0.0
  %4299 = vmatprep.subr.mxu0 0.0
  %4300 = vmatpush2.msra.mxu0 0.0
  %4301 = vmatprep.subr.mxu0 0.0
  %4302 = vmatpush2.msra.mxu0 0.0
  %4303 = vmatprep.subr.mxu0 0.0
  %4304 = vmatpush2.msra.mxu0 0.0
  %4305 = vmatprep.subr.mxu0 0.0
  %4306 = vmatpush2.msra.mxu0 0.0
  %4307 = vmatprep.subr.mxu0 0.0
  %4308 = vmatpush2.msra.mxu0 0.0
  %4309 = vmatprep.subr.mxu0 0.0
  %4310 = vmatpush2.msra.mxu0 0.0
  %4311 = vmatprep.subr.mxu0 0.0
  %4312 = vmatpush2.msra.mxu0 0.0
  %4313 = vmatprep.subr.mxu0 0.0
  %4314 = vmatpush2.msra.mxu0 0.0
  %4315 = vmatprep.subr.mxu0 0.0
  %4316 = vmatpush2.msra.mxu0 0.0
  %4317 = vmatprep.subr.mxu0 0.0
  %4318 = vmatpush2.msra.mxu0 0.0
  %4319 = vmatprep.subr.mxu0 0.0
  %4320 = vmatpush2.msra.mxu0 0.0
  %4321 = vmatprep.subr.mxu0 0.0
  %4322 = vmatpush2.msra.mxu0 0.0
  %4323 = vmatprep.subr.mxu0 0.0
  %4324 = vmatpush2.msra.mxu0 0.0
  %4325 = vmatprep.mubr.f32.mxu0 0.0
  %4326 = vmatmul.mubr.f32.gmra.mxu0 %v4238
  %v4327 = vpop.f32.mrf.mxu0
  %v4328 = vadd.f32 %v4234, %v4327
  %v4329 = vpop.f32.mrf.mxu0
  %4330 = vmatprep.mubr.f32.mxu0 0.0
  %4331 = vmatmul.mubr.f32.gmra.mxu0 %v4241
  %v4332 = vpop.f32.mrf.mxu0
  %v4333 = vadd.f32 %v4234, %v4332
  %v4334 = vpop.f32.mrf.mxu0
  %4335 = vmatprep.mubr.f32.mxu0 0.0
  %4336 = vmatmul.mubr.f32.gmra.mxu0 %v4244
  %v4337 = vpop.f32.mrf.mxu0
  %v4338 = vadd.f32 %v4234, %v4337
  %v4339 = vpop.f32.mrf.mxu0
  %4340 = vmatprep.mubr.f32.mxu0 0.0
  %4341 = vmatmul.mubr.f32.gmra.mxu0 %v4247
  %v4342 = vpop.f32.mrf.mxu0
  %v4343 = vadd.f32 %v4234, %v4342
  %v4344 = vpop.f32.mrf.mxu0
  %4345 = vmatprep.mubr.f32.mxu0 0.0
  %4346 = vmatmul.mubr.f32.gmra.mxu0 %v4250
  %v4347 = vpop.f32.mrf.mxu0
  %v4348 = vadd.f32 %v4234, %v4347
  %v4349 = vpop.f32.mrf.mxu0
  %4350 = vmatprep.mubr.f32.mxu0 0.0
  %4351 = vmatmul.mubr.f32.gmra.mxu0 %v4253
  %v4352 = vpop.f32.mrf.mxu0
  %v4353 = vadd.f32 %v4234, %v4352
  %v4354 = vpop.f32.mrf.mxu0
  %4355 = vmatprep.mubr.f32.mxu0 0.0
  %4356 = vmatmul.mubr.f32.gmra.mxu0 %v4256
  %v4357 = vpop.f32.mrf.mxu0
  %v4358 = vadd.f32 %v4234, %v4357
  %v4359 = vpop.f32.mrf.mxu0
  %4360 = vmatprep.mubr.f32.mxu0 0.0
  %4361 = vmatmul.mubr.f32.gmra.mxu0 %v4259
  %v4362 = vpop.f32.mrf.mxu0
  %v4363 = vadd.f32 %v4234, %v4362
  %v4364 = vpop.f32.mrf.mxu0
  %4365 = vdwg.mxu0
  %4366 = vst.msk [vmem:[%s12] sm:$0xff] %vm409, %v4328
  %4367 = vst.msk [vmem:[%s12 + $0x8] sm:$0xff] %vm409, %v4333
  %4368 = vst.msk [vmem:[%s12 + $0x10] sm:$0xff] %vm409, %v4338
  %4369 = vst.msk [vmem:[%s12 + $0x18] sm:$0xff] %vm409, %v4343
  %4370 = vst.msk [vmem:[%s12 + $0x20] sm:$0xff] %vm409, %v4348
  %4371 = vst.msk [vmem:[%s12 + $0x28] sm:$0xff] %vm409, %v4353
  %4372 = vst.msk [vmem:[%s12 + $0x30] sm:$0xff] %vm409, %v4358
  %4373 = vst.msk [vmem:[%s12 + $0x38] sm:$0xff] %vm409, %v4363
  // Predicated region
  $region80: #{tpu_custom_call.1} parent=0 // pred_check
    _
  $region81: #{tpu_custom_call.1} parent=0 // pred_check_branch
    %4375 = sbr.rel (0) target = $region83
  $region82: #{tpu_custom_call.1} parent=0 // pred_region
    _
  $region83: #{tpu_custom_call.1} parent=0 // pred_fallthru
    _
  // Predicated region
  $region84: #{tpu_custom_call.1} parent=0 // pred_check
    _
  $region85: #{tpu_custom_call.1} parent=0 // pred_check_branch
    %4377 = sbr.rel (0) target = $region87
  $region86: #{tpu_custom_call.1} parent=0 // pred_region
    _
  $region87: #{tpu_custom_call.1} parent=0 // pred_fallthru
    _
  %4378 = vsyncmov [#allocation5]
  %s4379 = vpop.sfrf %4378
  %p4380 = scmp.eq.s32.totalorder %s4379, 0
  %p4381 = pneg %p4380
  %4383 = shalt.err (%p4381)

</llo_original>
